<compile_context>
chip_gen: v7x
topology: tpu7x:2x2x1
jax: 0.10.0
libtpu: 0.0.40
codegen_flags: <defaults>
</compile_context>

<pallas_src>
import functools

import jax
import jax.numpy as jnp
from jax.experimental import pallas as pl
from jax.experimental.pallas import tpu as pltpu


# ---------------------------------------------------------------------------
# Fused MS_TCN kernel: every stage, every layer, in one pallas_call.
# ---------------------------------------------------------------------------

def _ms_tcn_fused_kernel(x_ref, m_ref,
                         w_in1_ref, wd1_ref, w11_ref, wo1_ref,
                         w_inr_ref, wdr_ref, w1r_ref, wor_ref,
                         o_ref, *, T, num_stages):
    """Full MS_TCN forward, batch folded into the lane axis.

    x_ref:     (Cin, B*T)            stage-1 input features (f32)
    m_ref:     (1,   B*T)            mask[:, 0:1, :] flattened (f32)
    w_in1_ref: (F, Cin+1)            stage-1 input 1x1 conv, bias folded (bf16)
    wd1_ref:   (L, F, 3F+1)          stage-1 dilated convs: [t-d | t | t+d | bias]
    w11_ref:   (L, F, F+1)           stage-1 per-layer 1x1 convs
    wo1_ref:   (Cout, F+1)           stage-1 output 1x1 conv
    w_inr_ref: (S-1, F, Cout+1)      refinement-stage weights (stacked on stage)
    wdr_ref:   ((S-1)*L, F, 3F+1)
    w1r_ref:   ((S-1)*L, F, F+1)
    wor_ref:   (S-1, Cout, F+1)
    o_ref:     (S, Cout, B*T)        per-stage logits
    """
    x = x_ref[...]                       # (Cin, BT) f32
    m = m_ref[...]                       # (1, BT)   f32
    BT = x.shape[-1]
    num_layers = wd1_ref.shape[0]
    F = wd1_ref.shape[1]

    ones = jnp.ones((1, BT), jnp.float32)
    # Local (per-sequence) time index: batch lives on the lane axis, so `% T`
    # keeps the roll-based zero padding from leaking across sequences.
    tcol = jax.lax.broadcasted_iota(jnp.int32, (F, BT), 1) % T
    lmask = [tcol >= (2 ** i) for i in range(num_layers)]        # h[t-d] in-bounds
    rmask = [tcol < (T - 2 ** i) for i in range(num_layers)]     # h[t+d] in-bounds

    def stage(inp, w_in, wd_layers, w1_layers, w_out):
        # stage input 1x1 conv (bias folded -> ones row appended, K+1 contraction)
        a = jnp.concatenate([inp, ones], axis=0).astype(jnp.bfloat16)
        h = jnp.dot(w_in, a, preferred_element_type=jnp.float32)          # (F, BT)
        for i in range(num_layers):
            d = 2 ** i
            # shifted copies of h along (local) time, zero-padded at the edges
            left = jnp.where(lmask[i], pltpu.roll(h, d, 1), 0.0)          # h[t-d]
            right = jnp.where(rmask[i], pltpu.roll(h, BT - d, 1), 0.0)    # h[t+d]
            x3 = jnp.concatenate([left, h, right, ones],
                                 axis=0).astype(jnp.bfloat16)             # (3F+1, BT)
            z = jnp.maximum(
                jnp.dot(wd_layers[i], x3, preferred_element_type=jnp.float32), 0.0)
            zb = jnp.concatenate([z, ones], axis=0).astype(jnp.bfloat16)
            # residual + per-layer mask: (x + conv1x1(relu(dilated(x)))) * mask[:,0:1,:]
            # (dropout = identity; inference semantics)
            h = (h + jnp.dot(w1_layers[i], zb,
                             preferred_element_type=jnp.float32)) * m
        hb = jnp.concatenate([h, ones], axis=0).astype(jnp.bfloat16)
        return jnp.dot(w_out, hb, preferred_element_type=jnp.float32) * m  # (Cout, BT)

    # ---- stage 1 ----
    out = stage(x,
                w_in1_ref[...],
                [wd1_ref[i] for i in range(num_layers)],
                [w11_ref[i] for i in range(num_layers)],
                wo1_ref[...])
    o_ref[0] = out.astype(o_ref.dtype)

    # ---- refinement stages ----
    for s in range(num_stages - 1):
        # F.softmax(prev_logits, dim=channels) * mask[:, 0:1, :]  (exact reciprocal)
        e = jnp.exp(out - jnp.max(out, axis=0, keepdims=True))
        inv = pl.reciprocal(jnp.sum(e, axis=0, keepdims=True))
        inp = (e * inv) * m
        base = s * num_layers
        out = stage(inp,
                    w_inr_ref[s],
                    [wdr_ref[base + i] for i in range(num_layers)],
                    [w1r_ref[base + i] for i in range(num_layers)],
                    wor_ref[s])
        o_ref[s + 1] = out.astype(o_ref.dtype)


# ---------------------------------------------------------------------------
# pallas_call wrapper (single fused call for the whole network)
# ---------------------------------------------------------------------------

def ms_tcn_forward(x, mask, packed, *, num_stages):
    """x: (B, dim, T); mask: (B, num_classes, T) -> (num_stages, B, num_classes, T)."""
    B, Cin, T = x.shape
    Cout = packed["wo1"].shape[0]
    BT = B * T

    # Layout plumbing only: fold batch into the lane axis, (B, C, T) -> (C, B*T).
    x_f = jnp.transpose(x, (1, 0, 2)).reshape(Cin, BT)
    m_f = mask[:, 0, :].reshape(1, BT).astype(x.dtype)

    kernel = functools.partial(_ms_tcn_fused_kernel, T=T, num_stages=num_stages)
    out = pl.pallas_call(
        kernel,
        out_shape=jax.ShapeDtypeStruct((num_stages, Cout, BT), x.dtype),
        # No grid / specs: single invocation, every operand is a full-array
        # VMEM block (no pipelining, no weight double-buffering).
    )(x_f, m_f,
      packed["w_in1"], packed["wd1"], packed["w11"], packed["wo1"],
      packed["w_inr"], packed["wdr"], packed["w1r"], packed["wor"])

    # (S, Cout, B*T) -> (S, B, Cout, T)
    return out.reshape(num_stages, Cout, B, T).transpose(0, 2, 1, 3)


# ---------------------------------------------------------------------------
# Parameter initialization (deterministic, synthetic) and packing
# ---------------------------------------------------------------------------

def init_stage_params(key, num_layers, num_f_maps, cin, cout, scale=0.1):
    F = num_f_maps
    ks = jax.random.split(key, 8)
    return dict(
        w_in=jax.random.normal(ks[0], (F, cin), jnp.float32) * scale,
        b_in=jax.random.normal(ks[1], (F, 1), jnp.float32) * scale,
        wd=jax.random.normal(ks[2], (num_layers, F, 3 * F), jnp.float32) * scale,
        bd=jax.random.normal(ks[3], (num_layers, F, 1), jnp.float32) * scale,
        w1=jax.random.normal(ks[4], (num_layers, F, F), jnp.float32) * scale,
        b1=jax.random.normal(ks[5], (num_layers, F, 1), jnp.float32) * scale,
        w_out=jax.random.normal(ks[6], (cout, F), jnp.float32) * scale,
        b_out=jax.random.normal(ks[7], (cout, 1), jnp.float32) * scale,
    )


def init_params(key, num_stages, num_layers, num_f_maps, dim, num_classes):
    ks = jax.random.split(key, num_stages)
    stage1 = init_stage_params(ks[0], num_layers, num_f_maps, dim, num_classes)
    stages = [init_stage_params(ks[s], num_layers, num_f_maps,
                                num_classes, num_classes)
              for s in range(1, num_stages)]
    return dict(stage1=stage1, stages=stages)


def pack_params(params):
    """Fold biases into an extra weight column, cast to bf16, stack refinement stages."""
    def fold(w, b):
        return jnp.concatenate([w, b], axis=-1).astype(jnp.bfloat16)

    s1 = params["stage1"]
    packed = dict(
        w_in1=fold(s1["w_in"], s1["b_in"]),      # (F, Cin+1)
        wd1=fold(s1["wd"], s1["bd"]),            # (L, F, 3F+1)
        w11=fold(s1["w1"], s1["b1"]),            # (L, F, F+1)
        wo1=fold(s1["w_out"], s1["b_out"]),      # (Cout, F+1)
    )
    rest = params["stages"]
    if rest:
        packed["w_inr"] = jnp.stack([fold(p["w_in"], p["b_in"]) for p in rest])
        packed["wdr"] = jnp.concatenate([fold(p["wd"], p["bd"]) for p in rest], axis=0)
        packed["w1r"] = jnp.concatenate([fold(p["w1"], p["b1"]) for p in rest], axis=0)
        packed["wor"] = jnp.stack([fold(p["w_out"], p["b_out"]) for p in rest])
    else:
        # num_stages == 1: dummy (never-read) arrays keep the kernel signature fixed
        packed["w_inr"] = jnp.zeros_like(packed["w_in1"])[None]
        packed["wdr"] = jnp.zeros_like(packed["wd1"])
        packed["w1r"] = jnp.zeros_like(packed["w11"])
        packed["wor"] = jnp.zeros_like(packed["wo1"])[None]
    return packed


# ---------------------------------------------------------------------------
# Main
# ---------------------------------------------------------------------------

if __name__ == "__main__":
    num_stages, num_layers = 3, 4
    num_f_maps, dim, num_classes = 16, 8, 8
    B, T = 2, 256

    key = jax.random.PRNGKey(0)
    k_params, k_x = jax.random.split(key)
    params = init_params(k_params, num_stages, num_layers, num_f_maps,
                         dim, num_classes)
    packed = pack_params(params)

    x = jax.random.normal(k_x, (B, dim, T), jnp.float32)   # PyTorch NCT input

    # per-sequence valid-length mask, shaped like the PyTorch mask (B, num_classes, T)
    lengths = jnp.array([T, T - 64], dtype=jnp.int32)
    valid = (jnp.arange(T)[None, :] < lengths[:, None]).astype(jnp.float32)
    mask = jnp.broadcast_to(valid[:, None, :], (B, num_classes, T))

    fwd = jax.jit(functools.partial(ms_tcn_forward, num_stages=num_stages))
    outputs = fwd(x, mask, packed)
    jax.block_until_ready(outputs)

    expected_shape = (num_stages, B, num_classes, T)
    assert outputs.shape == expected_shape, (outputs.shape, expected_shape)
    assert bool(jnp.all(jnp.isfinite(outputs)))
    print("KERNEL_OK")
</pallas_src>

<mosaic_0001>
module attributes {stable_mosaic.version = 11 : i64} {
  func.func @_ms_tcn_fused_kernel(%arg0: memref<8x512xf32, #tpu.memory_space<vmem>>, %arg1: memref<1x512xf32, #tpu.memory_space<vmem>>, %arg2: memref<16x9xbf16, #tpu.memory_space<vmem>>, %arg3: memref<4x16x49xbf16, #tpu.memory_space<vmem>>, %arg4: memref<4x16x17xbf16, #tpu.memory_space<vmem>>, %arg5: memref<8x17xbf16, #tpu.memory_space<vmem>>, %arg6: memref<2x16x9xbf16, #tpu.memory_space<vmem>>, %arg7: memref<8x16x49xbf16, #tpu.memory_space<vmem>>, %arg8: memref<8x16x17xbf16, #tpu.memory_space<vmem>>, %arg9: memref<2x8x17xbf16, #tpu.memory_space<vmem>>, %arg10: memref<3x8x512xf32, #tpu.memory_space<vmem>>) attributes {dimension_semantics = [], scalar_prefetch = 0 : i64, scratch_operands = 0 : i64, tpu.core_type = #tpu.core_type<tc>} {
    %c0 = arith.constant 0 : index
    %c0_0 = arith.constant 0 : index
    %0 = vector.load %arg0[%c0, %c0_0] : memref<8x512xf32, #tpu.memory_space<vmem>>, vector<8x512xf32>
    %c0_1 = arith.constant 0 : index
    %c0_2 = arith.constant 0 : index
    %1 = vector.load %arg1[%c0_1, %c0_2] : memref<1x512xf32, #tpu.memory_space<vmem>>, vector<1x512xf32>
    %cst = arith.constant 1.000000e+00 : f32
    %2 = vector.broadcast %cst : f32 to vector<1x512xf32>
    %3 = tpu.iota {dimensions = array<i32: 1>} : vector<16x512xi32>
    %c256_i32 = arith.constant 256 : i32
    %c0_i32 = arith.constant 0 : i32
    %4 = arith.cmpi eq, %c256_i32, %c0_i32 : i32
    %c1_i32 = arith.constant 1 : i32
    %5 = arith.select %4, %c1_i32, %c256_i32 : i32
    %6 = vector.broadcast %5 : i32 to vector<16x512xi32>
    %7 = arith.remsi %3, %6 : vector<16x512xi32>
    %c0_i32_3 = arith.constant 0 : i32
    %8 = vector.broadcast %c0_i32_3 : i32 to vector<16x512xi32>
    %9 = arith.cmpi ne, %7, %8 : vector<16x512xi32>
    %c0_i32_4 = arith.constant 0 : i32
    %10 = vector.broadcast %c0_i32_4 : i32 to vector<16x512xi32>
    %11 = arith.cmpi slt, %7, %10 : vector<16x512xi32>
    %c0_i32_5 = arith.constant 0 : i32
    %12 = arith.cmpi slt, %5, %c0_i32_5 : i32
    %13 = vector.broadcast %12 : i1 to vector<16x512xi1>
    %14 = vector.broadcast %13 : vector<16x512xi1> to vector<16x512xi1>
    %15 = arith.xori %11, %14 : vector<16x512xi1>
    %16 = arith.andi %15, %9 : vector<16x512xi1>
    %17 = vector.broadcast %5 : i32 to vector<16x512xi32>
    %18 = arith.addi %7, %17 : vector<16x512xi32>
    %19 = arith.select %16, %18, %7 : vector<16x512xi1>, vector<16x512xi32>
    %c1_i32_6 = arith.constant 1 : i32
    %20 = vector.broadcast %c1_i32_6 : i32 to vector<16x512xi32>
    %21 = arith.cmpi sge, %19, %20 : vector<16x512xi32>
    %c2_i32 = arith.constant 2 : i32
    %22 = vector.broadcast %c2_i32 : i32 to vector<16x512xi32>
    %23 = arith.cmpi sge, %19, %22 : vector<16x512xi32>
    %c4_i32 = arith.constant 4 : i32
    %24 = vector.broadcast %c4_i32 : i32 to vector<16x512xi32>
    %25 = arith.cmpi sge, %19, %24 : vector<16x512xi32>
    %c8_i32 = arith.constant 8 : i32
    %26 = vector.broadcast %c8_i32 : i32 to vector<16x512xi32>
    %27 = arith.cmpi sge, %19, %26 : vector<16x512xi32>
    %c255_i32 = arith.constant 255 : i32
    %28 = vector.broadcast %c255_i32 : i32 to vector<16x512xi32>
    %29 = arith.cmpi slt, %19, %28 : vector<16x512xi32>
    %c254_i32 = arith.constant 254 : i32
    %30 = vector.broadcast %c254_i32 : i32 to vector<16x512xi32>
    %31 = arith.cmpi slt, %19, %30 : vector<16x512xi32>
    %c252_i32 = arith.constant 252 : i32
    %32 = vector.broadcast %c252_i32 : i32 to vector<16x512xi32>
    %33 = arith.cmpi slt, %19, %32 : vector<16x512xi32>
    %c248_i32 = arith.constant 248 : i32
    %34 = vector.broadcast %c248_i32 : i32 to vector<16x512xi32>
    %35 = arith.cmpi slt, %19, %34 : vector<16x512xi32>
    %c0_7 = arith.constant 0 : index
    %c0_8 = arith.constant 0 : index
    %36 = vector.load %arg2[%c0_7, %c0_8] : memref<16x9xbf16, #tpu.memory_space<vmem>>, vector<16x9xbf16>
    %c0_9 = arith.constant 0 : index
    %c0_10 = arith.constant 0 : index
    %c0_11 = arith.constant 0 : index
    %37 = vector.load %arg3[%c0_9, %c0_10, %c0_11] : memref<4x16x49xbf16, #tpu.memory_space<vmem>>, vector<1x16x49xbf16>
    %38 = vector.shape_cast %37 : vector<1x16x49xbf16> to vector<16x49xbf16>
    %c1 = arith.constant 1 : index
    %c0_12 = arith.constant 0 : index
    %c0_13 = arith.constant 0 : index
    %39 = vector.load %arg3[%c1, %c0_12, %c0_13] : memref<4x16x49xbf16, #tpu.memory_space<vmem>>, vector<1x16x49xbf16>
    %40 = vector.shape_cast %39 : vector<1x16x49xbf16> to vector<16x49xbf16>
    %c2 = arith.constant 2 : index
    %c0_14 = arith.constant 0 : index
    %c0_15 = arith.constant 0 : index
    %41 = vector.load %arg3[%c2, %c0_14, %c0_15] : memref<4x16x49xbf16, #tpu.memory_space<vmem>>, vector<1x16x49xbf16>
    %42 = vector.shape_cast %41 : vector<1x16x49xbf16> to vector<16x49xbf16>
    %c3 = arith.constant 3 : index
    %c0_16 = arith.constant 0 : index
    %c0_17 = arith.constant 0 : index
    %43 = vector.load %arg3[%c3, %c0_16, %c0_17] : memref<4x16x49xbf16, #tpu.memory_space<vmem>>, vector<1x16x49xbf16>
    %44 = vector.shape_cast %43 : vector<1x16x49xbf16> to vector<16x49xbf16>
    %c0_18 = arith.constant 0 : index
    %c0_19 = arith.constant 0 : index
    %c0_20 = arith.constant 0 : index
    %45 = vector.load %arg4[%c0_18, %c0_19, %c0_20] : memref<4x16x17xbf16, #tpu.memory_space<vmem>>, vector<1x16x17xbf16>
    %46 = vector.shape_cast %45 : vector<1x16x17xbf16> to vector<16x17xbf16>
    %c1_21 = arith.constant 1 : index
    %c0_22 = arith.constant 0 : index
    %c0_23 = arith.constant 0 : index
    %47 = vector.load %arg4[%c1_21, %c0_22, %c0_23] : memref<4x16x17xbf16, #tpu.memory_space<vmem>>, vector<1x16x17xbf16>
    %48 = vector.shape_cast %47 : vector<1x16x17xbf16> to vector<16x17xbf16>
    %c2_24 = arith.constant 2 : index
    %c0_25 = arith.constant 0 : index
    %c0_26 = arith.constant 0 : index
    %49 = vector.load %arg4[%c2_24, %c0_25, %c0_26] : memref<4x16x17xbf16, #tpu.memory_space<vmem>>, vector<1x16x17xbf16>
    %50 = vector.shape_cast %49 : vector<1x16x17xbf16> to vector<16x17xbf16>
    %c3_27 = arith.constant 3 : index
    %c0_28 = arith.constant 0 : index
    %c0_29 = arith.constant 0 : index
    %51 = vector.load %arg4[%c3_27, %c0_28, %c0_29] : memref<4x16x17xbf16, #tpu.memory_space<vmem>>, vector<1x16x17xbf16>
    %52 = vector.shape_cast %51 : vector<1x16x17xbf16> to vector<16x17xbf16>
    %c0_30 = arith.constant 0 : index
    %c0_31 = arith.constant 0 : index
    %53 = vector.load %arg5[%c0_30, %c0_31] : memref<8x17xbf16, #tpu.memory_space<vmem>>, vector<8x17xbf16>
    %54 = tpu.concatenate %0, %2 in 0 : vector<8x512xf32>, vector<1x512xf32> -> vector<9x512xf32>
    %55 = arith.truncf %54 : vector<9x512xf32> to vector<9x512xbf16>
    %cst_32 = arith.constant dense<0.000000e+00> : vector<16x512xf32>
    %56 = tpu.matmul %36, %55, %cst_32 {dimension_numbers = #tpu.dot_dimension_numbers<[1], [0], [0], [1], [0, 0, 1, 1], [], []>} : vector<16x9xbf16>, vector<9x512xbf16>, vector<16x512xf32> -> vector<16x512xf32>
    %c1_i32_33 = arith.constant 1 : i32
    %57 = tpu.dynamic_rotate %56 by %c1_i32_33 dim 1 : vector<16x512xf32>, i32 -> vector<16x512xf32>
    %cst_34 = arith.constant 0.000000e+00 : f32
    %58 = vector.broadcast %cst_34 : f32 to vector<16x512xf32>
    %59 = arith.select %21, %57, %58 : vector<16x512xi1>, vector<16x512xf32>
    %c511_i32 = arith.constant 511 : i32
    %60 = tpu.dynamic_rotate %56 by %c511_i32 dim 1 : vector<16x512xf32>, i32 -> vector<16x512xf32>
    %cst_35 = arith.constant 0.000000e+00 : f32
    %61 = vector.broadcast %cst_35 : f32 to vector<16x512xf32>
    %62 = arith.select %29, %60, %61 : vector<16x512xi1>, vector<16x512xf32>
    %63 = tpu.concatenate %59, %56, %62, %2 in 0 : vector<16x512xf32>, vector<16x512xf32>, vector<16x512xf32>, vector<1x512xf32> -> vector<49x512xf32>
    %64 = arith.truncf %63 : vector<49x512xf32> to vector<49x512xbf16>
    %cst_36 = arith.constant dense<0.000000e+00> : vector<16x512xf32>
    %65 = tpu.matmul %38, %64, %cst_36 {dimension_numbers = #tpu.dot_dimension_numbers<[1], [0], [0], [1], [0, 0, 1, 1], [], []>} : vector<16x49xbf16>, vector<49x512xbf16>, vector<16x512xf32> -> vector<16x512xf32>
    %cst_37 = arith.constant 0.000000e+00 : f32
    %66 = vector.broadcast %cst_37 : f32 to vector<16x512xf32>
    %67 = arith.maximumf %65, %66 : vector<16x512xf32>
    %68 = tpu.concatenate %67, %2 in 0 : vector<16x512xf32>, vector<1x512xf32> -> vector<17x512xf32>
    %69 = arith.truncf %68 : vector<17x512xf32> to vector<17x512xbf16>
    %cst_38 = arith.constant dense<0.000000e+00> : vector<16x512xf32>
    %70 = tpu.matmul %46, %69, %cst_38 {dimension_numbers = #tpu.dot_dimension_numbers<[1], [0], [0], [1], [0, 0, 1, 1], [], []>} : vector<16x17xbf16>, vector<17x512xbf16>, vector<16x512xf32> -> vector<16x512xf32>
    %71 = arith.addf %56, %70 : vector<16x512xf32>
    %72 = vector.broadcast %1 : vector<1x512xf32> to vector<16x512xf32>
    %73 = arith.mulf %71, %72 : vector<16x512xf32>
    %c2_i32_39 = arith.constant 2 : i32
    %74 = tpu.dynamic_rotate %73 by %c2_i32_39 dim 1 : vector<16x512xf32>, i32 -> vector<16x512xf32>
    %cst_40 = arith.constant 0.000000e+00 : f32
    %75 = vector.broadcast %cst_40 : f32 to vector<16x512xf32>
    %76 = arith.select %23, %74, %75 : vector<16x512xi1>, vector<16x512xf32>
    %c510_i32 = arith.constant 510 : i32
    %77 = tpu.dynamic_rotate %73 by %c510_i32 dim 1 : vector<16x512xf32>, i32 -> vector<16x512xf32>
    %cst_41 = arith.constant 0.000000e+00 : f32
    %78 = vector.broadcast %cst_41 : f32 to vector<16x512xf32>
    %79 = arith.select %31, %77, %78 : vector<16x512xi1>, vector<16x512xf32>
    %80 = tpu.concatenate %76, %73, %79, %2 in 0 : vector<16x512xf32>, vector<16x512xf32>, vector<16x512xf32>, vector<1x512xf32> -> vector<49x512xf32>
    %81 = arith.truncf %80 : vector<49x512xf32> to vector<49x512xbf16>
    %cst_42 = arith.constant dense<0.000000e+00> : vector<16x512xf32>
    %82 = tpu.matmul %40, %81, %cst_42 {dimension_numbers = #tpu.dot_dimension_numbers<[1], [0], [0], [1], [0, 0, 1, 1], [], []>} : vector<16x49xbf16>, vector<49x512xbf16>, vector<16x512xf32> -> vector<16x512xf32>
    %cst_43 = arith.constant 0.000000e+00 : f32
    %83 = vector.broadcast %cst_43 : f32 to vector<16x512xf32>
    %84 = arith.maximumf %82, %83 : vector<16x512xf32>
    %85 = tpu.concatenate %84, %2 in 0 : vector<16x512xf32>, vector<1x512xf32> -> vector<17x512xf32>
    %86 = arith.truncf %85 : vector<17x512xf32> to vector<17x512xbf16>
    %cst_44 = arith.constant dense<0.000000e+00> : vector<16x512xf32>
    %87 = tpu.matmul %48, %86, %cst_44 {dimension_numbers = #tpu.dot_dimension_numbers<[1], [0], [0], [1], [0, 0, 1, 1], [], []>} : vector<16x17xbf16>, vector<17x512xbf16>, vector<16x512xf32> -> vector<16x512xf32>
    %88 = arith.addf %73, %87 : vector<16x512xf32>
    %89 = vector.broadcast %1 : vector<1x512xf32> to vector<16x512xf32>
    %90 = arith.mulf %88, %89 : vector<16x512xf32>
    %c4_i32_45 = arith.constant 4 : i32
    %91 = tpu.dynamic_rotate %90 by %c4_i32_45 dim 1 : vector<16x512xf32>, i32 -> vector<16x512xf32>
    %cst_46 = arith.constant 0.000000e+00 : f32
    %92 = vector.broadcast %cst_46 : f32 to vector<16x512xf32>
    %93 = arith.select %25, %91, %92 : vector<16x512xi1>, vector<16x512xf32>
    %c508_i32 = arith.constant 508 : i32
    %94 = tpu.dynamic_rotate %90 by %c508_i32 dim 1 : vector<16x512xf32>, i32 -> vector<16x512xf32>
    %cst_47 = arith.constant 0.000000e+00 : f32
    %95 = vector.broadcast %cst_47 : f32 to vector<16x512xf32>
    %96 = arith.select %33, %94, %95 : vector<16x512xi1>, vector<16x512xf32>
    %97 = tpu.concatenate %93, %90, %96, %2 in 0 : vector<16x512xf32>, vector<16x512xf32>, vector<16x512xf32>, vector<1x512xf32> -> vector<49x512xf32>
    %98 = arith.truncf %97 : vector<49x512xf32> to vector<49x512xbf16>
    %cst_48 = arith.constant dense<0.000000e+00> : vector<16x512xf32>
    %99 = tpu.matmul %42, %98, %cst_48 {dimension_numbers = #tpu.dot_dimension_numbers<[1], [0], [0], [1], [0, 0, 1, 1], [], []>} : vector<16x49xbf16>, vector<49x512xbf16>, vector<16x512xf32> -> vector<16x512xf32>
    %cst_49 = arith.constant 0.000000e+00 : f32
    %100 = vector.broadcast %cst_49 : f32 to vector<16x512xf32>
    %101 = arith.maximumf %99, %100 : vector<16x512xf32>
    %102 = tpu.concatenate %101, %2 in 0 : vector<16x512xf32>, vector<1x512xf32> -> vector<17x512xf32>
    %103 = arith.truncf %102 : vector<17x512xf32> to vector<17x512xbf16>
    %cst_50 = arith.constant dense<0.000000e+00> : vector<16x512xf32>
    %104 = tpu.matmul %50, %103, %cst_50 {dimension_numbers = #tpu.dot_dimension_numbers<[1], [0], [0], [1], [0, 0, 1, 1], [], []>} : vector<16x17xbf16>, vector<17x512xbf16>, vector<16x512xf32> -> vector<16x512xf32>
    %105 = arith.addf %90, %104 : vector<16x512xf32>
    %106 = vector.broadcast %1 : vector<1x512xf32> to vector<16x512xf32>
    %107 = arith.mulf %105, %106 : vector<16x512xf32>
    %c8_i32_51 = arith.constant 8 : i32
    %108 = tpu.dynamic_rotate %107 by %c8_i32_51 dim 1 : vector<16x512xf32>, i32 -> vector<16x512xf32>
    %cst_52 = arith.constant 0.000000e+00 : f32
    %109 = vector.broadcast %cst_52 : f32 to vector<16x512xf32>
    %110 = arith.select %27, %108, %109 : vector<16x512xi1>, vector<16x512xf32>
    %c504_i32 = arith.constant 504 : i32
    %111 = tpu.dynamic_rotate %107 by %c504_i32 dim 1 : vector<16x512xf32>, i32 -> vector<16x512xf32>
    %cst_53 = arith.constant 0.000000e+00 : f32
    %112 = vector.broadcast %cst_53 : f32 to vector<16x512xf32>
    %113 = arith.select %35, %111, %112 : vector<16x512xi1>, vector<16x512xf32>
    %114 = tpu.concatenate %110, %107, %113, %2 in 0 : vector<16x512xf32>, vector<16x512xf32>, vector<16x512xf32>, vector<1x512xf32> -> vector<49x512xf32>
    %115 = arith.truncf %114 : vector<49x512xf32> to vector<49x512xbf16>
    %cst_54 = arith.constant dense<0.000000e+00> : vector<16x512xf32>
    %116 = tpu.matmul %44, %115, %cst_54 {dimension_numbers = #tpu.dot_dimension_numbers<[1], [0], [0], [1], [0, 0, 1, 1], [], []>} : vector<16x49xbf16>, vector<49x512xbf16>, vector<16x512xf32> -> vector<16x512xf32>
    %cst_55 = arith.constant 0.000000e+00 : f32
    %117 = vector.broadcast %cst_55 : f32 to vector<16x512xf32>
    %118 = arith.maximumf %116, %117 : vector<16x512xf32>
    %119 = tpu.concatenate %118, %2 in 0 : vector<16x512xf32>, vector<1x512xf32> -> vector<17x512xf32>
    %120 = arith.truncf %119 : vector<17x512xf32> to vector<17x512xbf16>
    %cst_56 = arith.constant dense<0.000000e+00> : vector<16x512xf32>
    %121 = tpu.matmul %52, %120, %cst_56 {dimension_numbers = #tpu.dot_dimension_numbers<[1], [0], [0], [1], [0, 0, 1, 1], [], []>} : vector<16x17xbf16>, vector<17x512xbf16>, vector<16x512xf32> -> vector<16x512xf32>
    %122 = arith.addf %107, %121 : vector<16x512xf32>
    %123 = vector.broadcast %1 : vector<1x512xf32> to vector<16x512xf32>
    %124 = arith.mulf %122, %123 : vector<16x512xf32>
    %125 = tpu.concatenate %124, %2 in 0 : vector<16x512xf32>, vector<1x512xf32> -> vector<17x512xf32>
    %126 = arith.truncf %125 : vector<17x512xf32> to vector<17x512xbf16>
    %cst_57 = arith.constant dense<0.000000e+00> : vector<8x512xf32>
    %127 = tpu.matmul %53, %126, %cst_57 {dimension_numbers = #tpu.dot_dimension_numbers<[1], [0], [0], [1], [0, 0, 1, 1], [], []>} : vector<8x17xbf16>, vector<17x512xbf16>, vector<8x512xf32> -> vector<8x512xf32>
    %128 = vector.broadcast %1 : vector<1x512xf32> to vector<8x512xf32>
    %129 = arith.mulf %127, %128 : vector<8x512xf32>
    %c0_58 = arith.constant 0 : index
    %c0_59 = arith.constant 0 : index
    %c0_60 = arith.constant 0 : index
    %130 = vector.load %arg10[%c0_58, %c0_59, %c0_60] : memref<3x8x512xf32, #tpu.memory_space<vmem>>, vector<1x8x512xf32>
    %131 = vector.shape_cast %130 : vector<1x8x512xf32> to vector<8x512xf32>
    %132 = vector.shape_cast %129 : vector<8x512xf32> to vector<1x8x512xf32>
    tpu.vector_store %arg10[%c0_58, %c0_59, %c0_60], %132 {strides = array<i32>} : memref<3x8x512xf32, #tpu.memory_space<vmem>>, vector<1x8x512xf32>,
    %cst_61 = arith.constant dense<0xFF800000> : vector<512xf32>
    %133 = vector.multi_reduction <maximumf>, %129, %cst_61 [0] : vector<8x512xf32> to vector<512xf32>
    %134 = vector.shape_cast %133 : vector<512xf32> to vector<1x512xf32>
    %135 = vector.broadcast %134 : vector<1x512xf32> to vector<8x512xf32>
    %136 = arith.subf %129, %135 : vector<8x512xf32>
    %137 = math.exp %136 : vector<8x512xf32>
    %cst_62 = arith.constant dense<0.000000e+00> : vector<512xf32>
    %138 = vector.multi_reduction <add>, %137, %cst_62 [0] : vector<8x512xf32> to vector<512xf32>
    %139 = vector.shape_cast %138 : vector<512xf32> to vector<1x512xf32>
    %140 = tpu.reciprocal %139 : vector<1x512xf32> -> vector<1x512xf32>
    %141 = vector.broadcast %140 : vector<1x512xf32> to vector<8x512xf32>
    %142 = arith.mulf %137, %141 : vector<8x512xf32>
    %143 = vector.broadcast %1 : vector<1x512xf32> to vector<8x512xf32>
    %144 = arith.mulf %142, %143 : vector<8x512xf32>
    %c0_63 = arith.constant 0 : index
    %c0_64 = arith.constant 0 : index
    %c0_65 = arith.constant 0 : index
    %145 = vector.load %arg6[%c0_63, %c0_64, %c0_65] : memref<2x16x9xbf16, #tpu.memory_space<vmem>>, vector<1x16x9xbf16>
    %146 = vector.shape_cast %145 : vector<1x16x9xbf16> to vector<16x9xbf16>
    %c0_66 = arith.constant 0 : index
    %c0_67 = arith.constant 0 : index
    %c0_68 = arith.constant 0 : index
    %147 = vector.load %arg7[%c0_66, %c0_67, %c0_68] : memref<8x16x49xbf16, #tpu.memory_space<vmem>>, vector<1x16x49xbf16>
    %148 = vector.shape_cast %147 : vector<1x16x49xbf16> to vector<16x49xbf16>
    %c1_69 = arith.constant 1 : index
    %c0_70 = arith.constant 0 : index
    %c0_71 = arith.constant 0 : index
    %149 = vector.load %arg7[%c1_69, %c0_70, %c0_71] : memref<8x16x49xbf16, #tpu.memory_space<vmem>>, vector<1x16x49xbf16>
    %150 = vector.shape_cast %149 : vector<1x16x49xbf16> to vector<16x49xbf16>
    %c2_72 = arith.constant 2 : index
    %c0_73 = arith.constant 0 : index
    %c0_74 = arith.constant 0 : index
    %151 = vector.load %arg7[%c2_72, %c0_73, %c0_74] : memref<8x16x49xbf16, #tpu.memory_space<vmem>>, vector<1x16x49xbf16>
    %152 = vector.shape_cast %151 : vector<1x16x49xbf16> to vector<16x49xbf16>
    %c3_75 = arith.constant 3 : index
    %c0_76 = arith.constant 0 : index
    %c0_77 = arith.constant 0 : index
    %153 = vector.load %arg7[%c3_75, %c0_76, %c0_77] : memref<8x16x49xbf16, #tpu.memory_space<vmem>>, vector<1x16x49xbf16>
    %154 = vector.shape_cast %153 : vector<1x16x49xbf16> to vector<16x49xbf16>
    %c0_78 = arith.constant 0 : index
    %c0_79 = arith.constant 0 : index
    %c0_80 = arith.constant 0 : index
    %155 = vector.load %arg8[%c0_78, %c0_79, %c0_80] : memref<8x16x17xbf16, #tpu.memory_space<vmem>>, vector<1x16x17xbf16>
    %156 = vector.shape_cast %155 : vector<1x16x17xbf16> to vector<16x17xbf16>
    %c1_81 = arith.constant 1 : index
    %c0_82 = arith.constant 0 : index
    %c0_83 = arith.constant 0 : index
    %157 = vector.load %arg8[%c1_81, %c0_82, %c0_83] : memref<8x16x17xbf16, #tpu.memory_space<vmem>>, vector<1x16x17xbf16>
    %158 = vector.shape_cast %157 : vector<1x16x17xbf16> to vector<16x17xbf16>
    %c2_84 = arith.constant 2 : index
    %c0_85 = arith.constant 0 : index
    %c0_86 = arith.constant 0 : index
    %159 = vector.load %arg8[%c2_84, %c0_85, %c0_86] : memref<8x16x17xbf16, #tpu.memory_space<vmem>>, vector<1x16x17xbf16>
    %160 = vector.shape_cast %159 : vector<1x16x17xbf16> to vector<16x17xbf16>
    %c3_87 = arith.constant 3 : index
    %c0_88 = arith.constant 0 : index
    %c0_89 = arith.constant 0 : index
    %161 = vector.load %arg8[%c3_87, %c0_88, %c0_89] : memref<8x16x17xbf16, #tpu.memory_space<vmem>>, vector<1x16x17xbf16>
    %162 = vector.shape_cast %161 : vector<1x16x17xbf16> to vector<16x17xbf16>
    %c0_90 = arith.constant 0 : index
    %c0_91 = arith.constant 0 : index
    %c0_92 = arith.constant 0 : index
    %163 = vector.load %arg9[%c0_90, %c0_91, %c0_92] : memref<2x8x17xbf16, #tpu.memory_space<vmem>>, vector<1x8x17xbf16>
    %164 = vector.shape_cast %163 : vector<1x8x17xbf16> to vector<8x17xbf16>
    %165 = tpu.concatenate %144, %2 in 0 : vector<8x512xf32>, vector<1x512xf32> -> vector<9x512xf32>
    %166 = arith.truncf %165 : vector<9x512xf32> to vector<9x512xbf16>
    %cst_93 = arith.constant dense<0.000000e+00> : vector<16x512xf32>
    %167 = tpu.matmul %146, %166, %cst_93 {dimension_numbers = #tpu.dot_dimension_numbers<[1], [0], [0], [1], [0, 0, 1, 1], [], []>} : vector<16x9xbf16>, vector<9x512xbf16>, vector<16x512xf32> -> vector<16x512xf32>
    %c1_i32_94 = arith.constant 1 : i32
    %168 = tpu.dynamic_rotate %167 by %c1_i32_94 dim 1 : vector<16x512xf32>, i32 -> vector<16x512xf32>
    %cst_95 = arith.constant 0.000000e+00 : f32
    %169 = vector.broadcast %cst_95 : f32 to vector<16x512xf32>
    %170 = arith.select %21, %168, %169 : vector<16x512xi1>, vector<16x512xf32>
    %c511_i32_96 = arith.constant 511 : i32
    %171 = tpu.dynamic_rotate %167 by %c511_i32_96 dim 1 : vector<16x512xf32>, i32 -> vector<16x512xf32>
    %cst_97 = arith.constant 0.000000e+00 : f32
    %172 = vector.broadcast %cst_97 : f32 to vector<16x512xf32>
    %173 = arith.select %29, %171, %172 : vector<16x512xi1>, vector<16x512xf32>
    %174 = tpu.concatenate %170, %167, %173, %2 in 0 : vector<16x512xf32>, vector<16x512xf32>, vector<16x512xf32>, vector<1x512xf32> -> vector<49x512xf32>
    %175 = arith.truncf %174 : vector<49x512xf32> to vector<49x512xbf16>
    %cst_98 = arith.constant dense<0.000000e+00> : vector<16x512xf32>
    %176 = tpu.matmul %148, %175, %cst_98 {dimension_numbers = #tpu.dot_dimension_numbers<[1], [0], [0], [1], [0, 0, 1, 1], [], []>} : vector<16x49xbf16>, vector<49x512xbf16>, vector<16x512xf32> -> vector<16x512xf32>
    %cst_99 = arith.constant 0.000000e+00 : f32
    %177 = vector.broadcast %cst_99 : f32 to vector<16x512xf32>
    %178 = arith.maximumf %176, %177 : vector<16x512xf32>
    %179 = tpu.concatenate %178, %2 in 0 : vector<16x512xf32>, vector<1x512xf32> -> vector<17x512xf32>
    %180 = arith.truncf %179 : vector<17x512xf32> to vector<17x512xbf16>
    %cst_100 = arith.constant dense<0.000000e+00> : vector<16x512xf32>
    %181 = tpu.matmul %156, %180, %cst_100 {dimension_numbers = #tpu.dot_dimension_numbers<[1], [0], [0], [1], [0, 0, 1, 1], [], []>} : vector<16x17xbf16>, vector<17x512xbf16>, vector<16x512xf32> -> vector<16x512xf32>
    %182 = arith.addf %167, %181 : vector<16x512xf32>
    %183 = vector.broadcast %1 : vector<1x512xf32> to vector<16x512xf32>
    %184 = arith.mulf %182, %183 : vector<16x512xf32>
    %c2_i32_101 = arith.constant 2 : i32
    %185 = tpu.dynamic_rotate %184 by %c2_i32_101 dim 1 : vector<16x512xf32>, i32 -> vector<16x512xf32>
    %cst_102 = arith.constant 0.000000e+00 : f32
    %186 = vector.broadcast %cst_102 : f32 to vector<16x512xf32>
    %187 = arith.select %23, %185, %186 : vector<16x512xi1>, vector<16x512xf32>
    %c510_i32_103 = arith.constant 510 : i32
    %188 = tpu.dynamic_rotate %184 by %c510_i32_103 dim 1 : vector<16x512xf32>, i32 -> vector<16x512xf32>
    %cst_104 = arith.constant 0.000000e+00 : f32
    %189 = vector.broadcast %cst_104 : f32 to vector<16x512xf32>
    %190 = arith.select %31, %188, %189 : vector<16x512xi1>, vector<16x512xf32>
    %191 = tpu.concatenate %187, %184, %190, %2 in 0 : vector<16x512xf32>, vector<16x512xf32>, vector<16x512xf32>, vector<1x512xf32> -> vector<49x512xf32>
    %192 = arith.truncf %191 : vector<49x512xf32> to vector<49x512xbf16>
    %cst_105 = arith.constant dense<0.000000e+00> : vector<16x512xf32>
    %193 = tpu.matmul %150, %192, %cst_105 {dimension_numbers = #tpu.dot_dimension_numbers<[1], [0], [0], [1], [0, 0, 1, 1], [], []>} : vector<16x49xbf16>, vector<49x512xbf16>, vector<16x512xf32> -> vector<16x512xf32>
    %cst_106 = arith.constant 0.000000e+00 : f32
    %194 = vector.broadcast %cst_106 : f32 to vector<16x512xf32>
    %195 = arith.maximumf %193, %194 : vector<16x512xf32>
    %196 = tpu.concatenate %195, %2 in 0 : vector<16x512xf32>, vector<1x512xf32> -> vector<17x512xf32>
    %197 = arith.truncf %196 : vector<17x512xf32> to vector<17x512xbf16>
    %cst_107 = arith.constant dense<0.000000e+00> : vector<16x512xf32>
    %198 = tpu.matmul %158, %197, %cst_107 {dimension_numbers = #tpu.dot_dimension_numbers<[1], [0], [0], [1], [0, 0, 1, 1], [], []>} : vector<16x17xbf16>, vector<17x512xbf16>, vector<16x512xf32> -> vector<16x512xf32>
    %199 = arith.addf %184, %198 : vector<16x512xf32>
    %200 = vector.broadcast %1 : vector<1x512xf32> to vector<16x512xf32>
    %201 = arith.mulf %199, %200 : vector<16x512xf32>
    %c4_i32_108 = arith.constant 4 : i32
    %202 = tpu.dynamic_rotate %201 by %c4_i32_108 dim 1 : vector<16x512xf32>, i32 -> vector<16x512xf32>
    %cst_109 = arith.constant 0.000000e+00 : f32
    %203 = vector.broadcast %cst_109 : f32 to vector<16x512xf32>
    %204 = arith.select %25, %202, %203 : vector<16x512xi1>, vector<16x512xf32>
    %c508_i32_110 = arith.constant 508 : i32
    %205 = tpu.dynamic_rotate %201 by %c508_i32_110 dim 1 : vector<16x512xf32>, i32 -> vector<16x512xf32>
    %cst_111 = arith.constant 0.000000e+00 : f32
    %206 = vector.broadcast %cst_111 : f32 to vector<16x512xf32>
    %207 = arith.select %33, %205, %206 : vector<16x512xi1>, vector<16x512xf32>
    %208 = tpu.concatenate %204, %201, %207, %2 in 0 : vector<16x512xf32>, vector<16x512xf32>, vector<16x512xf32>, vector<1x512xf32> -> vector<49x512xf32>
    %209 = arith.truncf %208 : vector<49x512xf32> to vector<49x512xbf16>
    %cst_112 = arith.constant dense<0.000000e+00> : vector<16x512xf32>
    %210 = tpu.matmul %152, %209, %cst_112 {dimension_numbers = #tpu.dot_dimension_numbers<[1], [0], [0], [1], [0, 0, 1, 1], [], []>} : vector<16x49xbf16>, vector<49x512xbf16>, vector<16x512xf32> -> vector<16x512xf32>
    %cst_113 = arith.constant 0.000000e+00 : f32
    %211 = vector.broadcast %cst_113 : f32 to vector<16x512xf32>
    %212 = arith.maximumf %210, %211 : vector<16x512xf32>
    %213 = tpu.concatenate %212, %2 in 0 : vector<16x512xf32>, vector<1x512xf32> -> vector<17x512xf32>
    %214 = arith.truncf %213 : vector<17x512xf32> to vector<17x512xbf16>
    %cst_114 = arith.constant dense<0.000000e+00> : vector<16x512xf32>
    %215 = tpu.matmul %160, %214, %cst_114 {dimension_numbers = #tpu.dot_dimension_numbers<[1], [0], [0], [1], [0, 0, 1, 1], [], []>} : vector<16x17xbf16>, vector<17x512xbf16>, vector<16x512xf32> -> vector<16x512xf32>
    %216 = arith.addf %201, %215 : vector<16x512xf32>
    %217 = vector.broadcast %1 : vector<1x512xf32> to vector<16x512xf32>
    %218 = arith.mulf %216, %217 : vector<16x512xf32>
    %c8_i32_115 = arith.constant 8 : i32
    %219 = tpu.dynamic_rotate %218 by %c8_i32_115 dim 1 : vector<16x512xf32>, i32 -> vector<16x512xf32>
    %cst_116 = arith.constant 0.000000e+00 : f32
    %220 = vector.broadcast %cst_116 : f32 to vector<16x512xf32>
    %221 = arith.select %27, %219, %220 : vector<16x512xi1>, vector<16x512xf32>
    %c504_i32_117 = arith.constant 504 : i32
    %222 = tpu.dynamic_rotate %218 by %c504_i32_117 dim 1 : vector<16x512xf32>, i32 -> vector<16x512xf32>
    %cst_118 = arith.constant 0.000000e+00 : f32
    %223 = vector.broadcast %cst_118 : f32 to vector<16x512xf32>
    %224 = arith.select %35, %222, %223 : vector<16x512xi1>, vector<16x512xf32>
    %225 = tpu.concatenate %221, %218, %224, %2 in 0 : vector<16x512xf32>, vector<16x512xf32>, vector<16x512xf32>, vector<1x512xf32> -> vector<49x512xf32>
    %226 = arith.truncf %225 : vector<49x512xf32> to vector<49x512xbf16>
    %cst_119 = arith.constant dense<0.000000e+00> : vector<16x512xf32>
    %227 = tpu.matmul %154, %226, %cst_119 {dimension_numbers = #tpu.dot_dimension_numbers<[1], [0], [0], [1], [0, 0, 1, 1], [], []>} : vector<16x49xbf16>, vector<49x512xbf16>, vector<16x512xf32> -> vector<16x512xf32>
    %cst_120 = arith.constant 0.000000e+00 : f32
    %228 = vector.broadcast %cst_120 : f32 to vector<16x512xf32>
    %229 = arith.maximumf %227, %228 : vector<16x512xf32>
    %230 = tpu.concatenate %229, %2 in 0 : vector<16x512xf32>, vector<1x512xf32> -> vector<17x512xf32>
    %231 = arith.truncf %230 : vector<17x512xf32> to vector<17x512xbf16>
    %cst_121 = arith.constant dense<0.000000e+00> : vector<16x512xf32>
    %232 = tpu.matmul %162, %231, %cst_121 {dimension_numbers = #tpu.dot_dimension_numbers<[1], [0], [0], [1], [0, 0, 1, 1], [], []>} : vector<16x17xbf16>, vector<17x512xbf16>, vector<16x512xf32> -> vector<16x512xf32>
    %233 = arith.addf %218, %232 : vector<16x512xf32>
    %234 = vector.broadcast %1 : vector<1x512xf32> to vector<16x512xf32>
    %235 = arith.mulf %233, %234 : vector<16x512xf32>
    %236 = tpu.concatenate %235, %2 in 0 : vector<16x512xf32>, vector<1x512xf32> -> vector<17x512xf32>
    %237 = arith.truncf %236 : vector<17x512xf32> to vector<17x512xbf16>
    %cst_122 = arith.constant dense<0.000000e+00> : vector<8x512xf32>
    %238 = tpu.matmul %164, %237, %cst_122 {dimension_numbers = #tpu.dot_dimension_numbers<[1], [0], [0], [1], [0, 0, 1, 1], [], []>} : vector<8x17xbf16>, vector<17x512xbf16>, vector<8x512xf32> -> vector<8x512xf32>
    %239 = vector.broadcast %1 : vector<1x512xf32> to vector<8x512xf32>
    %240 = arith.mulf %238, %239 : vector<8x512xf32>
    %c1_123 = arith.constant 1 : index
    %c0_124 = arith.constant 0 : index
    %c0_125 = arith.constant 0 : index
    %241 = vector.load %arg10[%c1_123, %c0_124, %c0_125] : memref<3x8x512xf32, #tpu.memory_space<vmem>>, vector<1x8x512xf32>
    %242 = vector.shape_cast %241 : vector<1x8x512xf32> to vector<8x512xf32>
    %243 = vector.shape_cast %240 : vector<8x512xf32> to vector<1x8x512xf32>
    tpu.vector_store %arg10[%c1_123, %c0_124, %c0_125], %243 {strides = array<i32>} : memref<3x8x512xf32, #tpu.memory_space<vmem>>, vector<1x8x512xf32>,
    %cst_126 = arith.constant dense<0xFF800000> : vector<512xf32>
    %244 = vector.multi_reduction <maximumf>, %240, %cst_126 [0] : vector<8x512xf32> to vector<512xf32>
    %245 = vector.shape_cast %244 : vector<512xf32> to vector<1x512xf32>
    %246 = vector.broadcast %245 : vector<1x512xf32> to vector<8x512xf32>
    %247 = arith.subf %240, %246 : vector<8x512xf32>
    %248 = math.exp %247 : vector<8x512xf32>
    %cst_127 = arith.constant dense<0.000000e+00> : vector<512xf32>
    %249 = vector.multi_reduction <add>, %248, %cst_127 [0] : vector<8x512xf32> to vector<512xf32>
    %250 = vector.shape_cast %249 : vector<512xf32> to vector<1x512xf32>
    %251 = tpu.reciprocal %250 : vector<1x512xf32> -> vector<1x512xf32>
    %252 = vector.broadcast %251 : vector<1x512xf32> to vector<8x512xf32>
    %253 = arith.mulf %248, %252 : vector<8x512xf32>
    %254 = vector.broadcast %1 : vector<1x512xf32> to vector<8x512xf32>
    %255 = arith.mulf %253, %254 : vector<8x512xf32>
    %c1_128 = arith.constant 1 : index
    %c0_129 = arith.constant 0 : index
    %c0_130 = arith.constant 0 : index
    %256 = vector.load %arg6[%c1_128, %c0_129, %c0_130] : memref<2x16x9xbf16, #tpu.memory_space<vmem>>, vector<1x16x9xbf16>
    %257 = vector.shape_cast %256 : vector<1x16x9xbf16> to vector<16x9xbf16>
    %c4 = arith.constant 4 : index
    %c0_131 = arith.constant 0 : index
    %c0_132 = arith.constant 0 : index
    %258 = vector.load %arg7[%c4, %c0_131, %c0_132] : memref<8x16x49xbf16, #tpu.memory_space<vmem>>, vector<1x16x49xbf16>
    %259 = vector.shape_cast %258 : vector<1x16x49xbf16> to vector<16x49xbf16>
    %c5 = arith.constant 5 : index
    %c0_133 = arith.constant 0 : index
    %c0_134 = arith.constant 0 : index
    %260 = vector.load %arg7[%c5, %c0_133, %c0_134] : memref<8x16x49xbf16, #tpu.memory_space<vmem>>, vector<1x16x49xbf16>
    %261 = vector.shape_cast %260 : vector<1x16x49xbf16> to vector<16x49xbf16>
    %c6 = arith.constant 6 : index
    %c0_135 = arith.constant 0 : index
    %c0_136 = arith.constant 0 : index
    %262 = vector.load %arg7[%c6, %c0_135, %c0_136] : memref<8x16x49xbf16, #tpu.memory_space<vmem>>, vector<1x16x49xbf16>
    %263 = vector.shape_cast %262 : vector<1x16x49xbf16> to vector<16x49xbf16>
    %c7 = arith.constant 7 : index
    %c0_137 = arith.constant 0 : index
    %c0_138 = arith.constant 0 : index
    %264 = vector.load %arg7[%c7, %c0_137, %c0_138] : memref<8x16x49xbf16, #tpu.memory_space<vmem>>, vector<1x16x49xbf16>
    %265 = vector.shape_cast %264 : vector<1x16x49xbf16> to vector<16x49xbf16>
    %c4_139 = arith.constant 4 : index
    %c0_140 = arith.constant 0 : index
    %c0_141 = arith.constant 0 : index
    %266 = vector.load %arg8[%c4_139, %c0_140, %c0_141] : memref<8x16x17xbf16, #tpu.memory_space<vmem>>, vector<1x16x17xbf16>
    %267 = vector.shape_cast %266 : vector<1x16x17xbf16> to vector<16x17xbf16>
    %c5_142 = arith.constant 5 : index
    %c0_143 = arith.constant 0 : index
    %c0_144 = arith.constant 0 : index
    %268 = vector.load %arg8[%c5_142, %c0_143, %c0_144] : memref<8x16x17xbf16, #tpu.memory_space<vmem>>, vector<1x16x17xbf16>
    %269 = vector.shape_cast %268 : vector<1x16x17xbf16> to vector<16x17xbf16>
    %c6_145 = arith.constant 6 : index
    %c0_146 = arith.constant 0 : index
    %c0_147 = arith.constant 0 : index
    %270 = vector.load %arg8[%c6_145, %c0_146, %c0_147] : memref<8x16x17xbf16, #tpu.memory_space<vmem>>, vector<1x16x17xbf16>
    %271 = vector.shape_cast %270 : vector<1x16x17xbf16> to vector<16x17xbf16>
    %c7_148 = arith.constant 7 : index
    %c0_149 = arith.constant 0 : index
    %c0_150 = arith.constant 0 : index
    %272 = vector.load %arg8[%c7_148, %c0_149, %c0_150] : memref<8x16x17xbf16, #tpu.memory_space<vmem>>, vector<1x16x17xbf16>
    %273 = vector.shape_cast %272 : vector<1x16x17xbf16> to vector<16x17xbf16>
    %c1_151 = arith.constant 1 : index
    %c0_152 = arith.constant 0 : index
    %c0_153 = arith.constant 0 : index
    %274 = vector.load %arg9[%c1_151, %c0_152, %c0_153] : memref<2x8x17xbf16, #tpu.memory_space<vmem>>, vector<1x8x17xbf16>
    %275 = vector.shape_cast %274 : vector<1x8x17xbf16> to vector<8x17xbf16>
    %276 = tpu.concatenate %255, %2 in 0 : vector<8x512xf32>, vector<1x512xf32> -> vector<9x512xf32>
    %277 = arith.truncf %276 : vector<9x512xf32> to vector<9x512xbf16>
    %cst_154 = arith.constant dense<0.000000e+00> : vector<16x512xf32>
    %278 = tpu.matmul %257, %277, %cst_154 {dimension_numbers = #tpu.dot_dimension_numbers<[1], [0], [0], [1], [0, 0, 1, 1], [], []>} : vector<16x9xbf16>, vector<9x512xbf16>, vector<16x512xf32> -> vector<16x512xf32>
    %c1_i32_155 = arith.constant 1 : i32
    %279 = tpu.dynamic_rotate %278 by %c1_i32_155 dim 1 : vector<16x512xf32>, i32 -> vector<16x512xf32>
    %cst_156 = arith.constant 0.000000e+00 : f32
    %280 = vector.broadcast %cst_156 : f32 to vector<16x512xf32>
    %281 = arith.select %21, %279, %280 : vector<16x512xi1>, vector<16x512xf32>
    %c511_i32_157 = arith.constant 511 : i32
    %282 = tpu.dynamic_rotate %278 by %c511_i32_157 dim 1 : vector<16x512xf32>, i32 -> vector<16x512xf32>
    %cst_158 = arith.constant 0.000000e+00 : f32
    %283 = vector.broadcast %cst_158 : f32 to vector<16x512xf32>
    %284 = arith.select %29, %282, %283 : vector<16x512xi1>, vector<16x512xf32>
    %285 = tpu.concatenate %281, %278, %284, %2 in 0 : vector<16x512xf32>, vector<16x512xf32>, vector<16x512xf32>, vector<1x512xf32> -> vector<49x512xf32>
    %286 = arith.truncf %285 : vector<49x512xf32> to vector<49x512xbf16>
    %cst_159 = arith.constant dense<0.000000e+00> : vector<16x512xf32>
    %287 = tpu.matmul %259, %286, %cst_159 {dimension_numbers = #tpu.dot_dimension_numbers<[1], [0], [0], [1], [0, 0, 1, 1], [], []>} : vector<16x49xbf16>, vector<49x512xbf16>, vector<16x512xf32> -> vector<16x512xf32>
    %cst_160 = arith.constant 0.000000e+00 : f32
    %288 = vector.broadcast %cst_160 : f32 to vector<16x512xf32>
    %289 = arith.maximumf %287, %288 : vector<16x512xf32>
    %290 = tpu.concatenate %289, %2 in 0 : vector<16x512xf32>, vector<1x512xf32> -> vector<17x512xf32>
    %291 = arith.truncf %290 : vector<17x512xf32> to vector<17x512xbf16>
    %cst_161 = arith.constant dense<0.000000e+00> : vector<16x512xf32>
    %292 = tpu.matmul %267, %291, %cst_161 {dimension_numbers = #tpu.dot_dimension_numbers<[1], [0], [0], [1], [0, 0, 1, 1], [], []>} : vector<16x17xbf16>, vector<17x512xbf16>, vector<16x512xf32> -> vector<16x512xf32>
    %293 = arith.addf %278, %292 : vector<16x512xf32>
    %294 = vector.broadcast %1 : vector<1x512xf32> to vector<16x512xf32>
    %295 = arith.mulf %293, %294 : vector<16x512xf32>
    %c2_i32_162 = arith.constant 2 : i32
    %296 = tpu.dynamic_rotate %295 by %c2_i32_162 dim 1 : vector<16x512xf32>, i32 -> vector<16x512xf32>
    %cst_163 = arith.constant 0.000000e+00 : f32
    %297 = vector.broadcast %cst_163 : f32 to vector<16x512xf32>
    %298 = arith.select %23, %296, %297 : vector<16x512xi1>, vector<16x512xf32>
    %c510_i32_164 = arith.constant 510 : i32
    %299 = tpu.dynamic_rotate %295 by %c510_i32_164 dim 1 : vector<16x512xf32>, i32 -> vector<16x512xf32>
    %cst_165 = arith.constant 0.000000e+00 : f32
    %300 = vector.broadcast %cst_165 : f32 to vector<16x512xf32>
    %301 = arith.select %31, %299, %300 : vector<16x512xi1>, vector<16x512xf32>
    %302 = tpu.concatenate %298, %295, %301, %2 in 0 : vector<16x512xf32>, vector<16x512xf32>, vector<16x512xf32>, vector<1x512xf32> -> vector<49x512xf32>
    %303 = arith.truncf %302 : vector<49x512xf32> to vector<49x512xbf16>
    %cst_166 = arith.constant dense<0.000000e+00> : vector<16x512xf32>
    %304 = tpu.matmul %261, %303, %cst_166 {dimension_numbers = #tpu.dot_dimension_numbers<[1], [0], [0], [1], [0, 0, 1, 1], [], []>} : vector<16x49xbf16>, vector<49x512xbf16>, vector<16x512xf32> -> vector<16x512xf32>
    %cst_167 = arith.constant 0.000000e+00 : f32
    %305 = vector.broadcast %cst_167 : f32 to vector<16x512xf32>
    %306 = arith.maximumf %304, %305 : vector<16x512xf32>
    %307 = tpu.concatenate %306, %2 in 0 : vector<16x512xf32>, vector<1x512xf32> -> vector<17x512xf32>
    %308 = arith.truncf %307 : vector<17x512xf32> to vector<17x512xbf16>
    %cst_168 = arith.constant dense<0.000000e+00> : vector<16x512xf32>
    %309 = tpu.matmul %269, %308, %cst_168 {dimension_numbers = #tpu.dot_dimension_numbers<[1], [0], [0], [1], [0, 0, 1, 1], [], []>} : vector<16x17xbf16>, vector<17x512xbf16>, vector<16x512xf32> -> vector<16x512xf32>
    %310 = arith.addf %295, %309 : vector<16x512xf32>
    %311 = vector.broadcast %1 : vector<1x512xf32> to vector<16x512xf32>
    %312 = arith.mulf %310, %311 : vector<16x512xf32>
    %c4_i32_169 = arith.constant 4 : i32
    %313 = tpu.dynamic_rotate %312 by %c4_i32_169 dim 1 : vector<16x512xf32>, i32 -> vector<16x512xf32>
    %cst_170 = arith.constant 0.000000e+00 : f32
    %314 = vector.broadcast %cst_170 : f32 to vector<16x512xf32>
    %315 = arith.select %25, %313, %314 : vector<16x512xi1>, vector<16x512xf32>
    %c508_i32_171 = arith.constant 508 : i32
    %316 = tpu.dynamic_rotate %312 by %c508_i32_171 dim 1 : vector<16x512xf32>, i32 -> vector<16x512xf32>
    %cst_172 = arith.constant 0.000000e+00 : f32
    %317 = vector.broadcast %cst_172 : f32 to vector<16x512xf32>
    %318 = arith.select %33, %316, %317 : vector<16x512xi1>, vector<16x512xf32>
    %319 = tpu.concatenate %315, %312, %318, %2 in 0 : vector<16x512xf32>, vector<16x512xf32>, vector<16x512xf32>, vector<1x512xf32> -> vector<49x512xf32>
    %320 = arith.truncf %319 : vector<49x512xf32> to vector<49x512xbf16>
    %cst_173 = arith.constant dense<0.000000e+00> : vector<16x512xf32>
    %321 = tpu.matmul %263, %320, %cst_173 {dimension_numbers = #tpu.dot_dimension_numbers<[1], [0], [0], [1], [0, 0, 1, 1], [], []>} : vector<16x49xbf16>, vector<49x512xbf16>, vector<16x512xf32> -> vector<16x512xf32>
    %cst_174 = arith.constant 0.000000e+00 : f32
    %322 = vector.broadcast %cst_174 : f32 to vector<16x512xf32>
    %323 = arith.maximumf %321, %322 : vector<16x512xf32>
    %324 = tpu.concatenate %323, %2 in 0 : vector<16x512xf32>, vector<1x512xf32> -> vector<17x512xf32>
    %325 = arith.truncf %324 : vector<17x512xf32> to vector<17x512xbf16>
    %cst_175 = arith.constant dense<0.000000e+00> : vector<16x512xf32>
    %326 = tpu.matmul %271, %325, %cst_175 {dimension_numbers = #tpu.dot_dimension_numbers<[1], [0], [0], [1], [0, 0, 1, 1], [], []>} : vector<16x17xbf16>, vector<17x512xbf16>, vector<16x512xf32> -> vector<16x512xf32>
    %327 = arith.addf %312, %326 : vector<16x512xf32>
    %328 = vector.broadcast %1 : vector<1x512xf32> to vector<16x512xf32>
    %329 = arith.mulf %327, %328 : vector<16x512xf32>
    %c8_i32_176 = arith.constant 8 : i32
    %330 = tpu.dynamic_rotate %329 by %c8_i32_176 dim 1 : vector<16x512xf32>, i32 -> vector<16x512xf32>
    %cst_177 = arith.constant 0.000000e+00 : f32
    %331 = vector.broadcast %cst_177 : f32 to vector<16x512xf32>
    %332 = arith.select %27, %330, %331 : vector<16x512xi1>, vector<16x512xf32>
    %c504_i32_178 = arith.constant 504 : i32
    %333 = tpu.dynamic_rotate %329 by %c504_i32_178 dim 1 : vector<16x512xf32>, i32 -> vector<16x512xf32>
    %cst_179 = arith.constant 0.000000e+00 : f32
    %334 = vector.broadcast %cst_179 : f32 to vector<16x512xf32>
    %335 = arith.select %35, %333, %334 : vector<16x512xi1>, vector<16x512xf32>
    %336 = tpu.concatenate %332, %329, %335, %2 in 0 : vector<16x512xf32>, vector<16x512xf32>, vector<16x512xf32>, vector<1x512xf32> -> vector<49x512xf32>
    %337 = arith.truncf %336 : vector<49x512xf32> to vector<49x512xbf16>
    %cst_180 = arith.constant dense<0.000000e+00> : vector<16x512xf32>
    %338 = tpu.matmul %265, %337, %cst_180 {dimension_numbers = #tpu.dot_dimension_numbers<[1], [0], [0], [1], [0, 0, 1, 1], [], []>} : vector<16x49xbf16>, vector<49x512xbf16>, vector<16x512xf32> -> vector<16x512xf32>
    %cst_181 = arith.constant 0.000000e+00 : f32
    %339 = vector.broadcast %cst_181 : f32 to vector<16x512xf32>
    %340 = arith.maximumf %338, %339 : vector<16x512xf32>
    %341 = tpu.concatenate %340, %2 in 0 : vector<16x512xf32>, vector<1x512xf32> -> vector<17x512xf32>
    %342 = arith.truncf %341 : vector<17x512xf32> to vector<17x512xbf16>
    %cst_182 = arith.constant dense<0.000000e+00> : vector<16x512xf32>
    %343 = tpu.matmul %273, %342, %cst_182 {dimension_numbers = #tpu.dot_dimension_numbers<[1], [0], [0], [1], [0, 0, 1, 1], [], []>} : vector<16x17xbf16>, vector<17x512xbf16>, vector<16x512xf32> -> vector<16x512xf32>
    %344 = arith.addf %329, %343 : vector<16x512xf32>
    %345 = vector.broadcast %1 : vector<1x512xf32> to vector<16x512xf32>
    %346 = arith.mulf %344, %345 : vector<16x512xf32>
    %347 = tpu.concatenate %346, %2 in 0 : vector<16x512xf32>, vector<1x512xf32> -> vector<17x512xf32>
    %348 = arith.truncf %347 : vector<17x512xf32> to vector<17x512xbf16>
    %cst_183 = arith.constant dense<0.000000e+00> : vector<8x512xf32>
    %349 = tpu.matmul %275, %348, %cst_183 {dimension_numbers = #tpu.dot_dimension_numbers<[1], [0], [0], [1], [0, 0, 1, 1], [], []>} : vector<8x17xbf16>, vector<17x512xbf16>, vector<8x512xf32> -> vector<8x512xf32>
    %350 = vector.broadcast %1 : vector<1x512xf32> to vector<8x512xf32>
    %351 = arith.mulf %349, %350 : vector<8x512xf32>
    %c2_184 = arith.constant 2 : index
    %c0_185 = arith.constant 0 : index
    %c0_186 = arith.constant 0 : index
    %352 = vector.load %arg10[%c2_184, %c0_185, %c0_186] : memref<3x8x512xf32, #tpu.memory_space<vmem>>, vector<1x8x512xf32>
    %353 = vector.shape_cast %352 : vector<1x8x512xf32> to vector<8x512xf32>
    %354 = vector.shape_cast %351 : vector<8x512xf32> to vector<1x8x512xf32>
    tpu.vector_store %arg10[%c2_184, %c0_185, %c0_186], %354 {strides = array<i32>} : memref<3x8x512xf32, #tpu.memory_space<vmem>>, vector<1x8x512xf32>,
    return
  }
}

</mosaic_0001>

<llo_original>
// kernel: ms_tcn_forward.1
$region0: #{ms_tcn_forward.1}
  #allocation0 [shape = 'u32[]', space=smem, size = 0x4, offset = 0x4, fixed_abs, tag = 'smem constant byte address 0x4 - core index']
  #allocation1 [shape = 'u32[144,128]{1,0:T(1,128)}', space=vmem, size = 0x12000, scoped, tag = 'internal scratch']
  %s0 = inlined_call_operand.hbm [shape: f32[8,512], index: 0, kind: input, shape index: {}]
  %s1 = inlined_call_operand.vmem [shape: f32[1,512], index: 1, kind: input, shape index: {}]
  %s2 = inlined_call_operand.hbm [shape: bf16[16,9], index: 2, kind: input, shape index: {}]
  %s3 = inlined_call_operand.hbm [shape: bf16[4,16,49], index: 3, kind: input, shape index: {}]
  %s4 = inlined_call_operand.hbm [shape: bf16[4,16,17], index: 4, kind: input, shape index: {}]
  %s5 = inlined_call_operand.hbm [shape: bf16[8,17], index: 5, kind: input, shape index: {}]
  %s6 = inlined_call_operand.vmem [shape: bf16[2,16,9], index: 6, kind: input, shape index: {}]
  %s7 = inlined_call_operand.vmem [shape: bf16[8,16,49], index: 7, kind: input, shape index: {}]
  %s8 = inlined_call_operand.hbm [shape: bf16[8,16,17], index: 8, kind: input, shape index: {}]
  %s9 = inlined_call_operand.vmem [shape: bf16[2,8,17], index: 9, kind: input, shape index: {}]
  %s10 = inlined_call_operand.hbm [shape: f32[3,8,512], index: 10, kind: output, shape index: {}]
  %s11 = sld [smem:[#allocation0]]
  $region74: #{ms_tcn_forward.1} parent=0
    _
  %s13 = ssub.s32 1, %s11
  %s14 = scalar_select 0, %s13, %s11
  $region1: #{ms_tcn_forward.1} parent=0
    #allocation2 [shape = 'u8[16384]{0}', space=vmem, size = 0x4000, scoped, tag = 'input window, operand 0, single buffered']
    #allocation3 [shape = 's32[1]{0}', space=sflag, size = 0x4, scoped, tag = 'scoped memory for ms_tcn_forward.1']
    #allocation4 [shape = 's32[1]{0}', space=sflag, size = 0x4, scoped, tag = 'scoped memory for ms_tcn_forward.1']
    #allocation5 [shape = 'u8[4096]{0}', space=vmem, size = 0x1000, scoped, tag = 'input window, operand 2, single buffered']
    #allocation6 [shape = 's32[1]{0}', space=sflag, size = 0x4, scoped, tag = 'scoped memory for ms_tcn_forward.1']
    #allocation7 [shape = 'u8[16384]{0}', space=vmem, size = 0x4000, scoped, tag = 'input window, operand 3, single buffered']
    #allocation8 [shape = 'u8[16384]{0}', space=vmem, size = 0x4000, scoped, tag = 'input window, operand 4, single buffered']
    #allocation9 [shape = 's32[1]{0}', space=sflag, size = 0x4, scoped, tag = 'scoped memory for ms_tcn_forward.1']
    #allocation10 [shape = 'u8[2048]{0}', space=vmem, size = 0x800, scoped, tag = 'input window, operand 5, single buffered']
    #allocation11 [shape = 'u8[32768]{0}', space=vmem, size = 0x8000, scoped, tag = 'input window, operand 8, single buffered']
    #allocation12 [shape = 's32[1]{0}', space=sflag, size = 0x4, scoped, tag = 'scoped memory for ms_tcn_forward.1']
    #allocation13 [shape = 'u8[49152]{0}', space=vmem, size = 0xc000, scoped, tag = 'output window, operand 0, single buffered']
    %15 = vsyncpa [#allocation3], 0
    %16 = vsyncpa [#allocation6], 0
    %17 = vsyncpa [#allocation9], 0
    %18 = vsyncpa [#allocation12], 0
    %19 = vsyncpa [#allocation4], 0
    // Predicated region
    $region2: #{ms_tcn_forward.1} parent=1 // pred_check
      _
    $region3: #{ms_tcn_forward.1} parent=1 // pred_check_branch
      %21 = sbr.rel (0) target = $region5
    $region4: #{ms_tcn_forward.1} parent=1 // pred_region
      %s23 = ssub.s32 512, 512
      %24 = vsyncadd [#allocation3], %s23
      %s26 = sshll.u32 [#allocation2], 4
      %s27 = int_to_ptr.vmem [resolvable:$true] %s26
      %29 = dma.hbm_to_vmem [thread:$0]  %s0, 512, %s27, [#allocation3]
    $region5: #{ms_tcn_forward.1} parent=1 // pred_fallthru
      _
    // Predicated region
    $region6: #{ms_tcn_forward.1} parent=1 // pred_check
      _
    $region7: #{ms_tcn_forward.1} parent=1 // pred_check_branch
      %31 = sbr.rel (0) target = $region9
    $region8: #{ms_tcn_forward.1} parent=1 // pred_region
      _
    $region9: #{ms_tcn_forward.1} parent=1 // pred_fallthru
      _
    // Predicated region
    $region10: #{ms_tcn_forward.1} parent=1 // pred_check
      _
    $region11: #{ms_tcn_forward.1} parent=1 // pred_check_branch
      %33 = sbr.rel (0) target = $region13
    $region12: #{ms_tcn_forward.1} parent=1 // pred_region
      %s35 = ssub.s32 128, 128
      %36 = vsyncadd [#allocation6], %s35
      %s37 = sshll.u32 [#allocation5], 4
      %s38 = int_to_ptr.vmem [resolvable:$true] %s37
      %43 = dma.hbm_to_vmem [thread:$0]  %s2, 128, %s38, [#allocation6], 64, 64, 4
    $region13: #{ms_tcn_forward.1} parent=1 // pred_fallthru
      _
    // Predicated region
    $region14: #{ms_tcn_forward.1} parent=1 // pred_check
      _
    $region15: #{ms_tcn_forward.1} parent=1 // pred_check_branch
      %45 = sbr.rel (0) target = $region17
    $region16: #{ms_tcn_forward.1} parent=1 // pred_region
      %s47 = ssub.s32 512, 512
      %48 = vsyncadd [#allocation6], %s47
      %s49 = sshll.u32 [#allocation7], 4
      %s50 = int_to_ptr.vmem [resolvable:$true] %s49
      %55 = dma.hbm_to_vmem [thread:$0]  %s3, 512, %s50, [#allocation6], 64, 64, 4
    $region17: #{ms_tcn_forward.1} parent=1 // pred_fallthru
      _
    // Predicated region
    $region18: #{ms_tcn_forward.1} parent=1 // pred_check
      _
    $region19: #{ms_tcn_forward.1} parent=1 // pred_check_branch
      %57 = sbr.rel (0) target = $region21
    $region20: #{ms_tcn_forward.1} parent=1 // pred_region
      %s59 = ssub.s32 512, 512
      %60 = vsyncadd [#allocation9], %s59
      %s61 = sshll.u32 [#allocation8], 4
      %s62 = int_to_ptr.vmem [resolvable:$true] %s61
      %67 = dma.hbm_to_vmem [thread:$0]  %s4, 512, %s62, [#allocation9], 64, 64, 4
    $region21: #{ms_tcn_forward.1} parent=1 // pred_fallthru
      _
    // Predicated region
    $region22: #{ms_tcn_forward.1} parent=1 // pred_check
      _
    $region23: #{ms_tcn_forward.1} parent=1 // pred_check_branch
      %69 = sbr.rel (0) target = $region25
    $region24: #{ms_tcn_forward.1} parent=1 // pred_region
      %s71 = ssub.s32 64, 64
      %72 = vsyncadd [#allocation9], %s71
      %s74 = sshll.u32 [#allocation10], 4
      %s75 = int_to_ptr.vmem [resolvable:$true] %s74
      %77 = dma.hbm_to_vmem [thread:$0]  %s5, 64, %s75, [#allocation9]
    $region25: #{ms_tcn_forward.1} parent=1 // pred_fallthru
      _
    // Predicated region
    $region26: #{ms_tcn_forward.1} parent=1 // pred_check
      _
    $region27: #{ms_tcn_forward.1} parent=1 // pred_check_branch
      %79 = sbr.rel (0) target = $region29
    $region28: #{ms_tcn_forward.1} parent=1 // pred_region
      _
    $region29: #{ms_tcn_forward.1} parent=1 // pred_fallthru
      _
    // Predicated region
    $region30: #{ms_tcn_forward.1} parent=1 // pred_check
      _
    $region31: #{ms_tcn_forward.1} parent=1 // pred_check_branch
      %81 = sbr.rel (0) target = $region33
    $region32: #{ms_tcn_forward.1} parent=1 // pred_region
      _
    $region33: #{ms_tcn_forward.1} parent=1 // pred_fallthru
      _
    // Predicated region
    $region34: #{ms_tcn_forward.1} parent=1 // pred_check
      _
    $region35: #{ms_tcn_forward.1} parent=1 // pred_check_branch
      %83 = sbr.rel (0) target = $region37
    $region36: #{ms_tcn_forward.1} parent=1 // pred_region
      %s85 = ssub.s32 1024, 1024
      %86 = vsyncadd [#allocation12], %s85
      %s87 = sshll.u32 [#allocation11], 4
      %s88 = int_to_ptr.vmem [resolvable:$true] %s87
      %93 = dma.hbm_to_vmem [thread:$0]  %s8, 1024, %s88, [#allocation12], 64, 64, 4
    $region37: #{ms_tcn_forward.1} parent=1 // pred_fallthru
      _
    // Predicated region
    $region38: #{ms_tcn_forward.1} parent=1 // pred_check
      _
    $region39: #{ms_tcn_forward.1} parent=1 // pred_check_branch
      %95 = sbr.rel (0) target = $region41
    $region40: #{ms_tcn_forward.1} parent=1 // pred_region
      _
    $region41: #{ms_tcn_forward.1} parent=1 // pred_fallthru
      _
    // Predicated region
    $region42: #{ms_tcn_forward.1} parent=1 // pred_check
      _
    $region43: #{ms_tcn_forward.1} parent=1 // pred_check_branch
      %97 = sbr.rel (0) target = $region45
    $region44: #{ms_tcn_forward.1} parent=1 // pred_region
      %98 = dma.done [#allocation3], 512
    $region45: #{ms_tcn_forward.1} parent=1 // pred_fallthru
      _
    // Predicated region
    $region46: #{ms_tcn_forward.1} parent=1 // pred_check
      _
    $region47: #{ms_tcn_forward.1} parent=1 // pred_check_branch
      %100 = sbr.rel (0) target = $region49
    $region48: #{ms_tcn_forward.1} parent=1 // pred_region
      %101 = dma.done [#allocation6], 128
    $region49: #{ms_tcn_forward.1} parent=1 // pred_fallthru
      _
    // Predicated region
    $region50: #{ms_tcn_forward.1} parent=1 // pred_check
      _
    $region51: #{ms_tcn_forward.1} parent=1 // pred_check_branch
      %103 = sbr.rel (0) target = $region53
    $region52: #{ms_tcn_forward.1} parent=1 // pred_region
      %104 = dma.done [#allocation6], 512
    $region53: #{ms_tcn_forward.1} parent=1 // pred_fallthru
      _
    // Predicated region
    $region54: #{ms_tcn_forward.1} parent=1 // pred_check
      _
    $region55: #{ms_tcn_forward.1} parent=1 // pred_check_branch
      %106 = sbr.rel (0) target = $region57
    $region56: #{ms_tcn_forward.1} parent=1 // pred_region
      %107 = dma.done [#allocation9], 512
    $region57: #{ms_tcn_forward.1} parent=1 // pred_fallthru
      _
    // Predicated region
    $region58: #{ms_tcn_forward.1} parent=1 // pred_check
      _
    $region59: #{ms_tcn_forward.1} parent=1 // pred_check_branch
      %109 = sbr.rel (0) target = $region61
    $region60: #{ms_tcn_forward.1} parent=1 // pred_region
      %110 = dma.done [#allocation9], 64
    $region61: #{ms_tcn_forward.1} parent=1 // pred_fallthru
      _
    // Predicated region
    $region62: #{ms_tcn_forward.1} parent=1 // pred_check
      _
    $region63: #{ms_tcn_forward.1} parent=1 // pred_check_branch
      %112 = sbr.rel (0) target = $region65
    $region64: #{ms_tcn_forward.1} parent=1 // pred_region
      %113 = dma.done [#allocation12], 1024
    $region65: #{ms_tcn_forward.1} parent=1 // pred_fallthru
      _
    %v115 = vld [vmem:[#allocation2] sm:$0xff]
    %v116 = vld [vmem:[#allocation2 + $0x8] sm:$0xff]
    %v117 = vld [vmem:[#allocation2 + $0x10] sm:$0xff]
    %v118 = vld [vmem:[#allocation2 + $0x18] sm:$0xff]
    %v119 = vld [vmem:[%s1] sm:$0xf]
    %v120 = vlaneseq
    %v121 = vand.u32 %v120, 127
    %v122 = vadd.s32 %v121, 128
    %v123 = vadd.s32 %v121, 256
    %v124 = vadd.s32 %v121, 384
    %vm125 = vcmp.lt.s32.totalorder %v121, 0
    %v126 = vsub.s32 0, %v121
    %v127 = vsel %vm125, %v126, %v121
    %v128 = vshrl.u32 %v127, 8
    %v129 = vand.u32 %v127, 255
    %v130 = vsub.s32 0, %v129
    %v131 = vsel %vm125, %v130, %v129
    %vm132 = vcmp.lt.s32.totalorder %v122, 0
    %v133 = vsub.s32 0, %v122
    %v134 = vsel %vm132, %v133, %v122
    %v135 = vshrl.u32 %v134, 8
    %v136 = vand.u32 %v134, 255
    %v137 = vsub.s32 0, %v136
    %v138 = vsel %vm132, %v137, %v136
    %vm139 = vcmp.lt.s32.totalorder %v123, 0
    %v140 = vsub.s32 0, %v123
    %v141 = vsel %vm139, %v140, %v123
    %v142 = vshrl.u32 %v141, 8
    %v143 = vand.u32 %v141, 255
    %v144 = vsub.s32 0, %v143
    %v145 = vsel %vm139, %v144, %v143
    %vm146 = vcmp.lt.s32.totalorder %v124, 0
    %v147 = vsub.s32 0, %v124
    %v148 = vsel %vm146, %v147, %v124
    %v149 = vshrl.u32 %v148, 8
    %v150 = vand.u32 %v148, 255
    %v151 = vsub.s32 0, %v150
    %v152 = vsel %vm146, %v151, %v150
    %vm153 = vcmp.ne.s32.totalorder %v131, 0
    %vm154 = vcmp.ne.s32.totalorder %v138, 0
    %vm155 = vcmp.ne.s32.totalorder %v145, 0
    %vm156 = vcmp.ne.s32.totalorder %v152, 0
    %vm157 = vcmp.lt.s32.totalorder %v131, 0
    %vm158 = vcmp.lt.s32.totalorder %v138, 0
    %vm159 = vcmp.lt.s32.totalorder %v145, 0
    %vm160 = vcmp.lt.s32.totalorder %v152, 0
    %vm161 = vmand %vm157, %vm153
    %vm162 = vmand %vm158, %vm154
    %vm163 = vmand %vm159, %vm155
    %vm164 = vmand %vm160, %vm156
    %v165 = vadd.s32 %v131, 256
    %v166 = vadd.s32 %v138, 256
    %v167 = vadd.s32 %v145, 256
    %v168 = vadd.s32 %v152, 256
    %v169 = vsel %vm161, %v165, %v131
    %v170 = vsel %vm162, %v166, %v138
    %v171 = vsel %vm163, %v167, %v145
    %v172 = vsel %vm164, %v168, %v152
    %vm173 = vcmp.ge.s32.totalorder %v169, 1
    %vm174 = vcmp.ge.s32.totalorder %v170, 1
    %vm175 = vcmp.ge.s32.totalorder %v171, 1
    %vm176 = vcmp.ge.s32.totalorder %v172, 1
    %vm177 = vcmp.ge.s32.totalorder %v169, 2
    %vm178 = vcmp.ge.s32.totalorder %v170, 2
    %vm179 = vcmp.ge.s32.totalorder %v171, 2
    %vm180 = vcmp.ge.s32.totalorder %v172, 2
    %vm181 = vcmp.ge.s32.totalorder %v169, 4
    %vm182 = vcmp.ge.s32.totalorder %v170, 4
    %vm183 = vcmp.ge.s32.totalorder %v171, 4
    %vm184 = vcmp.ge.s32.totalorder %v172, 4
    %vm185 = vcmp.ge.s32.totalorder %v169, 8
    %vm186 = vcmp.ge.s32.totalorder %v170, 8
    %vm187 = vcmp.ge.s32.totalorder %v171, 8
    %vm188 = vcmp.ge.s32.totalorder %v172, 8
    %vm189 = vcmp.lt.s32.totalorder %v169, 255
    %vm190 = vcmp.lt.s32.totalorder %v170, 255
    %vm191 = vcmp.lt.s32.totalorder %v171, 255
    %vm192 = vcmp.lt.s32.totalorder %v172, 255
    %vm193 = vcmp.lt.s32.totalorder %v169, 254
    %vm194 = vcmp.lt.s32.totalorder %v170, 254
    %vm195 = vcmp.lt.s32.totalorder %v171, 254
    %vm196 = vcmp.lt.s32.totalorder %v172, 254
    %vm197 = vcmp.lt.s32.totalorder %v169, 252
    %vm198 = vcmp.lt.s32.totalorder %v170, 252
    %vm199 = vcmp.lt.s32.totalorder %v171, 252
    %vm200 = vcmp.lt.s32.totalorder %v172, 252
    %vm201 = vcmp.lt.s32.totalorder %v169, 248
    %vm202 = vcmp.lt.s32.totalorder %v170, 248
    %vm203 = vcmp.lt.s32.totalorder %v171, 248
    %vm204 = vcmp.lt.s32.totalorder %v172, 248
    %v205 = vld [vmem:[#allocation5] sm:$0xf]
    %v206 = vld [vmem:[#allocation5 + $0x4] sm:$0xf]
    %v207 = vld [vmem:[#allocation7] sm:$0xf]
    %v208 = vld [vmem:[#allocation7 + $0x4] sm:$0xf]
    %s209 = scalar_lea.vmem [#allocation7], 8
    %v210 = vld [vmem:[%s209] sm:$0xf]
    %v211 = vld [vmem:[%s209 + $0x4] sm:$0xf]
    %s212 = scalar_lea.vmem [#allocation7], 16
    %v213 = vld [vmem:[%s212] sm:$0xf]
    %v214 = vld [vmem:[%s212 + $0x4] sm:$0xf]
    %s215 = scalar_lea.vmem [#allocation7], 24
    %v216 = vld [vmem:[%s215] sm:$0xf]
    %v217 = vld [vmem:[%s215 + $0x4] sm:$0xf]
    %v218 = vld [vmem:[#allocation8] sm:$0xf]
    %v219 = vld [vmem:[#allocation8 + $0x4] sm:$0xf]
    %s220 = scalar_lea.vmem [#allocation8], 8
    %v221 = vld [vmem:[%s220] sm:$0xf]
    %v222 = vld [vmem:[%s220 + $0x4] sm:$0xf]
    %s223 = scalar_lea.vmem [#allocation8], 16
    %v224 = vld [vmem:[%s223] sm:$0xf]
    %v225 = vld [vmem:[%s223 + $0x4] sm:$0xf]
    %s226 = scalar_lea.vmem [#allocation8], 24
    %v227 = vld [vmem:[%s226] sm:$0xf]
    %v228 = vld [vmem:[%s226 + $0x4] sm:$0xf]
    %v229 = vld [vmem:[#allocation10] sm:$0xf]
    %v230 = vpack.c.bf16 1.0, %v115
    %v231 = vpack.c.bf16 1.0, %v116
    %v232 = vpack.c.bf16 1.0, %v117
    %v233 = vpack.c.bf16 1.0, %v118
    %v236 = vunpack.c.l.b16 %v205
    %v237 = vunpack.c.l.b16 %v206
    %v238 = vpack.c.b16 %v237, %v236
    %vm239 = vcmask 72704
    %v241 = vsel %vm239, %v238, 0
    %vm243 = vcmask 1043456
    %vm244 = vcmask 1044480
    %v245 = vsel %vm243, 4294967295, 65535
    %v246 = vsel %vm244, %v245, 0
    %v248 = vand.u32 %v230, %v246
    %v251 = vand.u32 %v231, %v246
    %v254 = vand.u32 %v232, %v246
    %v257 = vand.u32 %v233, %v246
    %259 = vmatprep.subr.bf16.mxu0 %v251
    %260 = vmatpush1.bf16.msra.mxu0 %v248
    %261 = vmatprep.subr.bf16.mxu0 0
    %262 = vmatpush1.bf16.msra.mxu0 0
    %263 = vmatprep.subr.bf16.mxu0 0
    %264 = vmatpush1.bf16.msra.mxu0 0
    %265 = vmatprep.subr.bf16.mxu0 0
    %266 = vmatpush1.bf16.msra.mxu0 0
    %267 = vmatprep.subr.bf16.mxu0 0
    %268 = vmatpush1.bf16.msra.mxu0 0
    %269 = vmatprep.subr.bf16.mxu0 0
    %270 = vmatpush1.bf16.msra.mxu0 0
    %271 = vmatprep.subr.bf16.mxu0 0
    %272 = vmatpush1.bf16.msra.mxu0 0
    %273 = vmatprep.subr.bf16.mxu0 0
    %274 = vmatpush1.bf16.msra.mxu0 0
    %275 = vmatprep.subr.bf16.mxu0 0
    %276 = vmatpush1.bf16.msra.mxu0 0
    %277 = vmatprep.subr.bf16.mxu0 0
    %278 = vmatpush1.bf16.msra.mxu0 0
    %279 = vmatprep.subr.bf16.mxu0 0
    %280 = vmatpush1.bf16.msra.mxu0 0
    %281 = vmatprep.subr.bf16.mxu0 0
    %282 = vmatpush1.bf16.msra.mxu0 0
    %283 = vmatprep.subr.bf16.mxu0 0
    %284 = vmatpush1.bf16.msra.mxu0 0
    %285 = vmatprep.subr.bf16.mxu0 0
    %286 = vmatpush1.bf16.msra.mxu0 0
    %287 = vmatprep.subr.bf16.mxu0 0
    %288 = vmatpush1.bf16.msra.mxu0 0
    %289 = vmatprep.subr.bf16.mxu0 0
    %290 = vmatpush1.bf16.msra.mxu0 0
    %291 = vmatprep.mubr.bf16.mxu0 0
    %292 = vmatmul.mubr.bf16.gmra.mrb[0].mxu0 %v241
    %v293 = vpop.f32.mrb[0].mxu0
    %v294 = vadd.f32 0.0, %v293
    %v295 = vpop.f32.mrb[0].mxu0
    %v296 = vadd.f32 0.0, %v295
    %v297 = vpop.f32.mrb[0].mxu0
    %v298 = vadd.f32 0.0, %v297
    %v299 = vpop.f32.mrb[0].mxu0
    %v300 = vadd.f32 0.0, %v299
    %301 = vdwg.mxu0
    %302 = vmatprep.subr.bf16.mxu0 %v257
    %303 = vmatpush1.bf16.msra.mxu0 %v254
    %304 = vmatprep.subr.bf16.mxu0 0
    %305 = vmatpush1.bf16.msra.mxu0 0
    %306 = vmatprep.subr.bf16.mxu0 0
    %307 = vmatpush1.bf16.msra.mxu0 0
    %308 = vmatprep.subr.bf16.mxu0 0
    %309 = vmatpush1.bf16.msra.mxu0 0
    %310 = vmatprep.subr.bf16.mxu0 0
    %311 = vmatpush1.bf16.msra.mxu0 0
    %312 = vmatprep.subr.bf16.mxu0 0
    %313 = vmatpush1.bf16.msra.mxu0 0
    %314 = vmatprep.subr.bf16.mxu0 0
    %315 = vmatpush1.bf16.msra.mxu0 0
    %316 = vmatprep.subr.bf16.mxu0 0
    %317 = vmatpush1.bf16.msra.mxu0 0
    %318 = vmatprep.subr.bf16.mxu0 0
    %319 = vmatpush1.bf16.msra.mxu0 0
    %320 = vmatprep.subr.bf16.mxu0 0
    %321 = vmatpush1.bf16.msra.mxu0 0
    %322 = vmatprep.subr.bf16.mxu0 0
    %323 = vmatpush1.bf16.msra.mxu0 0
    %324 = vmatprep.subr.bf16.mxu0 0
    %325 = vmatpush1.bf16.msra.mxu0 0
    %326 = vmatprep.subr.bf16.mxu0 0
    %327 = vmatpush1.bf16.msra.mxu0 0
    %328 = vmatprep.subr.bf16.mxu0 0
    %329 = vmatpush1.bf16.msra.mxu0 0
    %330 = vmatprep.subr.bf16.mxu0 0
    %331 = vmatpush1.bf16.msra.mxu0 0
    %332 = vmatprep.subr.bf16.mxu0 0
    %333 = vmatpush1.bf16.msra.mxu0 0
    %334 = vmatprep.mubr.bf16.mxu0 0
    %335 = vmatmul.mubr.bf16.gmra.mrb[0].mxu0 %v241
    %v336 = vpop.f32.mrb[0].mxu0
    %v337 = vadd.f32 0.0, %v336
    %v338 = vpop.f32.mrb[0].mxu0
    %v339 = vadd.f32 0.0, %v338
    %v340 = vpop.f32.mrb[0].mxu0
    %v341 = vadd.f32 0.0, %v340
    %v342 = vpop.f32.mrb[0].mxu0
    %v343 = vadd.f32 0.0, %v342
    %344 = vdwg.mxu0
    %345 = vrot.lane.b32.xlu0 %v294, 1
    %v346 = vpop.permute.xlu0 %345
    %347 = vrot.lane.b32.xlu0 %v298, 1
    %v348 = vpop.permute.xlu0 %347
    %349 = vrot.lane.b32.xlu0 %v296, 1
    %v350 = vpop.permute.xlu0 %349
    %351 = vrot.lane.b32.xlu0 %v300, 1
    %v352 = vpop.permute.xlu0 %351
    %353 = vrot.lane.b32.xlu0 %v337, 1
    %v354 = vpop.permute.xlu0 %353
    %355 = vrot.lane.b32.xlu0 %v341, 1
    %v356 = vpop.permute.xlu0 %355
    %357 = vrot.lane.b32.xlu0 %v339, 1
    %v358 = vpop.permute.xlu0 %357
    %359 = vrot.lane.b32.xlu0 %v343, 1
    %v360 = vpop.permute.xlu0 %359
    %vm361 = vcmp.lt.s32.totalorder %v121, 1
    %v362 = vsel %vm361, %v354, %v358
    %v363 = vsel %vm361, %v356, %v360
    %v364 = vsel %vm361, %v350, %v354
    %v365 = vsel %vm361, %v352, %v356
    %v366 = vsel %vm361, %v346, %v350
    %v367 = vsel %vm361, %v348, %v352
    %v368 = vsel %vm361, %v358, %v346
    %v369 = vsel %vm361, %v360, %v348
    %v370 = vsel %vm173, %v368, 0.0
    %v371 = vsel %vm174, %v366, 0.0
    %v372 = vsel %vm175, %v364, 0.0
    %v373 = vsel %vm176, %v362, 0.0
    %v374 = vsel %vm173, %v369, 0.0
    %v375 = vsel %vm174, %v367, 0.0
    %v376 = vsel %vm175, %v365, 0.0
    %v377 = vsel %vm176, %v363, 0.0
    %378 = vrot.lane.b32.xlu0 %v294, 127
    %v379 = vpop.permute.xlu0 %378
    %380 = vrot.lane.b32.xlu0 %v298, 127
    %v381 = vpop.permute.xlu0 %380
    %382 = vrot.lane.b32.xlu0 %v296, 127
    %v383 = vpop.permute.xlu0 %382
    %384 = vrot.lane.b32.xlu0 %v300, 127
    %v385 = vpop.permute.xlu0 %384
    %386 = vrot.lane.b32.xlu0 %v337, 127
    %v387 = vpop.permute.xlu0 %386
    %388 = vrot.lane.b32.xlu0 %v341, 127
    %v389 = vpop.permute.xlu0 %388
    %390 = vrot.lane.b32.xlu0 %v339, 127
    %v391 = vpop.permute.xlu0 %390
    %392 = vrot.lane.b32.xlu0 %v343, 127
    %v393 = vpop.permute.xlu0 %392
    %vm394 = vcmp.lt.s32.totalorder %v121, 127
    %v395 = vsel %vm394, %v387, %v391
    %v396 = vsel %vm394, %v389, %v393
    %v397 = vsel %vm394, %v383, %v387
    %v398 = vsel %vm394, %v385, %v389
    %v399 = vsel %vm394, %v379, %v383
    %v400 = vsel %vm394, %v381, %v385
    %v401 = vsel %vm394, %v391, %v379
    %v402 = vsel %vm394, %v393, %v381
    %v403 = vsel %vm189, %v399, 0.0
    %v404 = vsel %vm190, %v397, 0.0
    %v405 = vsel %vm191, %v395, 0.0
    %v406 = vsel %vm192, %v401, 0.0
    %v407 = vsel %vm189, %v400, 0.0
    %v408 = vsel %vm190, %v398, 0.0
    %v409 = vsel %vm191, %v396, 0.0
    %v410 = vsel %vm192, %v402, 0.0
    %v411 = vpack.c.bf16 %v374, %v370
    %v412 = vpack.c.bf16 %v375, %v371
    %v413 = vpack.c.bf16 %v376, %v372
    %v414 = vpack.c.bf16 %v377, %v373
    %v415 = vpack.c.bf16 %v298, %v294
    %v416 = vpack.c.bf16 %v300, %v296
    %v417 = vpack.c.bf16 %v341, %v337
    %v418 = vpack.c.bf16 %v343, %v339
    %v419 = vpack.c.bf16 %v407, %v403
    %v420 = vpack.c.bf16 %v408, %v404
    %v421 = vpack.c.bf16 %v409, %v405
    %v422 = vpack.c.bf16 %v410, %v406
    %v423 = vpack.c.bf16 1.0, 1.0
    %v426 = vunpack.c.l.b16 %v207
    %v427 = vunpack.c.l.b16 %v208
    %v428 = vpack.c.b16 %v427, %v426
    %vm429 = vcmask 400384
    %v431 = vsel %vm429, %v428, 0
    %vm433 = vcmask 1040384
    %v434 = vsel 0, 4294967295, 65535
    %v435 = vsel %vm433, %v434, 0
    %v437 = vand.u32 %v423, %v435
    %439 = vmatprep.subr.bf16.mxu0 %v412
    %440 = vmatpush1.bf16.msra.mxu0 %v411
    %441 = vmatprep.subr.bf16.mxu0 %v416
    %442 = vmatpush1.bf16.msra.mxu0 %v415
    %443 = vmatprep.subr.bf16.mxu0 %v420
    %444 = vmatpush1.bf16.msra.mxu0 %v419
    %445 = vmatprep.subr.bf16.mxu0 %v437
    %446 = vmatpush1.bf16.msra.mxu0 %v437
    %447 = vmatprep.subr.bf16.mxu0 0
    %448 = vmatpush1.bf16.msra.mxu0 0
    %449 = vmatprep.subr.bf16.mxu0 0
    %450 = vmatpush1.bf16.msra.mxu0 0
    %451 = vmatprep.subr.bf16.mxu0 0
    %452 = vmatpush1.bf16.msra.mxu0 0
    %453 = vmatprep.subr.bf16.mxu0 0
    %454 = vmatpush1.bf16.msra.mxu0 0
    %455 = vmatprep.subr.bf16.mxu0 0
    %456 = vmatpush1.bf16.msra.mxu0 0
    %457 = vmatprep.subr.bf16.mxu0 0
    %458 = vmatpush1.bf16.msra.mxu0 0
    %459 = vmatprep.subr.bf16.mxu0 0
    %460 = vmatpush1.bf16.msra.mxu0 0
    %461 = vmatprep.subr.bf16.mxu0 0
    %462 = vmatpush1.bf16.msra.mxu0 0
    %463 = vmatprep.subr.bf16.mxu0 0
    %464 = vmatpush1.bf16.msra.mxu0 0
    %465 = vmatprep.subr.bf16.mxu0 0
    %466 = vmatpush1.bf16.msra.mxu0 0
    %467 = vmatprep.subr.bf16.mxu0 0
    %468 = vmatpush1.bf16.msra.mxu0 0
    %469 = vmatprep.subr.bf16.mxu0 0
    %470 = vmatpush1.bf16.msra.mxu0 0
    %471 = vmatprep.mubr.bf16.mxu0 0
    %472 = vmatmul.mubr.bf16.gmra.mrb[0].mxu0 %v431
    %v473 = vpop.f32.mrb[0].mxu0
    %v474 = vadd.f32 0.0, %v473
    %v475 = vpop.f32.mrb[0].mxu0
    %v476 = vadd.f32 0.0, %v475
    %v477 = vpop.f32.mrb[0].mxu0
    %v478 = vadd.f32 0.0, %v477
    %v479 = vpop.f32.mrb[0].mxu0
    %v480 = vadd.f32 0.0, %v479
    %481 = vdwg.mxu0
    %482 = vmatprep.subr.bf16.mxu0 %v414
    %483 = vmatpush1.bf16.msra.mxu0 %v413
    %484 = vmatprep.subr.bf16.mxu0 %v418
    %485 = vmatpush1.bf16.msra.mxu0 %v417
    %486 = vmatprep.subr.bf16.mxu0 %v422
    %487 = vmatpush1.bf16.msra.mxu0 %v421
    %488 = vmatprep.subr.bf16.mxu0 %v437
    %489 = vmatpush1.bf16.msra.mxu0 %v437
    %490 = vmatprep.subr.bf16.mxu0 0
    %491 = vmatpush1.bf16.msra.mxu0 0
    %492 = vmatprep.subr.bf16.mxu0 0
    %493 = vmatpush1.bf16.msra.mxu0 0
    %494 = vmatprep.subr.bf16.mxu0 0
    %495 = vmatpush1.bf16.msra.mxu0 0
    %496 = vmatprep.subr.bf16.mxu0 0
    %497 = vmatpush1.bf16.msra.mxu0 0
    %498 = vmatprep.subr.bf16.mxu0 0
    %499 = vmatpush1.bf16.msra.mxu0 0
    %500 = vmatprep.subr.bf16.mxu0 0
    %501 = vmatpush1.bf16.msra.mxu0 0
    %502 = vmatprep.subr.bf16.mxu0 0
    %503 = vmatpush1.bf16.msra.mxu0 0
    %504 = vmatprep.subr.bf16.mxu0 0
    %505 = vmatpush1.bf16.msra.mxu0 0
    %506 = vmatprep.subr.bf16.mxu0 0
    %507 = vmatpush1.bf16.msra.mxu0 0
    %508 = vmatprep.subr.bf16.mxu0 0
    %509 = vmatpush1.bf16.msra.mxu0 0
    %510 = vmatprep.subr.bf16.mxu0 0
    %511 = vmatpush1.bf16.msra.mxu0 0
    %512 = vmatprep.subr.bf16.mxu0 0
    %513 = vmatpush1.bf16.msra.mxu0 0
    %514 = vmatprep.mubr.bf16.mxu0 0
    %515 = vmatmul.mubr.bf16.gmra.mrb[0].mxu0 %v431
    %v516 = vpop.f32.mrb[0].mxu0
    %v517 = vadd.f32 0.0, %v516
    %v518 = vpop.f32.mrb[0].mxu0
    %v519 = vadd.f32 0.0, %v518
    %v520 = vpop.f32.mrb[0].mxu0
    %v521 = vadd.f32 0.0, %v520
    %v522 = vpop.f32.mrb[0].mxu0
    %v523 = vadd.f32 0.0, %v522
    %524 = vdwg.mxu0
    %v525 = vmax.f32 %v474, 0.0
    %v526 = vmax.f32 %v476, 0.0
    %v527 = vmax.f32 %v517, 0.0
    %v528 = vmax.f32 %v519, 0.0
    %v529 = vmax.f32 %v478, 0.0
    %v530 = vmax.f32 %v480, 0.0
    %v531 = vmax.f32 %v521, 0.0
    %v532 = vmax.f32 %v523, 0.0
    %v533 = vpack.c.bf16 %v529, %v525
    %v534 = vpack.c.bf16 %v530, %v526
    %v535 = vpack.c.bf16 %v531, %v527
    %v536 = vpack.c.bf16 %v532, %v528
    %v539 = vunpack.c.l.b16 %v218
    %v540 = vunpack.c.l.b16 %v219
    %v541 = vpack.c.b16 %v540, %v539
    %vm542 = vcmask 138240
    %v544 = vsel %vm542, %v541, 0
    %546 = vmatprep.subr.bf16.mxu0 %v534
    %547 = vmatpush1.bf16.msra.mxu0 %v533
    %548 = vmatprep.subr.bf16.mxu0 %v437
    %549 = vmatpush1.bf16.msra.mxu0 %v437
    %550 = vmatprep.subr.bf16.mxu0 0
    %551 = vmatpush1.bf16.msra.mxu0 0
    %552 = vmatprep.subr.bf16.mxu0 0
    %553 = vmatpush1.bf16.msra.mxu0 0
    %554 = vmatprep.subr.bf16.mxu0 0
    %555 = vmatpush1.bf16.msra.mxu0 0
    %556 = vmatprep.subr.bf16.mxu0 0
    %557 = vmatpush1.bf16.msra.mxu0 0
    %558 = vmatprep.subr.bf16.mxu0 0
    %559 = vmatpush1.bf16.msra.mxu0 0
    %560 = vmatprep.subr.bf16.mxu0 0
    %561 = vmatpush1.bf16.msra.mxu0 0
    %562 = vmatprep.subr.bf16.mxu0 0
    %563 = vmatpush1.bf16.msra.mxu0 0
    %564 = vmatprep.subr.bf16.mxu0 0
    %565 = vmatpush1.bf16.msra.mxu0 0
    %566 = vmatprep.subr.bf16.mxu0 0
    %567 = vmatpush1.bf16.msra.mxu0 0
    %568 = vmatprep.subr.bf16.mxu0 0
    %569 = vmatpush1.bf16.msra.mxu0 0
    %570 = vmatprep.subr.bf16.mxu0 0
    %571 = vmatpush1.bf16.msra.mxu0 0
    %572 = vmatprep.subr.bf16.mxu0 0
    %573 = vmatpush1.bf16.msra.mxu0 0
    %574 = vmatprep.subr.bf16.mxu0 0
    %575 = vmatpush1.bf16.msra.mxu0 0
    %576 = vmatprep.subr.bf16.mxu0 0
    %577 = vmatpush1.bf16.msra.mxu0 0
    %578 = vmatprep.mubr.bf16.mxu0 0
    %579 = vmatmul.mubr.bf16.gmra.mrb[0].mxu0 %v544
    %v580 = vpop.f32.mrb[0].mxu0
    %v581 = vadd.f32 0.0, %v580
    %v582 = vpop.f32.mrb[0].mxu0
    %v583 = vadd.f32 0.0, %v582
    %v584 = vpop.f32.mrb[0].mxu0
    %v585 = vadd.f32 0.0, %v584
    %v586 = vpop.f32.mrb[0].mxu0
    %v587 = vadd.f32 0.0, %v586
    %588 = vdwg.mxu0
    %589 = vmatprep.subr.bf16.mxu0 %v536
    %590 = vmatpush1.bf16.msra.mxu0 %v535
    %591 = vmatprep.subr.bf16.mxu0 %v437
    %592 = vmatpush1.bf16.msra.mxu0 %v437
    %593 = vmatprep.subr.bf16.mxu0 0
    %594 = vmatpush1.bf16.msra.mxu0 0
    %595 = vmatprep.subr.bf16.mxu0 0
    %596 = vmatpush1.bf16.msra.mxu0 0
    %597 = vmatprep.subr.bf16.mxu0 0
    %598 = vmatpush1.bf16.msra.mxu0 0
    %599 = vmatprep.subr.bf16.mxu0 0
    %600 = vmatpush1.bf16.msra.mxu0 0
    %601 = vmatprep.subr.bf16.mxu0 0
    %602 = vmatpush1.bf16.msra.mxu0 0
    %603 = vmatprep.subr.bf16.mxu0 0
    %604 = vmatpush1.bf16.msra.mxu0 0
    %605 = vmatprep.subr.bf16.mxu0 0
    %606 = vmatpush1.bf16.msra.mxu0 0
    %607 = vmatprep.subr.bf16.mxu0 0
    %608 = vmatpush1.bf16.msra.mxu0 0
    %609 = vmatprep.subr.bf16.mxu0 0
    %610 = vmatpush1.bf16.msra.mxu0 0
    %611 = vmatprep.subr.bf16.mxu0 0
    %612 = vmatpush1.bf16.msra.mxu0 0
    %613 = vmatprep.subr.bf16.mxu0 0
    %614 = vmatpush1.bf16.msra.mxu0 0
    %615 = vmatprep.subr.bf16.mxu0 0
    %616 = vmatpush1.bf16.msra.mxu0 0
    %617 = vmatprep.subr.bf16.mxu0 0
    %618 = vmatpush1.bf16.msra.mxu0 0
    %619 = vmatprep.subr.bf16.mxu0 0
    %620 = vmatpush1.bf16.msra.mxu0 0
    %621 = vmatprep.mubr.bf16.mxu0 0
    %622 = vmatmul.mubr.bf16.gmra.mrb[0].mxu0 %v544
    %v623 = vpop.f32.mrb[0].mxu0
    %v624 = vadd.f32 0.0, %v623
    %v625 = vpop.f32.mrb[0].mxu0
    %v626 = vadd.f32 0.0, %v625
    %v627 = vpop.f32.mrb[0].mxu0
    %v628 = vadd.f32 0.0, %v627
    %v629 = vpop.f32.mrb[0].mxu0
    %v630 = vadd.f32 0.0, %v629
    %631 = vdwg.mxu0
    %v632 = vadd.f32 %v294, %v581
    %v633 = vadd.f32 %v296, %v583
    %v634 = vadd.f32 %v337, %v624
    %v635 = vadd.f32 %v339, %v626
    %v636 = vadd.f32 %v298, %v585
    %v637 = vadd.f32 %v300, %v587
    %v638 = vadd.f32 %v341, %v628
    %v639 = vadd.f32 %v343, %v630
    %v641 = vlaneseq
    %v642 = vshrl.u32 %v641, 7
    %v643 = vsub.s32 0, %v642
    %v644 = vrot.slane %v119, %v643
    %v645 = vlaneseq
    %v646 = vshrl.u32 %v645, 7
    %v647 = vsub.s32 1, %v646
    %v648 = vrot.slane %v119, %v647
    %v649 = vlaneseq
    %v650 = vshrl.u32 %v649, 7
    %v651 = vsub.s32 2, %v650
    %v652 = vrot.slane %v119, %v651
    %v653 = vlaneseq
    %v654 = vshrl.u32 %v653, 7
    %v655 = vsub.s32 3, %v654
    %v656 = vrot.slane %v119, %v655
    %v661 = vmul.f32 %v632, %v644
    %v662 = vmul.f32 %v633, %v648
    %v663 = vmul.f32 %v634, %v652
    %v664 = vmul.f32 %v635, %v656
    %v665 = vmul.f32 %v636, %v644
    %v666 = vmul.f32 %v637, %v648
    %v667 = vmul.f32 %v638, %v652
    %v668 = vmul.f32 %v639, %v656
    %669 = vrot.lane.b32.xlu0 %v661, 2
    %v670 = vpop.permute.xlu0 %669
    %671 = vrot.lane.b32.xlu0 %v665, 2
    %v672 = vpop.permute.xlu0 %671
    %673 = vrot.lane.b32.xlu0 %v662, 2
    %v674 = vpop.permute.xlu0 %673
    %675 = vrot.lane.b32.xlu0 %v666, 2
    %v676 = vpop.permute.xlu0 %675
    %677 = vrot.lane.b32.xlu0 %v663, 2
    %v678 = vpop.permute.xlu0 %677
    %679 = vrot.lane.b32.xlu0 %v667, 2
    %v680 = vpop.permute.xlu0 %679
    %681 = vrot.lane.b32.xlu0 %v664, 2
    %v682 = vpop.permute.xlu0 %681
    %683 = vrot.lane.b32.xlu0 %v668, 2
    %v684 = vpop.permute.xlu0 %683
    %vm685 = vcmp.lt.s32.totalorder %v121, 2
    %v686 = vsel %vm685, %v678, %v682
    %v687 = vsel %vm685, %v680, %v684
    %v688 = vsel %vm685, %v674, %v678
    %v689 = vsel %vm685, %v676, %v680
    %v690 = vsel %vm685, %v670, %v674
    %v691 = vsel %vm685, %v672, %v676
    %v692 = vsel %vm685, %v682, %v670
    %v693 = vsel %vm685, %v684, %v672
    %v694 = vsel %vm177, %v692, 0.0
    %v695 = vsel %vm178, %v690, 0.0
    %v696 = vsel %vm179, %v688, 0.0
    %v697 = vsel %vm180, %v686, 0.0
    %v698 = vsel %vm177, %v693, 0.0
    %v699 = vsel %vm178, %v691, 0.0
    %v700 = vsel %vm179, %v689, 0.0
    %v701 = vsel %vm180, %v687, 0.0
    %702 = vrot.lane.b32.xlu0 %v661, 126
    %v703 = vpop.permute.xlu0 %702
    %704 = vrot.lane.b32.xlu0 %v665, 126
    %v705 = vpop.permute.xlu0 %704
    %706 = vrot.lane.b32.xlu0 %v662, 126
    %v707 = vpop.permute.xlu0 %706
    %708 = vrot.lane.b32.xlu0 %v666, 126
    %v709 = vpop.permute.xlu0 %708
    %710 = vrot.lane.b32.xlu0 %v663, 126
    %v711 = vpop.permute.xlu0 %710
    %712 = vrot.lane.b32.xlu0 %v667, 126
    %v713 = vpop.permute.xlu0 %712
    %714 = vrot.lane.b32.xlu0 %v664, 126
    %v715 = vpop.permute.xlu0 %714
    %716 = vrot.lane.b32.xlu0 %v668, 126
    %v717 = vpop.permute.xlu0 %716
    %vm718 = vcmp.lt.s32.totalorder %v121, 126
    %v719 = vsel %vm718, %v711, %v715
    %v720 = vsel %vm718, %v713, %v717
    %v721 = vsel %vm718, %v707, %v711
    %v722 = vsel %vm718, %v709, %v713
    %v723 = vsel %vm718, %v703, %v707
    %v724 = vsel %vm718, %v705, %v709
    %v725 = vsel %vm718, %v715, %v703
    %v726 = vsel %vm718, %v717, %v705
    %v727 = vsel %vm193, %v723, 0.0
    %v728 = vsel %vm194, %v721, 0.0
    %v729 = vsel %vm195, %v719, 0.0
    %v730 = vsel %vm196, %v725, 0.0
    %v731 = vsel %vm193, %v724, 0.0
    %v732 = vsel %vm194, %v722, 0.0
    %v733 = vsel %vm195, %v720, 0.0
    %v734 = vsel %vm196, %v726, 0.0
    %v735 = vpack.c.bf16 %v698, %v694
    %v736 = vpack.c.bf16 %v699, %v695
    %v737 = vpack.c.bf16 %v700, %v696
    %v738 = vpack.c.bf16 %v701, %v697
    %v739 = vpack.c.bf16 %v665, %v661
    %v740 = vpack.c.bf16 %v666, %v662
    %v741 = vpack.c.bf16 %v667, %v663
    %v742 = vpack.c.bf16 %v668, %v664
    %v743 = vpack.c.bf16 %v731, %v727
    %v744 = vpack.c.bf16 %v732, %v728
    %v745 = vpack.c.bf16 %v733, %v729
    %v746 = vpack.c.bf16 %v734, %v730
    %v749 = vunpack.c.l.b16 %v210
    %v750 = vunpack.c.l.b16 %v211
    %v751 = vpack.c.b16 %v750, %v749
    %v753 = vsel %vm429, %v751, 0
    %755 = vmatprep.subr.bf16.mxu0 %v736
    %756 = vmatpush1.bf16.msra.mxu0 %v735
    %757 = vmatprep.subr.bf16.mxu0 %v740
    %758 = vmatpush1.bf16.msra.mxu0 %v739
    %759 = vmatprep.subr.bf16.mxu0 %v744
    %760 = vmatpush1.bf16.msra.mxu0 %v743
    %761 = vmatprep.subr.bf16.mxu0 %v437
    %762 = vmatpush1.bf16.msra.mxu0 %v437
    %763 = vmatprep.subr.bf16.mxu0 0
    %764 = vmatpush1.bf16.msra.mxu0 0
    %765 = vmatprep.subr.bf16.mxu0 0
    %766 = vmatpush1.bf16.msra.mxu0 0
    %767 = vmatprep.subr.bf16.mxu0 0
    %768 = vmatpush1.bf16.msra.mxu0 0
    %769 = vmatprep.subr.bf16.mxu0 0
    %770 = vmatpush1.bf16.msra.mxu0 0
    %771 = vmatprep.subr.bf16.mxu0 0
    %772 = vmatpush1.bf16.msra.mxu0 0
    %773 = vmatprep.subr.bf16.mxu0 0
    %774 = vmatpush1.bf16.msra.mxu0 0
    %775 = vmatprep.subr.bf16.mxu0 0
    %776 = vmatpush1.bf16.msra.mxu0 0
    %777 = vmatprep.subr.bf16.mxu0 0
    %778 = vmatpush1.bf16.msra.mxu0 0
    %779 = vmatprep.subr.bf16.mxu0 0
    %780 = vmatpush1.bf16.msra.mxu0 0
    %781 = vmatprep.subr.bf16.mxu0 0
    %782 = vmatpush1.bf16.msra.mxu0 0
    %783 = vmatprep.subr.bf16.mxu0 0
    %784 = vmatpush1.bf16.msra.mxu0 0
    %785 = vmatprep.subr.bf16.mxu0 0
    %786 = vmatpush1.bf16.msra.mxu0 0
    %787 = vmatprep.mubr.bf16.mxu0 0
    %788 = vmatmul.mubr.bf16.gmra.mrb[0].mxu0 %v753
    %v789 = vpop.f32.mrb[0].mxu0
    %v790 = vadd.f32 0.0, %v789
    %v791 = vpop.f32.mrb[0].mxu0
    %v792 = vadd.f32 0.0, %v791
    %v793 = vpop.f32.mrb[0].mxu0
    %v794 = vadd.f32 0.0, %v793
    %v795 = vpop.f32.mrb[0].mxu0
    %v796 = vadd.f32 0.0, %v795
    %797 = vdwg.mxu0
    %798 = vmatprep.subr.bf16.mxu0 %v738
    %799 = vmatpush1.bf16.msra.mxu0 %v737
    %800 = vmatprep.subr.bf16.mxu0 %v742
    %801 = vmatpush1.bf16.msra.mxu0 %v741
    %802 = vmatprep.subr.bf16.mxu0 %v746
    %803 = vmatpush1.bf16.msra.mxu0 %v745
    %804 = vmatprep.subr.bf16.mxu0 %v437
    %805 = vmatpush1.bf16.msra.mxu0 %v437
    %806 = vmatprep.subr.bf16.mxu0 0
    %807 = vmatpush1.bf16.msra.mxu0 0
    %808 = vmatprep.subr.bf16.mxu0 0
    %809 = vmatpush1.bf16.msra.mxu0 0
    %810 = vmatprep.subr.bf16.mxu0 0
    %811 = vmatpush1.bf16.msra.mxu0 0
    %812 = vmatprep.subr.bf16.mxu0 0
    %813 = vmatpush1.bf16.msra.mxu0 0
    %814 = vmatprep.subr.bf16.mxu0 0
    %815 = vmatpush1.bf16.msra.mxu0 0
    %816 = vmatprep.subr.bf16.mxu0 0
    %817 = vmatpush1.bf16.msra.mxu0 0
    %818 = vmatprep.subr.bf16.mxu0 0
    %819 = vmatpush1.bf16.msra.mxu0 0
    %820 = vmatprep.subr.bf16.mxu0 0
    %821 = vmatpush1.bf16.msra.mxu0 0
    %822 = vmatprep.subr.bf16.mxu0 0
    %823 = vmatpush1.bf16.msra.mxu0 0
    %824 = vmatprep.subr.bf16.mxu0 0
    %825 = vmatpush1.bf16.msra.mxu0 0
    %826 = vmatprep.subr.bf16.mxu0 0
    %827 = vmatpush1.bf16.msra.mxu0 0
    %828 = vmatprep.subr.bf16.mxu0 0
    %829 = vmatpush1.bf16.msra.mxu0 0
    %830 = vmatprep.mubr.bf16.mxu0 0
    %831 = vmatmul.mubr.bf16.gmra.mrb[0].mxu0 %v753
    %v832 = vpop.f32.mrb[0].mxu0
    %v833 = vadd.f32 0.0, %v832
    %v834 = vpop.f32.mrb[0].mxu0
    %v835 = vadd.f32 0.0, %v834
    %v836 = vpop.f32.mrb[0].mxu0
    %v837 = vadd.f32 0.0, %v836
    %v838 = vpop.f32.mrb[0].mxu0
    %v839 = vadd.f32 0.0, %v838
    %840 = vdwg.mxu0
    %v841 = vmax.f32 %v790, 0.0
    %v842 = vmax.f32 %v792, 0.0
    %v843 = vmax.f32 %v833, 0.0
    %v844 = vmax.f32 %v835, 0.0
    %v845 = vmax.f32 %v794, 0.0
    %v846 = vmax.f32 %v796, 0.0
    %v847 = vmax.f32 %v837, 0.0
    %v848 = vmax.f32 %v839, 0.0
    %v849 = vpack.c.bf16 %v845, %v841
    %v850 = vpack.c.bf16 %v846, %v842
    %v851 = vpack.c.bf16 %v847, %v843
    %v852 = vpack.c.bf16 %v848, %v844
    %v855 = vunpack.c.l.b16 %v221
    %v856 = vunpack.c.l.b16 %v222
    %v857 = vpack.c.b16 %v856, %v855
    %v859 = vsel %vm542, %v857, 0
    %861 = vmatprep.subr.bf16.mxu0 %v850
    %862 = vmatpush1.bf16.msra.mxu0 %v849
    %863 = vmatprep.subr.bf16.mxu0 %v437
    %864 = vmatpush1.bf16.msra.mxu0 %v437
    %865 = vmatprep.subr.bf16.mxu0 0
    %866 = vmatpush1.bf16.msra.mxu0 0
    %867 = vmatprep.subr.bf16.mxu0 0
    %868 = vmatpush1.bf16.msra.mxu0 0
    %869 = vmatprep.subr.bf16.mxu0 0
    %870 = vmatpush1.bf16.msra.mxu0 0
    %871 = vmatprep.subr.bf16.mxu0 0
    %872 = vmatpush1.bf16.msra.mxu0 0
    %873 = vmatprep.subr.bf16.mxu0 0
    %874 = vmatpush1.bf16.msra.mxu0 0
    %875 = vmatprep.subr.bf16.mxu0 0
    %876 = vmatpush1.bf16.msra.mxu0 0
    %877 = vmatprep.subr.bf16.mxu0 0
    %878 = vmatpush1.bf16.msra.mxu0 0
    %879 = vmatprep.subr.bf16.mxu0 0
    %880 = vmatpush1.bf16.msra.mxu0 0
    %881 = vmatprep.subr.bf16.mxu0 0
    %882 = vmatpush1.bf16.msra.mxu0 0
    %883 = vmatprep.subr.bf16.mxu0 0
    %884 = vmatpush1.bf16.msra.mxu0 0
    %885 = vmatprep.subr.bf16.mxu0 0
    %886 = vmatpush1.bf16.msra.mxu0 0
    %887 = vmatprep.subr.bf16.mxu0 0
    %888 = vmatpush1.bf16.msra.mxu0 0
    %889 = vmatprep.subr.bf16.mxu0 0
    %890 = vmatpush1.bf16.msra.mxu0 0
    %891 = vmatprep.subr.bf16.mxu0 0
    %892 = vmatpush1.bf16.msra.mxu0 0
    %893 = vmatprep.mubr.bf16.mxu0 0
    %894 = vmatmul.mubr.bf16.gmra.mrb[0].mxu0 %v859
    %v895 = vpop.f32.mrb[0].mxu0
    %v896 = vadd.f32 0.0, %v895
    %v897 = vpop.f32.mrb[0].mxu0
    %v898 = vadd.f32 0.0, %v897
    %v899 = vpop.f32.mrb[0].mxu0
    %v900 = vadd.f32 0.0, %v899
    %v901 = vpop.f32.mrb[0].mxu0
    %v902 = vadd.f32 0.0, %v901
    %903 = vdwg.mxu0
    %904 = vmatprep.subr.bf16.mxu0 %v852
    %905 = vmatpush1.bf16.msra.mxu0 %v851
    %906 = vmatprep.subr.bf16.mxu0 %v437
    %907 = vmatpush1.bf16.msra.mxu0 %v437
    %908 = vmatprep.subr.bf16.mxu0 0
    %909 = vmatpush1.bf16.msra.mxu0 0
    %910 = vmatprep.subr.bf16.mxu0 0
    %911 = vmatpush1.bf16.msra.mxu0 0
    %912 = vmatprep.subr.bf16.mxu0 0
    %913 = vmatpush1.bf16.msra.mxu0 0
    %914 = vmatprep.subr.bf16.mxu0 0
    %915 = vmatpush1.bf16.msra.mxu0 0
    %916 = vmatprep.subr.bf16.mxu0 0
    %917 = vmatpush1.bf16.msra.mxu0 0
    %918 = vmatprep.subr.bf16.mxu0 0
    %919 = vmatpush1.bf16.msra.mxu0 0
    %920 = vmatprep.subr.bf16.mxu0 0
    %921 = vmatpush1.bf16.msra.mxu0 0
    %922 = vmatprep.subr.bf16.mxu0 0
    %923 = vmatpush1.bf16.msra.mxu0 0
    %924 = vmatprep.subr.bf16.mxu0 0
    %925 = vmatpush1.bf16.msra.mxu0 0
    %926 = vmatprep.subr.bf16.mxu0 0
    %927 = vmatpush1.bf16.msra.mxu0 0
    %928 = vmatprep.subr.bf16.mxu0 0
    %929 = vmatpush1.bf16.msra.mxu0 0
    %930 = vmatprep.subr.bf16.mxu0 0
    %931 = vmatpush1.bf16.msra.mxu0 0
    %932 = vmatprep.subr.bf16.mxu0 0
    %933 = vmatpush1.bf16.msra.mxu0 0
    %934 = vmatprep.subr.bf16.mxu0 0
    %935 = vmatpush1.bf16.msra.mxu0 0
    %936 = vmatprep.mubr.bf16.mxu0 0
    %937 = vmatmul.mubr.bf16.gmra.mrb[0].mxu0 %v859
    %v938 = vpop.f32.mrb[0].mxu0
    %v939 = vadd.f32 0.0, %v938
    %v940 = vpop.f32.mrb[0].mxu0
    %v941 = vadd.f32 0.0, %v940
    %v942 = vpop.f32.mrb[0].mxu0
    %v943 = vadd.f32 0.0, %v942
    %v944 = vpop.f32.mrb[0].mxu0
    %v945 = vadd.f32 0.0, %v944
    %946 = vdwg.mxu0
    %v947 = vadd.f32 %v661, %v896
    %v948 = vadd.f32 %v662, %v898
    %v949 = vadd.f32 %v663, %v939
    %v950 = vadd.f32 %v664, %v941
    %v951 = vadd.f32 %v665, %v900
    %v952 = vadd.f32 %v666, %v902
    %v953 = vadd.f32 %v667, %v943
    %v954 = vadd.f32 %v668, %v945
    %v955 = vmul.f32 %v947, %v644
    %v956 = vmul.f32 %v948, %v648
    %v957 = vmul.f32 %v949, %v652
    %v958 = vmul.f32 %v950, %v656
    %v959 = vmul.f32 %v951, %v644
    %v960 = vmul.f32 %v952, %v648
    %v961 = vmul.f32 %v953, %v652
    %v962 = vmul.f32 %v954, %v656
    %963 = vrot.lane.b32.xlu0 %v955, 4
    %v964 = vpop.permute.xlu0 %963
    %965 = vrot.lane.b32.xlu0 %v959, 4
    %v966 = vpop.permute.xlu0 %965
    %967 = vrot.lane.b32.xlu0 %v956, 4
    %v968 = vpop.permute.xlu0 %967
    %969 = vrot.lane.b32.xlu0 %v960, 4
    %v970 = vpop.permute.xlu0 %969
    %971 = vrot.lane.b32.xlu0 %v957, 4
    %v972 = vpop.permute.xlu0 %971
    %973 = vrot.lane.b32.xlu0 %v961, 4
    %v974 = vpop.permute.xlu0 %973
    %975 = vrot.lane.b32.xlu0 %v958, 4
    %v976 = vpop.permute.xlu0 %975
    %977 = vrot.lane.b32.xlu0 %v962, 4
    %v978 = vpop.permute.xlu0 %977
    %vm979 = vcmp.lt.s32.totalorder %v121, 4
    %v980 = vsel %vm979, %v972, %v976
    %v981 = vsel %vm979, %v974, %v978
    %v982 = vsel %vm979, %v968, %v972
    %v983 = vsel %vm979, %v970, %v974
    %v984 = vsel %vm979, %v964, %v968
    %v985 = vsel %vm979, %v966, %v970
    %v986 = vsel %vm979, %v976, %v964
    %v987 = vsel %vm979, %v978, %v966
    %v988 = vsel %vm181, %v986, 0.0
    %v989 = vsel %vm182, %v984, 0.0
    %v990 = vsel %vm183, %v982, 0.0
    %v991 = vsel %vm184, %v980, 0.0
    %v992 = vsel %vm181, %v987, 0.0
    %v993 = vsel %vm182, %v985, 0.0
    %v994 = vsel %vm183, %v983, 0.0
    %v995 = vsel %vm184, %v981, 0.0
    %996 = vrot.lane.b32.xlu0 %v955, 124
    %v997 = vpop.permute.xlu0 %996
    %998 = vrot.lane.b32.xlu0 %v959, 124
    %v999 = vpop.permute.xlu0 %998
    %1000 = vrot.lane.b32.xlu0 %v956, 124
    %v1001 = vpop.permute.xlu0 %1000
    %1002 = vrot.lane.b32.xlu0 %v960, 124
    %v1003 = vpop.permute.xlu0 %1002
    %1004 = vrot.lane.b32.xlu0 %v957, 124
    %v1005 = vpop.permute.xlu0 %1004
    %1006 = vrot.lane.b32.xlu0 %v961, 124
    %v1007 = vpop.permute.xlu0 %1006
    %1008 = vrot.lane.b32.xlu0 %v958, 124
    %v1009 = vpop.permute.xlu0 %1008
    %1010 = vrot.lane.b32.xlu0 %v962, 124
    %v1011 = vpop.permute.xlu0 %1010
    %vm1012 = vcmp.lt.s32.totalorder %v121, 124
    %v1013 = vsel %vm1012, %v1005, %v1009
    %v1014 = vsel %vm1012, %v1007, %v1011
    %v1015 = vsel %vm1012, %v1001, %v1005
    %v1016 = vsel %vm1012, %v1003, %v1007
    %v1017 = vsel %vm1012, %v997, %v1001
    %v1018 = vsel %vm1012, %v999, %v1003
    %v1019 = vsel %vm1012, %v1009, %v997
    %v1020 = vsel %vm1012, %v1011, %v999
    %v1021 = vsel %vm197, %v1017, 0.0
    %v1022 = vsel %vm198, %v1015, 0.0
    %v1023 = vsel %vm199, %v1013, 0.0
    %v1024 = vsel %vm200, %v1019, 0.0
    %v1025 = vsel %vm197, %v1018, 0.0
    %v1026 = vsel %vm198, %v1016, 0.0
    %v1027 = vsel %vm199, %v1014, 0.0
    %v1028 = vsel %vm200, %v1020, 0.0
    %v1029 = vpack.c.bf16 %v992, %v988
    %v1030 = vpack.c.bf16 %v993, %v989
    %v1031 = vpack.c.bf16 %v994, %v990
    %v1032 = vpack.c.bf16 %v995, %v991
    %v1033 = vpack.c.bf16 %v959, %v955
    %v1034 = vpack.c.bf16 %v960, %v956
    %v1035 = vpack.c.bf16 %v961, %v957
    %v1036 = vpack.c.bf16 %v962, %v958
    %v1037 = vpack.c.bf16 %v1025, %v1021
    %v1038 = vpack.c.bf16 %v1026, %v1022
    %v1039 = vpack.c.bf16 %v1027, %v1023
    %v1040 = vpack.c.bf16 %v1028, %v1024
    %v1043 = vunpack.c.l.b16 %v213
    %v1044 = vunpack.c.l.b16 %v214
    %v1045 = vpack.c.b16 %v1044, %v1043
    %v1047 = vsel %vm429, %v1045, 0
    %1049 = vmatprep.subr.bf16.mxu0 %v1030
    %1050 = vmatpush1.bf16.msra.mxu0 %v1029
    %1051 = vmatprep.subr.bf16.mxu0 %v1034
    %1052 = vmatpush1.bf16.msra.mxu0 %v1033
    %1053 = vmatprep.subr.bf16.mxu0 %v1038
    %1054 = vmatpush1.bf16.msra.mxu0 %v1037
    %1055 = vmatprep.subr.bf16.mxu0 %v437
    %1056 = vmatpush1.bf16.msra.mxu0 %v437
    %1057 = vmatprep.subr.bf16.mxu0 0
    %1058 = vmatpush1.bf16.msra.mxu0 0
    %1059 = vmatprep.subr.bf16.mxu0 0
    %1060 = vmatpush1.bf16.msra.mxu0 0
    %1061 = vmatprep.subr.bf16.mxu0 0
    %1062 = vmatpush1.bf16.msra.mxu0 0
    %1063 = vmatprep.subr.bf16.mxu0 0
    %1064 = vmatpush1.bf16.msra.mxu0 0
    %1065 = vmatprep.subr.bf16.mxu0 0
    %1066 = vmatpush1.bf16.msra.mxu0 0
    %1067 = vmatprep.subr.bf16.mxu0 0
    %1068 = vmatpush1.bf16.msra.mxu0 0
    %1069 = vmatprep.subr.bf16.mxu0 0
    %1070 = vmatpush1.bf16.msra.mxu0 0
    %1071 = vmatprep.subr.bf16.mxu0 0
    %1072 = vmatpush1.bf16.msra.mxu0 0
    %1073 = vmatprep.subr.bf16.mxu0 0
    %1074 = vmatpush1.bf16.msra.mxu0 0
    %1075 = vmatprep.subr.bf16.mxu0 0
    %1076 = vmatpush1.bf16.msra.mxu0 0
    %1077 = vmatprep.subr.bf16.mxu0 0
    %1078 = vmatpush1.bf16.msra.mxu0 0
    %1079 = vmatprep.subr.bf16.mxu0 0
    %1080 = vmatpush1.bf16.msra.mxu0 0
    %1081 = vmatprep.mubr.bf16.mxu0 0
    %1082 = vmatmul.mubr.bf16.gmra.mrb[0].mxu0 %v1047
    %v1083 = vpop.f32.mrb[0].mxu0
    %v1084 = vadd.f32 0.0, %v1083
    %v1085 = vpop.f32.mrb[0].mxu0
    %v1086 = vadd.f32 0.0, %v1085
    %v1087 = vpop.f32.mrb[0].mxu0
    %v1088 = vadd.f32 0.0, %v1087
    %v1089 = vpop.f32.mrb[0].mxu0
    %v1090 = vadd.f32 0.0, %v1089
    %1091 = vdwg.mxu0
    %1092 = vmatprep.subr.bf16.mxu0 %v1032
    %1093 = vmatpush1.bf16.msra.mxu0 %v1031
    %1094 = vmatprep.subr.bf16.mxu0 %v1036
    %1095 = vmatpush1.bf16.msra.mxu0 %v1035
    %1096 = vmatprep.subr.bf16.mxu0 %v1040
    %1097 = vmatpush1.bf16.msra.mxu0 %v1039
    %1098 = vmatprep.subr.bf16.mxu0 %v437
    %1099 = vmatpush1.bf16.msra.mxu0 %v437
    %1100 = vmatprep.subr.bf16.mxu0 0
    %1101 = vmatpush1.bf16.msra.mxu0 0
    %1102 = vmatprep.subr.bf16.mxu0 0
    %1103 = vmatpush1.bf16.msra.mxu0 0
    %1104 = vmatprep.subr.bf16.mxu0 0
    %1105 = vmatpush1.bf16.msra.mxu0 0
    %1106 = vmatprep.subr.bf16.mxu0 0
    %1107 = vmatpush1.bf16.msra.mxu0 0
    %1108 = vmatprep.subr.bf16.mxu0 0
    %1109 = vmatpush1.bf16.msra.mxu0 0
    %1110 = vmatprep.subr.bf16.mxu0 0
    %1111 = vmatpush1.bf16.msra.mxu0 0
    %1112 = vmatprep.subr.bf16.mxu0 0
    %1113 = vmatpush1.bf16.msra.mxu0 0
    %1114 = vmatprep.subr.bf16.mxu0 0
    %1115 = vmatpush1.bf16.msra.mxu0 0
    %1116 = vmatprep.subr.bf16.mxu0 0
    %1117 = vmatpush1.bf16.msra.mxu0 0
    %1118 = vmatprep.subr.bf16.mxu0 0
    %1119 = vmatpush1.bf16.msra.mxu0 0
    %1120 = vmatprep.subr.bf16.mxu0 0
    %1121 = vmatpush1.bf16.msra.mxu0 0
    %1122 = vmatprep.subr.bf16.mxu0 0
    %1123 = vmatpush1.bf16.msra.mxu0 0
    %1124 = vmatprep.mubr.bf16.mxu0 0
    %1125 = vmatmul.mubr.bf16.gmra.mrb[0].mxu0 %v1047
    %v1126 = vpop.f32.mrb[0].mxu0
    %v1127 = vadd.f32 0.0, %v1126
    %v1128 = vpop.f32.mrb[0].mxu0
    %v1129 = vadd.f32 0.0, %v1128
    %v1130 = vpop.f32.mrb[0].mxu0
    %v1131 = vadd.f32 0.0, %v1130
    %v1132 = vpop.f32.mrb[0].mxu0
    %v1133 = vadd.f32 0.0, %v1132
    %1134 = vdwg.mxu0
    %v1135 = vmax.f32 %v1084, 0.0
    %v1136 = vmax.f32 %v1086, 0.0
    %v1137 = vmax.f32 %v1127, 0.0
    %v1138 = vmax.f32 %v1129, 0.0
    %v1139 = vmax.f32 %v1088, 0.0
    %v1140 = vmax.f32 %v1090, 0.0
    %v1141 = vmax.f32 %v1131, 0.0
    %v1142 = vmax.f32 %v1133, 0.0
    %v1143 = vpack.c.bf16 %v1139, %v1135
    %v1144 = vpack.c.bf16 %v1140, %v1136
    %v1145 = vpack.c.bf16 %v1141, %v1137
    %v1146 = vpack.c.bf16 %v1142, %v1138
    %v1149 = vunpack.c.l.b16 %v224
    %v1150 = vunpack.c.l.b16 %v225
    %v1151 = vpack.c.b16 %v1150, %v1149
    %v1153 = vsel %vm542, %v1151, 0
    %1155 = vmatprep.subr.bf16.mxu0 %v1144
    %1156 = vmatpush1.bf16.msra.mxu0 %v1143
    %1157 = vmatprep.subr.bf16.mxu0 %v437
    %1158 = vmatpush1.bf16.msra.mxu0 %v437
    %1159 = vmatprep.subr.bf16.mxu0 0
    %1160 = vmatpush1.bf16.msra.mxu0 0
    %1161 = vmatprep.subr.bf16.mxu0 0
    %1162 = vmatpush1.bf16.msra.mxu0 0
    %1163 = vmatprep.subr.bf16.mxu0 0
    %1164 = vmatpush1.bf16.msra.mxu0 0
    %1165 = vmatprep.subr.bf16.mxu0 0
    %1166 = vmatpush1.bf16.msra.mxu0 0
    %1167 = vmatprep.subr.bf16.mxu0 0
    %1168 = vmatpush1.bf16.msra.mxu0 0
    %1169 = vmatprep.subr.bf16.mxu0 0
    %1170 = vmatpush1.bf16.msra.mxu0 0
    %1171 = vmatprep.subr.bf16.mxu0 0
    %1172 = vmatpush1.bf16.msra.mxu0 0
    %1173 = vmatprep.subr.bf16.mxu0 0
    %1174 = vmatpush1.bf16.msra.mxu0 0
    %1175 = vmatprep.subr.bf16.mxu0 0
    %1176 = vmatpush1.bf16.msra.mxu0 0
    %1177 = vmatprep.subr.bf16.mxu0 0
    %1178 = vmatpush1.bf16.msra.mxu0 0
    %1179 = vmatprep.subr.bf16.mxu0 0
    %1180 = vmatpush1.bf16.msra.mxu0 0
    %1181 = vmatprep.subr.bf16.mxu0 0
    %1182 = vmatpush1.bf16.msra.mxu0 0
    %1183 = vmatprep.subr.bf16.mxu0 0
    %1184 = vmatpush1.bf16.msra.mxu0 0
    %1185 = vmatprep.subr.bf16.mxu0 0
    %1186 = vmatpush1.bf16.msra.mxu0 0
    %1187 = vmatprep.mubr.bf16.mxu0 0
    %1188 = vmatmul.mubr.bf16.gmra.mrb[0].mxu0 %v1153
    %v1189 = vpop.f32.mrb[0].mxu0
    %v1190 = vadd.f32 0.0, %v1189
    %v1191 = vpop.f32.mrb[0].mxu0
    %v1192 = vadd.f32 0.0, %v1191
    %v1193 = vpop.f32.mrb[0].mxu0
    %v1194 = vadd.f32 0.0, %v1193
    %v1195 = vpop.f32.mrb[0].mxu0
    %v1196 = vadd.f32 0.0, %v1195
    %1197 = vdwg.mxu0
    %1198 = vmatprep.subr.bf16.mxu0 %v1146
    %1199 = vmatpush1.bf16.msra.mxu0 %v1145
    %1200 = vmatprep.subr.bf16.mxu0 %v437
    %1201 = vmatpush1.bf16.msra.mxu0 %v437
    %1202 = vmatprep.subr.bf16.mxu0 0
    %1203 = vmatpush1.bf16.msra.mxu0 0
    %1204 = vmatprep.subr.bf16.mxu0 0
    %1205 = vmatpush1.bf16.msra.mxu0 0
    %1206 = vmatprep.subr.bf16.mxu0 0
    %1207 = vmatpush1.bf16.msra.mxu0 0
    %1208 = vmatprep.subr.bf16.mxu0 0
    %1209 = vmatpush1.bf16.msra.mxu0 0
    %1210 = vmatprep.subr.bf16.mxu0 0
    %1211 = vmatpush1.bf16.msra.mxu0 0
    %1212 = vmatprep.subr.bf16.mxu0 0
    %1213 = vmatpush1.bf16.msra.mxu0 0
    %1214 = vmatprep.subr.bf16.mxu0 0
    %1215 = vmatpush1.bf16.msra.mxu0 0
    %1216 = vmatprep.subr.bf16.mxu0 0
    %1217 = vmatpush1.bf16.msra.mxu0 0
    %1218 = vmatprep.subr.bf16.mxu0 0
    %1219 = vmatpush1.bf16.msra.mxu0 0
    %1220 = vmatprep.subr.bf16.mxu0 0
    %1221 = vmatpush1.bf16.msra.mxu0 0
    %1222 = vmatprep.subr.bf16.mxu0 0
    %1223 = vmatpush1.bf16.msra.mxu0 0
    %1224 = vmatprep.subr.bf16.mxu0 0
    %1225 = vmatpush1.bf16.msra.mxu0 0
    %1226 = vmatprep.subr.bf16.mxu0 0
    %1227 = vmatpush1.bf16.msra.mxu0 0
    %1228 = vmatprep.subr.bf16.mxu0 0
    %1229 = vmatpush1.bf16.msra.mxu0 0
    %1230 = vmatprep.mubr.bf16.mxu0 0
    %1231 = vmatmul.mubr.bf16.gmra.mrb[0].mxu0 %v1153
    %v1232 = vpop.f32.mrb[0].mxu0
    %v1233 = vadd.f32 0.0, %v1232
    %v1234 = vpop.f32.mrb[0].mxu0
    %v1235 = vadd.f32 0.0, %v1234
    %v1236 = vpop.f32.mrb[0].mxu0
    %v1237 = vadd.f32 0.0, %v1236
    %v1238 = vpop.f32.mrb[0].mxu0
    %v1239 = vadd.f32 0.0, %v1238
    %1240 = vdwg.mxu0
    %v1241 = vadd.f32 %v955, %v1190
    %v1242 = vadd.f32 %v956, %v1192
    %v1243 = vadd.f32 %v957, %v1233
    %v1244 = vadd.f32 %v958, %v1235
    %v1245 = vadd.f32 %v959, %v1194
    %v1246 = vadd.f32 %v960, %v1196
    %v1247 = vadd.f32 %v961, %v1237
    %v1248 = vadd.f32 %v962, %v1239
    %v1249 = vmul.f32 %v1241, %v644
    %v1250 = vmul.f32 %v1242, %v648
    %v1251 = vmul.f32 %v1243, %v652
    %v1252 = vmul.f32 %v1244, %v656
    %v1253 = vmul.f32 %v1245, %v644
    %v1254 = vmul.f32 %v1246, %v648
    %v1255 = vmul.f32 %v1247, %v652
    %v1256 = vmul.f32 %v1248, %v656
    %1257 = vrot.lane.b32.xlu0 %v1249, 8
    %v1258 = vpop.permute.xlu0 %1257
    %1259 = vrot.lane.b32.xlu0 %v1253, 8
    %v1260 = vpop.permute.xlu0 %1259
    %1261 = vrot.lane.b32.xlu0 %v1250, 8
    %v1262 = vpop.permute.xlu0 %1261
    %1263 = vrot.lane.b32.xlu0 %v1254, 8
    %v1264 = vpop.permute.xlu0 %1263
    %1265 = vrot.lane.b32.xlu0 %v1251, 8
    %v1266 = vpop.permute.xlu0 %1265
    %1267 = vrot.lane.b32.xlu0 %v1255, 8
    %v1268 = vpop.permute.xlu0 %1267
    %1269 = vrot.lane.b32.xlu0 %v1252, 8
    %v1270 = vpop.permute.xlu0 %1269
    %1271 = vrot.lane.b32.xlu0 %v1256, 8
    %v1272 = vpop.permute.xlu0 %1271
    %vm1273 = vcmp.lt.s32.totalorder %v121, 8
    %v1274 = vsel %vm1273, %v1266, %v1270
    %v1275 = vsel %vm1273, %v1268, %v1272
    %v1276 = vsel %vm1273, %v1262, %v1266
    %v1277 = vsel %vm1273, %v1264, %v1268
    %v1278 = vsel %vm1273, %v1258, %v1262
    %v1279 = vsel %vm1273, %v1260, %v1264
    %v1280 = vsel %vm1273, %v1270, %v1258
    %v1281 = vsel %vm1273, %v1272, %v1260
    %v1282 = vsel %vm185, %v1280, 0.0
    %v1283 = vsel %vm186, %v1278, 0.0
    %v1284 = vsel %vm187, %v1276, 0.0
    %v1285 = vsel %vm188, %v1274, 0.0
    %v1286 = vsel %vm185, %v1281, 0.0
    %v1287 = vsel %vm186, %v1279, 0.0
    %v1288 = vsel %vm187, %v1277, 0.0
    %v1289 = vsel %vm188, %v1275, 0.0
    %1290 = vrot.lane.b32.xlu0 %v1249, 120
    %v1291 = vpop.permute.xlu0 %1290
    %1292 = vrot.lane.b32.xlu0 %v1253, 120
    %v1293 = vpop.permute.xlu0 %1292
    %1294 = vrot.lane.b32.xlu0 %v1250, 120
    %v1295 = vpop.permute.xlu0 %1294
    %1296 = vrot.lane.b32.xlu0 %v1254, 120
    %v1297 = vpop.permute.xlu0 %1296
    %1298 = vrot.lane.b32.xlu0 %v1251, 120
    %v1299 = vpop.permute.xlu0 %1298
    %1300 = vrot.lane.b32.xlu0 %v1255, 120
    %v1301 = vpop.permute.xlu0 %1300
    %1302 = vrot.lane.b32.xlu0 %v1252, 120
    %v1303 = vpop.permute.xlu0 %1302
    %1304 = vrot.lane.b32.xlu0 %v1256, 120
    %v1305 = vpop.permute.xlu0 %1304
    %vm1306 = vcmp.lt.s32.totalorder %v121, 120
    %v1307 = vsel %vm1306, %v1299, %v1303
    %v1308 = vsel %vm1306, %v1301, %v1305
    %v1309 = vsel %vm1306, %v1295, %v1299
    %v1310 = vsel %vm1306, %v1297, %v1301
    %v1311 = vsel %vm1306, %v1291, %v1295
    %v1312 = vsel %vm1306, %v1293, %v1297
    %v1313 = vsel %vm1306, %v1303, %v1291
    %v1314 = vsel %vm1306, %v1305, %v1293
    %v1315 = vsel %vm201, %v1311, 0.0
    %v1316 = vsel %vm202, %v1309, 0.0
    %v1317 = vsel %vm203, %v1307, 0.0
    %v1318 = vsel %vm204, %v1313, 0.0
    %v1319 = vsel %vm201, %v1312, 0.0
    %v1320 = vsel %vm202, %v1310, 0.0
    %v1321 = vsel %vm203, %v1308, 0.0
    %v1322 = vsel %vm204, %v1314, 0.0
    %v1323 = vpack.c.bf16 %v1286, %v1282
    %v1324 = vpack.c.bf16 %v1287, %v1283
    %v1325 = vpack.c.bf16 %v1288, %v1284
    %v1326 = vpack.c.bf16 %v1289, %v1285
    %v1327 = vpack.c.bf16 %v1253, %v1249
    %v1328 = vpack.c.bf16 %v1254, %v1250
    %v1329 = vpack.c.bf16 %v1255, %v1251
    %v1330 = vpack.c.bf16 %v1256, %v1252
    %v1331 = vpack.c.bf16 %v1319, %v1315
    %v1332 = vpack.c.bf16 %v1320, %v1316
    %v1333 = vpack.c.bf16 %v1321, %v1317
    %v1334 = vpack.c.bf16 %v1322, %v1318
    %v1337 = vunpack.c.l.b16 %v216
    %v1338 = vunpack.c.l.b16 %v217
    %v1339 = vpack.c.b16 %v1338, %v1337
    %v1341 = vsel %vm429, %v1339, 0
    %1343 = vmatprep.subr.bf16.mxu0 %v1324
    %1344 = vmatpush1.bf16.msra.mxu0 %v1323
    %1345 = vmatprep.subr.bf16.mxu0 %v1328
    %1346 = vmatpush1.bf16.msra.mxu0 %v1327
    %1347 = vmatprep.subr.bf16.mxu0 %v1332
    %1348 = vmatpush1.bf16.msra.mxu0 %v1331
    %1349 = vmatprep.subr.bf16.mxu0 %v437
    %1350 = vmatpush1.bf16.msra.mxu0 %v437
    %1351 = vmatprep.subr.bf16.mxu0 0
    %1352 = vmatpush1.bf16.msra.mxu0 0
    %1353 = vmatprep.subr.bf16.mxu0 0
    %1354 = vmatpush1.bf16.msra.mxu0 0
    %1355 = vmatprep.subr.bf16.mxu0 0
    %1356 = vmatpush1.bf16.msra.mxu0 0
    %1357 = vmatprep.subr.bf16.mxu0 0
    %1358 = vmatpush1.bf16.msra.mxu0 0
    %1359 = vmatprep.subr.bf16.mxu0 0
    %1360 = vmatpush1.bf16.msra.mxu0 0
    %1361 = vmatprep.subr.bf16.mxu0 0
    %1362 = vmatpush1.bf16.msra.mxu0 0
    %1363 = vmatprep.subr.bf16.mxu0 0
    %1364 = vmatpush1.bf16.msra.mxu0 0
    %1365 = vmatprep.subr.bf16.mxu0 0
    %1366 = vmatpush1.bf16.msra.mxu0 0
    %1367 = vmatprep.subr.bf16.mxu0 0
    %1368 = vmatpush1.bf16.msra.mxu0 0
    %1369 = vmatprep.subr.bf16.mxu0 0
    %1370 = vmatpush1.bf16.msra.mxu0 0
    %1371 = vmatprep.subr.bf16.mxu0 0
    %1372 = vmatpush1.bf16.msra.mxu0 0
    %1373 = vmatprep.subr.bf16.mxu0 0
    %1374 = vmatpush1.bf16.msra.mxu0 0
    %1375 = vmatprep.mubr.bf16.mxu0 0
    %1376 = vmatmul.mubr.bf16.gmra.mrb[0].mxu0 %v1341
    %v1377 = vpop.f32.mrb[0].mxu0
    %v1378 = vadd.f32 0.0, %v1377
    %v1379 = vpop.f32.mrb[0].mxu0
    %v1380 = vadd.f32 0.0, %v1379
    %v1381 = vpop.f32.mrb[0].mxu0
    %v1382 = vadd.f32 0.0, %v1381
    %v1383 = vpop.f32.mrb[0].mxu0
    %v1384 = vadd.f32 0.0, %v1383
    %1385 = vdwg.mxu0
    %1386 = vmatprep.subr.bf16.mxu0 %v1326
    %1387 = vmatpush1.bf16.msra.mxu0 %v1325
    %1388 = vmatprep.subr.bf16.mxu0 %v1330
    %1389 = vmatpush1.bf16.msra.mxu0 %v1329
    %1390 = vmatprep.subr.bf16.mxu0 %v1334
    %1391 = vmatpush1.bf16.msra.mxu0 %v1333
    %1392 = vmatprep.subr.bf16.mxu0 %v437
    %1393 = vmatpush1.bf16.msra.mxu0 %v437
    %1394 = vmatprep.subr.bf16.mxu0 0
    %1395 = vmatpush1.bf16.msra.mxu0 0
    %1396 = vmatprep.subr.bf16.mxu0 0
    %1397 = vmatpush1.bf16.msra.mxu0 0
    %1398 = vmatprep.subr.bf16.mxu0 0
    %1399 = vmatpush1.bf16.msra.mxu0 0
    %1400 = vmatprep.subr.bf16.mxu0 0
    %1401 = vmatpush1.bf16.msra.mxu0 0
    %1402 = vmatprep.subr.bf16.mxu0 0
    %1403 = vmatpush1.bf16.msra.mxu0 0
    %1404 = vmatprep.subr.bf16.mxu0 0
    %1405 = vmatpush1.bf16.msra.mxu0 0
    %1406 = vmatprep.subr.bf16.mxu0 0
    %1407 = vmatpush1.bf16.msra.mxu0 0
    %1408 = vmatprep.subr.bf16.mxu0 0
    %1409 = vmatpush1.bf16.msra.mxu0 0
    %1410 = vmatprep.subr.bf16.mxu0 0
    %1411 = vmatpush1.bf16.msra.mxu0 0
    %1412 = vmatprep.subr.bf16.mxu0 0
    %1413 = vmatpush1.bf16.msra.mxu0 0
    %1414 = vmatprep.subr.bf16.mxu0 0
    %1415 = vmatpush1.bf16.msra.mxu0 0
    %1416 = vmatprep.subr.bf16.mxu0 0
    %1417 = vmatpush1.bf16.msra.mxu0 0
    %1418 = vmatprep.mubr.bf16.mxu0 0
    %1419 = vmatmul.mubr.bf16.gmra.mrb[0].mxu0 %v1341
    %v1420 = vpop.f32.mrb[0].mxu0
    %v1421 = vadd.f32 0.0, %v1420
    %v1422 = vpop.f32.mrb[0].mxu0
    %v1423 = vadd.f32 0.0, %v1422
    %v1424 = vpop.f32.mrb[0].mxu0
    %v1425 = vadd.f32 0.0, %v1424
    %v1426 = vpop.f32.mrb[0].mxu0
    %v1427 = vadd.f32 0.0, %v1426
    %1428 = vdwg.mxu0
    %v1429 = vmax.f32 %v1378, 0.0
    %v1430 = vmax.f32 %v1380, 0.0
    %v1431 = vmax.f32 %v1421, 0.0
    %v1432 = vmax.f32 %v1423, 0.0
    %v1433 = vmax.f32 %v1382, 0.0
    %v1434 = vmax.f32 %v1384, 0.0
    %v1435 = vmax.f32 %v1425, 0.0
    %v1436 = vmax.f32 %v1427, 0.0
    %v1437 = vpack.c.bf16 %v1433, %v1429
    %v1438 = vpack.c.bf16 %v1434, %v1430
    %v1439 = vpack.c.bf16 %v1435, %v1431
    %v1440 = vpack.c.bf16 %v1436, %v1432
    %v1443 = vunpack.c.l.b16 %v227
    %v1444 = vunpack.c.l.b16 %v228
    %v1445 = vpack.c.b16 %v1444, %v1443
    %v1447 = vsel %vm542, %v1445, 0
    %1449 = vmatprep.subr.bf16.mxu0 %v1438
    %1450 = vmatpush1.bf16.msra.mxu0 %v1437
    %1451 = vmatprep.subr.bf16.mxu0 %v437
    %1452 = vmatpush1.bf16.msra.mxu0 %v437
    %1453 = vmatprep.subr.bf16.mxu0 0
    %1454 = vmatpush1.bf16.msra.mxu0 0
    %1455 = vmatprep.subr.bf16.mxu0 0
    %1456 = vmatpush1.bf16.msra.mxu0 0
    %1457 = vmatprep.subr.bf16.mxu0 0
    %1458 = vmatpush1.bf16.msra.mxu0 0
    %1459 = vmatprep.subr.bf16.mxu0 0
    %1460 = vmatpush1.bf16.msra.mxu0 0
    %1461 = vmatprep.subr.bf16.mxu0 0
    %1462 = vmatpush1.bf16.msra.mxu0 0
    %1463 = vmatprep.subr.bf16.mxu0 0
    %1464 = vmatpush1.bf16.msra.mxu0 0
    %1465 = vmatprep.subr.bf16.mxu0 0
    %1466 = vmatpush1.bf16.msra.mxu0 0
    %1467 = vmatprep.subr.bf16.mxu0 0
    %1468 = vmatpush1.bf16.msra.mxu0 0
    %1469 = vmatprep.subr.bf16.mxu0 0
    %1470 = vmatpush1.bf16.msra.mxu0 0
    %1471 = vmatprep.subr.bf16.mxu0 0
    %1472 = vmatpush1.bf16.msra.mxu0 0
    %1473 = vmatprep.subr.bf16.mxu0 0
    %1474 = vmatpush1.bf16.msra.mxu0 0
    %1475 = vmatprep.subr.bf16.mxu0 0
    %1476 = vmatpush1.bf16.msra.mxu0 0
    %1477 = vmatprep.subr.bf16.mxu0 0
    %1478 = vmatpush1.bf16.msra.mxu0 0
    %1479 = vmatprep.subr.bf16.mxu0 0
    %1480 = vmatpush1.bf16.msra.mxu0 0
    %1481 = vmatprep.mubr.bf16.mxu0 0
    %1482 = vmatmul.mubr.bf16.gmra.mrb[0].mxu0 %v1447
    %v1483 = vpop.f32.mrb[0].mxu0
    %v1484 = vadd.f32 0.0, %v1483
    %v1485 = vpop.f32.mrb[0].mxu0
    %v1486 = vadd.f32 0.0, %v1485
    %v1487 = vpop.f32.mrb[0].mxu0
    %v1488 = vadd.f32 0.0, %v1487
    %v1489 = vpop.f32.mrb[0].mxu0
    %v1490 = vadd.f32 0.0, %v1489
    %1491 = vdwg.mxu0
    %1492 = vmatprep.subr.bf16.mxu0 %v1440
    %1493 = vmatpush1.bf16.msra.mxu0 %v1439
    %1494 = vmatprep.subr.bf16.mxu0 %v437
    %1495 = vmatpush1.bf16.msra.mxu0 %v437
    %1496 = vmatprep.subr.bf16.mxu0 0
    %1497 = vmatpush1.bf16.msra.mxu0 0
    %1498 = vmatprep.subr.bf16.mxu0 0
    %1499 = vmatpush1.bf16.msra.mxu0 0
    %1500 = vmatprep.subr.bf16.mxu0 0
    %1501 = vmatpush1.bf16.msra.mxu0 0
    %1502 = vmatprep.subr.bf16.mxu0 0
    %1503 = vmatpush1.bf16.msra.mxu0 0
    %1504 = vmatprep.subr.bf16.mxu0 0
    %1505 = vmatpush1.bf16.msra.mxu0 0
    %1506 = vmatprep.subr.bf16.mxu0 0
    %1507 = vmatpush1.bf16.msra.mxu0 0
    %1508 = vmatprep.subr.bf16.mxu0 0
    %1509 = vmatpush1.bf16.msra.mxu0 0
    %1510 = vmatprep.subr.bf16.mxu0 0
    %1511 = vmatpush1.bf16.msra.mxu0 0
    %1512 = vmatprep.subr.bf16.mxu0 0
    %1513 = vmatpush1.bf16.msra.mxu0 0
    %1514 = vmatprep.subr.bf16.mxu0 0
    %1515 = vmatpush1.bf16.msra.mxu0 0
    %1516 = vmatprep.subr.bf16.mxu0 0
    %1517 = vmatpush1.bf16.msra.mxu0 0
    %1518 = vmatprep.subr.bf16.mxu0 0
    %1519 = vmatpush1.bf16.msra.mxu0 0
    %1520 = vmatprep.subr.bf16.mxu0 0
    %1521 = vmatpush1.bf16.msra.mxu0 0
    %1522 = vmatprep.subr.bf16.mxu0 0
    %1523 = vmatpush1.bf16.msra.mxu0 0
    %1524 = vmatprep.mubr.bf16.mxu0 0
    %1525 = vmatmul.mubr.bf16.gmra.mrb[0].mxu0 %v1447
    %v1526 = vpop.f32.mrb[0].mxu0
    %v1527 = vadd.f32 0.0, %v1526
    %v1528 = vpop.f32.mrb[0].mxu0
    %v1529 = vadd.f32 0.0, %v1528
    %v1530 = vpop.f32.mrb[0].mxu0
    %v1531 = vadd.f32 0.0, %v1530
    %v1532 = vpop.f32.mrb[0].mxu0
    %v1533 = vadd.f32 0.0, %v1532
    %1534 = vdwg.mxu0
    %v1535 = vadd.f32 %v1249, %v1484
    %v1536 = vadd.f32 %v1250, %v1486
    %v1537 = vadd.f32 %v1251, %v1527
    %v1538 = vadd.f32 %v1252, %v1529
    %v1539 = vadd.f32 %v1253, %v1488
    %v1540 = vadd.f32 %v1254, %v1490
    %v1541 = vadd.f32 %v1255, %v1531
    %v1542 = vadd.f32 %v1256, %v1533
    %v1543 = vmul.f32 %v1535, %v644
    %v1544 = vmul.f32 %v1536, %v648
    %v1545 = vmul.f32 %v1537, %v652
    %v1546 = vmul.f32 %v1538, %v656
    %v1547 = vmul.f32 %v1539, %v644
    %v1548 = vmul.f32 %v1540, %v648
    %v1549 = vmul.f32 %v1541, %v652
    %v1550 = vmul.f32 %v1542, %v656
    %v1551 = vpack.c.bf16 %v1547, %v1543
    %v1552 = vpack.c.bf16 %v1548, %v1544
    %v1553 = vpack.c.bf16 %v1549, %v1545
    %v1554 = vpack.c.bf16 %v1550, %v1546
    %v1556 = vsel %vm542, %v229, 0
    %1558 = vmatprep.subr.bf16.mxu0 %v1552
    %1559 = vmatpush1.bf16.msra.mxu0 %v1551
    %1560 = vmatprep.subr.bf16.mxu0 %v437
    %1561 = vmatpush1.bf16.msra.mxu0 %v437
    %1562 = vmatprep.subr.bf16.mxu0 0
    %1563 = vmatpush1.bf16.msra.mxu0 0
    %1564 = vmatprep.subr.bf16.mxu0 0
    %1565 = vmatpush1.bf16.msra.mxu0 0
    %1566 = vmatprep.subr.bf16.mxu0 0
    %1567 = vmatpush1.bf16.msra.mxu0 0
    %1568 = vmatprep.subr.bf16.mxu0 0
    %1569 = vmatpush1.bf16.msra.mxu0 0
    %1570 = vmatprep.subr.bf16.mxu0 0
    %1571 = vmatpush1.bf16.msra.mxu0 0
    %1572 = vmatprep.subr.bf16.mxu0 0
    %1573 = vmatpush1.bf16.msra.mxu0 0
    %1574 = vmatprep.subr.bf16.mxu0 0
    %1575 = vmatpush1.bf16.msra.mxu0 0
    %1576 = vmatprep.subr.bf16.mxu0 0
    %1577 = vmatpush1.bf16.msra.mxu0 0
    %1578 = vmatprep.subr.bf16.mxu0 0
    %1579 = vmatpush1.bf16.msra.mxu0 0
    %1580 = vmatprep.subr.bf16.mxu0 0
    %1581 = vmatpush1.bf16.msra.mxu0 0
    %1582 = vmatprep.subr.bf16.mxu0 0
    %1583 = vmatpush1.bf16.msra.mxu0 0
    %1584 = vmatprep.subr.bf16.mxu0 0
    %1585 = vmatpush1.bf16.msra.mxu0 0
    %1586 = vmatprep.subr.bf16.mxu0 0
    %1587 = vmatpush1.bf16.msra.mxu0 0
    %1588 = vmatprep.subr.bf16.mxu0 0
    %1589 = vmatpush1.bf16.msra.mxu0 0
    %1590 = vmatprep.mubr.bf16.mxu0 0
    %1591 = vmatmul.mubr.bf16.gmra.mrb[0].mxu0 %v1556
    %v1592 = vpop.f32.mrb[0].mxu0
    %v1593 = vadd.f32 0.0, %v1592
    %v1594 = vpop.f32.mrb[0].mxu0
    %v1595 = vadd.f32 0.0, %v1594
    %v1596 = vpop.f32.mrb[0].mxu0
    %v1597 = vpop.f32.mrb[0].mxu0
    %1598 = vdwg.mxu0
    %1599 = vmatprep.subr.bf16.mxu0 %v1554
    %1600 = vmatpush1.bf16.msra.mxu0 %v1553
    %1601 = vmatprep.subr.bf16.mxu0 %v437
    %1602 = vmatpush1.bf16.msra.mxu0 %v437
    %1603 = vmatprep.subr.bf16.mxu0 0
    %1604 = vmatpush1.bf16.msra.mxu0 0
    %1605 = vmatprep.subr.bf16.mxu0 0
    %1606 = vmatpush1.bf16.msra.mxu0 0
    %1607 = vmatprep.subr.bf16.mxu0 0
    %1608 = vmatpush1.bf16.msra.mxu0 0
    %1609 = vmatprep.subr.bf16.mxu0 0
    %1610 = vmatpush1.bf16.msra.mxu0 0
    %1611 = vmatprep.subr.bf16.mxu0 0
    %1612 = vmatpush1.bf16.msra.mxu0 0
    %1613 = vmatprep.subr.bf16.mxu0 0
    %1614 = vmatpush1.bf16.msra.mxu0 0
    %1615 = vmatprep.subr.bf16.mxu0 0
    %1616 = vmatpush1.bf16.msra.mxu0 0
    %1617 = vmatprep.subr.bf16.mxu0 0
    %1618 = vmatpush1.bf16.msra.mxu0 0
    %1619 = vmatprep.subr.bf16.mxu0 0
    %1620 = vmatpush1.bf16.msra.mxu0 0
    %1621 = vmatprep.subr.bf16.mxu0 0
    %1622 = vmatpush1.bf16.msra.mxu0 0
    %1623 = vmatprep.subr.bf16.mxu0 0
    %1624 = vmatpush1.bf16.msra.mxu0 0
    %1625 = vmatprep.subr.bf16.mxu0 0
    %1626 = vmatpush1.bf16.msra.mxu0 0
    %1627 = vmatprep.subr.bf16.mxu0 0
    %1628 = vmatpush1.bf16.msra.mxu0 0
    %1629 = vmatprep.subr.bf16.mxu0 0
    %1630 = vmatpush1.bf16.msra.mxu0 0
    %1631 = vmatprep.mubr.bf16.mxu0 0
    %1632 = vmatmul.mubr.bf16.gmra.mrb[0].mxu0 %v1556
    %v1633 = vpop.f32.mrb[0].mxu0
    %v1634 = vadd.f32 0.0, %v1633
    %v1635 = vpop.f32.mrb[0].mxu0
    %v1636 = vadd.f32 0.0, %v1635
    %v1637 = vpop.f32.mrb[0].mxu0
    %v1638 = vpop.f32.mrb[0].mxu0
    %1639 = vdwg.mxu0
    %v1640 = vmul.f32 %v1593, %v644
    %v1641 = vmul.f32 %v1595, %v648
    %v1642 = vmul.f32 %v1634, %v652
    %v1643 = vmul.f32 %v1636, %v656
    %1644 = vst [vmem:[#allocation13] sm:$0xff] %v1640
    %1645 = vst [vmem:[#allocation13 + $0x8] sm:$0xff] %v1641
    %1646 = vst [vmem:[#allocation13 + $0x10] sm:$0xff] %v1642
    %1647 = vst [vmem:[#allocation13 + $0x18] sm:$0xff] %v1643
    %v1648 = vrot.slane %v1640, 4
    %v1649 = vmax.f32 %v1640, %v1648
    %v1650 = vrot.slane %v1649, 2
    %v1651 = vmax.f32 %v1649, %v1650
    %v1652 = vrot.slane %v1651, 1
    %v1653 = vmax.f32 %v1651, %v1652
    %v1654 = vrot.slane %v1641, 4
    %v1655 = vmax.f32 %v1641, %v1654
    %v1656 = vrot.slane %v1655, 2
    %v1657 = vmax.f32 %v1655, %v1656
    %v1658 = vrot.slane %v1657, 1
    %v1659 = vmax.f32 %v1657, %v1658
    %v1660 = vrot.slane %v1642, 4
    %v1661 = vmax.f32 %v1642, %v1660
    %v1662 = vrot.slane %v1661, 2
    %v1663 = vmax.f32 %v1661, %v1662
    %v1664 = vrot.slane %v1663, 1
    %v1665 = vmax.f32 %v1663, %v1664
    %v1666 = vrot.slane %v1643, 4
    %v1667 = vmax.f32 %v1643, %v1666
    %v1668 = vrot.slane %v1667, 2
    %v1669 = vmax.f32 %v1667, %v1668
    %v1670 = vrot.slane %v1669, 1
    %v1671 = vmax.f32 %v1669, %v1670
    %v1672 = vsub.f32 %v1640, %v1653
    %v1673 = vsub.f32 %v1641, %v1659
    %v1674 = vsub.f32 %v1642, %v1665
    %v1675 = vsub.f32 %v1643, %v1671
    %v1676 = vmul.f32 %v1672, 1.442695
    %v1677 = vpow.pop %v1676
    %v1678 = vmul.f32 %v1673, 1.442695
    %v1679 = vpow.pop %v1678
    %v1680 = vmul.f32 %v1674, 1.442695
    %v1681 = vpow.pop %v1680
    %v1682 = vmul.f32 %v1675, 1.442695
    %v1683 = vpow.pop %v1682
    %v1684 = vrot.slane %v1677, 4
    %v1685 = vadd.f32 %v1677, %v1684
    %v1686 = vrot.slane %v1685, 2
    %v1687 = vadd.f32 %v1685, %v1686
    %v1688 = vrot.slane %v1687, 1
    %v1689 = vadd.f32 %v1687, %v1688
    %v1690 = vrot.slane %v1679, 4
    %v1691 = vadd.f32 %v1679, %v1690
    %v1692 = vrot.slane %v1691, 2
    %v1693 = vadd.f32 %v1691, %v1692
    %v1694 = vrot.slane %v1693, 1
    %v1695 = vadd.f32 %v1693, %v1694
    %v1696 = vrot.slane %v1681, 4
    %v1697 = vadd.f32 %v1681, %v1696
    %v1698 = vrot.slane %v1697, 2
    %v1699 = vadd.f32 %v1697, %v1698
    %v1700 = vrot.slane %v1699, 1
    %v1701 = vadd.f32 %v1699, %v1700
    %v1702 = vrot.slane %v1683, 4
    %v1703 = vadd.f32 %v1683, %v1702
    %v1704 = vrot.slane %v1703, 2
    %v1705 = vadd.f32 %v1703, %v1704
    %v1706 = vrot.slane %v1705, 1
    %v1707 = vadd.f32 %v1705, %v1706
    %v1708 = vrcp.pop %v1689
    %v1709 = vrcp.pop %v1695
    %v1710 = vrcp.pop %v1701
    %v1711 = vrcp.pop %v1707
    %v1712 = vmul.f32 %v1677, %v1708
    %v1713 = vmul.f32 %v1679, %v1709
    %v1714 = vmul.f32 %v1681, %v1710
    %v1715 = vmul.f32 %v1683, %v1711
    %v1716 = vmul.f32 %v1712, %v644
    %v1717 = vmul.f32 %v1713, %v648
    %v1718 = vmul.f32 %v1714, %v652
    %v1719 = vmul.f32 %v1715, %v656
    %v1720 = vld [vmem:[%s6] sm:$0xf]
    %v1721 = vld [vmem:[%s6 + $0x4] sm:$0xf]
    %v1722 = vld [vmem:[%s7] sm:$0xf]
    %v1723 = vld [vmem:[%s7 + $0x4] sm:$0xf]
    %s1724 = scalar_lea.vmem %s7, 8
    %v1725 = vld [vmem:[%s1724] sm:$0xf]
    %v1726 = vld [vmem:[%s1724 + $0x4] sm:$0xf]
    %s1727 = scalar_lea.vmem %s7, 16
    %v1728 = vld [vmem:[%s1727] sm:$0xf]
    %v1729 = vld [vmem:[%s1727 + $0x4] sm:$0xf]
    %s1730 = scalar_lea.vmem %s7, 24
    %v1731 = vld [vmem:[%s1730] sm:$0xf]
    %v1732 = vld [vmem:[%s1730 + $0x4] sm:$0xf]
    %v1733 = vld [vmem:[#allocation11] sm:$0xf]
    %v1734 = vld [vmem:[#allocation11 + $0x4] sm:$0xf]
    %s1735 = scalar_lea.vmem [#allocation11], 8
    %v1736 = vld [vmem:[%s1735] sm:$0xf]
    %v1737 = vld [vmem:[%s1735 + $0x4] sm:$0xf]
    %s1738 = scalar_lea.vmem [#allocation11], 16
    %v1739 = vld [vmem:[%s1738] sm:$0xf]
    %v1740 = vld [vmem:[%s1738 + $0x4] sm:$0xf]
    %s1741 = scalar_lea.vmem [#allocation11], 24
    %v1742 = vld [vmem:[%s1741] sm:$0xf]
    %v1743 = vld [vmem:[%s1741 + $0x4] sm:$0xf]
    %v1744 = vld [vmem:[%s9] sm:$0xf]
    %v1745 = vpack.c.bf16 1.0, %v1716
    %v1746 = vpack.c.bf16 1.0, %v1717
    %v1747 = vpack.c.bf16 1.0, %v1718
    %v1748 = vpack.c.bf16 1.0, %v1719
    %v1751 = vunpack.c.l.b16 %v1720
    %v1752 = vunpack.c.l.b16 %v1721
    %v1753 = vpack.c.b16 %v1752, %v1751
    %v1755 = vsel %vm239, %v1753, 0
    %v1758 = vand.u32 %v1745, %v246
    %v1761 = vand.u32 %v1746, %v246
    %v1764 = vand.u32 %v1747, %v246
    %v1767 = vand.u32 %v1748, %v246
    %1769 = vmatprep.subr.bf16.mxu0 %v1761
    %1770 = vmatpush1.bf16.msra.mxu0 %v1758
    %1771 = vmatprep.subr.bf16.mxu0 0
    %1772 = vmatpush1.bf16.msra.mxu0 0
    %1773 = vmatprep.subr.bf16.mxu0 0
    %1774 = vmatpush1.bf16.msra.mxu0 0
    %1775 = vmatprep.subr.bf16.mxu0 0
    %1776 = vmatpush1.bf16.msra.mxu0 0
    %1777 = vmatprep.subr.bf16.mxu0 0
    %1778 = vmatpush1.bf16.msra.mxu0 0
    %1779 = vmatprep.subr.bf16.mxu0 0
    %1780 = vmatpush1.bf16.msra.mxu0 0
    %1781 = vmatprep.subr.bf16.mxu0 0
    %1782 = vmatpush1.bf16.msra.mxu0 0
    %1783 = vmatprep.subr.bf16.mxu0 0
    %1784 = vmatpush1.bf16.msra.mxu0 0
    %1785 = vmatprep.subr.bf16.mxu0 0
    %1786 = vmatpush1.bf16.msra.mxu0 0
    %1787 = vmatprep.subr.bf16.mxu0 0
    %1788 = vmatpush1.bf16.msra.mxu0 0
    %1789 = vmatprep.subr.bf16.mxu0 0
    %1790 = vmatpush1.bf16.msra.mxu0 0
    %1791 = vmatprep.subr.bf16.mxu0 0
    %1792 = vmatpush1.bf16.msra.mxu0 0
    %1793 = vmatprep.subr.bf16.mxu0 0
    %1794 = vmatpush1.bf16.msra.mxu0 0
    %1795 = vmatprep.subr.bf16.mxu0 0
    %1796 = vmatpush1.bf16.msra.mxu0 0
    %1797 = vmatprep.subr.bf16.mxu0 0
    %1798 = vmatpush1.bf16.msra.mxu0 0
    %1799 = vmatprep.subr.bf16.mxu0 0
    %1800 = vmatpush1.bf16.msra.mxu0 0
    %1801 = vmatprep.mubr.bf16.mxu0 0
    %1802 = vmatmul.mubr.bf16.gmra.mrb[0].mxu0 %v1755
    %v1803 = vpop.f32.mrb[0].mxu0
    %v1804 = vadd.f32 0.0, %v1803
    %v1805 = vpop.f32.mrb[0].mxu0
    %v1806 = vadd.f32 0.0, %v1805
    %v1807 = vpop.f32.mrb[0].mxu0
    %v1808 = vadd.f32 0.0, %v1807
    %v1809 = vpop.f32.mrb[0].mxu0
    %v1810 = vadd.f32 0.0, %v1809
    %1811 = vdwg.mxu0
    %1812 = vmatprep.subr.bf16.mxu0 %v1767
    %1813 = vmatpush1.bf16.msra.mxu0 %v1764
    %1814 = vmatprep.subr.bf16.mxu0 0
    %1815 = vmatpush1.bf16.msra.mxu0 0
    %1816 = vmatprep.subr.bf16.mxu0 0
    %1817 = vmatpush1.bf16.msra.mxu0 0
    %1818 = vmatprep.subr.bf16.mxu0 0
    %1819 = vmatpush1.bf16.msra.mxu0 0
    %1820 = vmatprep.subr.bf16.mxu0 0
    %1821 = vmatpush1.bf16.msra.mxu0 0
    %1822 = vmatprep.subr.bf16.mxu0 0
    %1823 = vmatpush1.bf16.msra.mxu0 0
    %1824 = vmatprep.subr.bf16.mxu0 0
    %1825 = vmatpush1.bf16.msra.mxu0 0
    %1826 = vmatprep.subr.bf16.mxu0 0
    %1827 = vmatpush1.bf16.msra.mxu0 0
    %1828 = vmatprep.subr.bf16.mxu0 0
    %1829 = vmatpush1.bf16.msra.mxu0 0
    %1830 = vmatprep.subr.bf16.mxu0 0
    %1831 = vmatpush1.bf16.msra.mxu0 0
    %1832 = vmatprep.subr.bf16.mxu0 0
    %1833 = vmatpush1.bf16.msra.mxu0 0
    %1834 = vmatprep.subr.bf16.mxu0 0
    %1835 = vmatpush1.bf16.msra.mxu0 0
    %1836 = vmatprep.subr.bf16.mxu0 0
    %1837 = vmatpush1.bf16.msra.mxu0 0
    %1838 = vmatprep.subr.bf16.mxu0 0
    %1839 = vmatpush1.bf16.msra.mxu0 0
    %1840 = vmatprep.subr.bf16.mxu0 0
    %1841 = vmatpush1.bf16.msra.mxu0 0
    %1842 = vmatprep.subr.bf16.mxu0 0
    %1843 = vmatpush1.bf16.msra.mxu0 0
    %1844 = vmatprep.mubr.bf16.mxu0 0
    %1845 = vmatmul.mubr.bf16.gmra.mrb[0].mxu0 %v1755
    %v1846 = vpop.f32.mrb[0].mxu0
    %v1847 = vadd.f32 0.0, %v1846
    %v1848 = vpop.f32.mrb[0].mxu0
    %v1849 = vadd.f32 0.0, %v1848
    %v1850 = vpop.f32.mrb[0].mxu0
    %v1851 = vadd.f32 0.0, %v1850
    %v1852 = vpop.f32.mrb[0].mxu0
    %v1853 = vadd.f32 0.0, %v1852
    %1854 = vdwg.mxu0
    %1855 = vrot.lane.b32.xlu0 %v1804, 1
    %v1856 = vpop.permute.xlu0 %1855
    %1857 = vrot.lane.b32.xlu0 %v1808, 1
    %v1858 = vpop.permute.xlu0 %1857
    %1859 = vrot.lane.b32.xlu0 %v1806, 1
    %v1860 = vpop.permute.xlu0 %1859
    %1861 = vrot.lane.b32.xlu0 %v1810, 1
    %v1862 = vpop.permute.xlu0 %1861
    %1863 = vrot.lane.b32.xlu0 %v1847, 1
    %v1864 = vpop.permute.xlu0 %1863
    %1865 = vrot.lane.b32.xlu0 %v1851, 1
    %v1866 = vpop.permute.xlu0 %1865
    %1867 = vrot.lane.b32.xlu0 %v1849, 1
    %v1868 = vpop.permute.xlu0 %1867
    %1869 = vrot.lane.b32.xlu0 %v1853, 1
    %v1870 = vpop.permute.xlu0 %1869
    %v1871 = vsel %vm361, %v1864, %v1868
    %v1872 = vsel %vm361, %v1866, %v1870
    %v1873 = vsel %vm361, %v1860, %v1864
    %v1874 = vsel %vm361, %v1862, %v1866
    %v1875 = vsel %vm361, %v1856, %v1860
    %v1876 = vsel %vm361, %v1858, %v1862
    %v1877 = vsel %vm361, %v1868, %v1856
    %v1878 = vsel %vm361, %v1870, %v1858
    %v1879 = vsel %vm173, %v1877, 0.0
    %v1880 = vsel %vm174, %v1875, 0.0
    %v1881 = vsel %vm175, %v1873, 0.0
    %v1882 = vsel %vm176, %v1871, 0.0
    %v1883 = vsel %vm173, %v1878, 0.0
    %v1884 = vsel %vm174, %v1876, 0.0
    %v1885 = vsel %vm175, %v1874, 0.0
    %v1886 = vsel %vm176, %v1872, 0.0
    %1887 = vrot.lane.b32.xlu0 %v1804, 127
    %v1888 = vpop.permute.xlu0 %1887
    %1889 = vrot.lane.b32.xlu0 %v1808, 127
    %v1890 = vpop.permute.xlu0 %1889
    %1891 = vrot.lane.b32.xlu0 %v1806, 127
    %v1892 = vpop.permute.xlu0 %1891
    %1893 = vrot.lane.b32.xlu0 %v1810, 127
    %v1894 = vpop.permute.xlu0 %1893
    %1895 = vrot.lane.b32.xlu0 %v1847, 127
    %v1896 = vpop.permute.xlu0 %1895
    %1897 = vrot.lane.b32.xlu0 %v1851, 127
    %v1898 = vpop.permute.xlu0 %1897
    %1899 = vrot.lane.b32.xlu0 %v1849, 127
    %v1900 = vpop.permute.xlu0 %1899
    %1901 = vrot.lane.b32.xlu0 %v1853, 127
    %v1902 = vpop.permute.xlu0 %1901
    %v1903 = vsel %vm394, %v1896, %v1900
    %v1904 = vsel %vm394, %v1898, %v1902
    %v1905 = vsel %vm394, %v1892, %v1896
    %v1906 = vsel %vm394, %v1894, %v1898
    %v1907 = vsel %vm394, %v1888, %v1892
    %v1908 = vsel %vm394, %v1890, %v1894
    %v1909 = vsel %vm394, %v1900, %v1888
    %v1910 = vsel %vm394, %v1902, %v1890
    %v1911 = vsel %vm189, %v1907, 0.0
    %v1912 = vsel %vm190, %v1905, 0.0
    %v1913 = vsel %vm191, %v1903, 0.0
    %v1914 = vsel %vm192, %v1909, 0.0
    %v1915 = vsel %vm189, %v1908, 0.0
    %v1916 = vsel %vm190, %v1906, 0.0
    %v1917 = vsel %vm191, %v1904, 0.0
    %v1918 = vsel %vm192, %v1910, 0.0
    %v1919 = vpack.c.bf16 %v1883, %v1879
    %v1920 = vpack.c.bf16 %v1884, %v1880
    %v1921 = vpack.c.bf16 %v1885, %v1881
    %v1922 = vpack.c.bf16 %v1886, %v1882
    %v1923 = vpack.c.bf16 %v1808, %v1804
    %v1924 = vpack.c.bf16 %v1810, %v1806
    %v1925 = vpack.c.bf16 %v1851, %v1847
    %v1926 = vpack.c.bf16 %v1853, %v1849
    %v1927 = vpack.c.bf16 %v1915, %v1911
    %v1928 = vpack.c.bf16 %v1916, %v1912
    %v1929 = vpack.c.bf16 %v1917, %v1913
    %v1930 = vpack.c.bf16 %v1918, %v1914
    %v1933 = vunpack.c.l.b16 %v1722
    %v1934 = vunpack.c.l.b16 %v1723
    %v1935 = vpack.c.b16 %v1934, %v1933
    %v1937 = vsel %vm429, %v1935, 0
    %1939 = vmatprep.subr.bf16.mxu0 %v1920
    %1940 = vmatpush1.bf16.msra.mxu0 %v1919
    %1941 = vmatprep.subr.bf16.mxu0 %v1924
    %1942 = vmatpush1.bf16.msra.mxu0 %v1923
    %1943 = vmatprep.subr.bf16.mxu0 %v1928
    %1944 = vmatpush1.bf16.msra.mxu0 %v1927
    %1945 = vmatprep.subr.bf16.mxu0 %v437
    %1946 = vmatpush1.bf16.msra.mxu0 %v437
    %1947 = vmatprep.subr.bf16.mxu0 0
    %1948 = vmatpush1.bf16.msra.mxu0 0
    %1949 = vmatprep.subr.bf16.mxu0 0
    %1950 = vmatpush1.bf16.msra.mxu0 0
    %1951 = vmatprep.subr.bf16.mxu0 0
    %1952 = vmatpush1.bf16.msra.mxu0 0
    %1953 = vmatprep.subr.bf16.mxu0 0
    %1954 = vmatpush1.bf16.msra.mxu0 0
    %1955 = vmatprep.subr.bf16.mxu0 0
    %1956 = vmatpush1.bf16.msra.mxu0 0
    %1957 = vmatprep.subr.bf16.mxu0 0
    %1958 = vmatpush1.bf16.msra.mxu0 0
    %1959 = vmatprep.subr.bf16.mxu0 0
    %1960 = vmatpush1.bf16.msra.mxu0 0
    %1961 = vmatprep.subr.bf16.mxu0 0
    %1962 = vmatpush1.bf16.msra.mxu0 0
    %1963 = vmatprep.subr.bf16.mxu0 0
    %1964 = vmatpush1.bf16.msra.mxu0 0
    %1965 = vmatprep.subr.bf16.mxu0 0
    %1966 = vmatpush1.bf16.msra.mxu0 0
    %1967 = vmatprep.subr.bf16.mxu0 0
    %1968 = vmatpush1.bf16.msra.mxu0 0
    %1969 = vmatprep.subr.bf16.mxu0 0
    %1970 = vmatpush1.bf16.msra.mxu0 0
    %1971 = vmatprep.mubr.bf16.mxu0 0
    %1972 = vmatmul.mubr.bf16.gmra.mrb[0].mxu0 %v1937
    %v1973 = vpop.f32.mrb[0].mxu0
    %v1974 = vadd.f32 0.0, %v1973
    %v1975 = vpop.f32.mrb[0].mxu0
    %v1976 = vadd.f32 0.0, %v1975
    %v1977 = vpop.f32.mrb[0].mxu0
    %v1978 = vadd.f32 0.0, %v1977
    %v1979 = vpop.f32.mrb[0].mxu0
    %v1980 = vadd.f32 0.0, %v1979
    %1981 = vdwg.mxu0
    %1982 = vmatprep.subr.bf16.mxu0 %v1922
    %1983 = vmatpush1.bf16.msra.mxu0 %v1921
    %1984 = vmatprep.subr.bf16.mxu0 %v1926
    %1985 = vmatpush1.bf16.msra.mxu0 %v1925
    %1986 = vmatprep.subr.bf16.mxu0 %v1930
    %1987 = vmatpush1.bf16.msra.mxu0 %v1929
    %1988 = vmatprep.subr.bf16.mxu0 %v437
    %1989 = vmatpush1.bf16.msra.mxu0 %v437
    %1990 = vmatprep.subr.bf16.mxu0 0
    %1991 = vmatpush1.bf16.msra.mxu0 0
    %1992 = vmatprep.subr.bf16.mxu0 0
    %1993 = vmatpush1.bf16.msra.mxu0 0
    %1994 = vmatprep.subr.bf16.mxu0 0
    %1995 = vmatpush1.bf16.msra.mxu0 0
    %1996 = vmatprep.subr.bf16.mxu0 0
    %1997 = vmatpush1.bf16.msra.mxu0 0
    %1998 = vmatprep.subr.bf16.mxu0 0
    %1999 = vmatpush1.bf16.msra.mxu0 0
    %2000 = vmatprep.subr.bf16.mxu0 0
    %2001 = vmatpush1.bf16.msra.mxu0 0
    %2002 = vmatprep.subr.bf16.mxu0 0
    %2003 = vmatpush1.bf16.msra.mxu0 0
    %2004 = vmatprep.subr.bf16.mxu0 0
    %2005 = vmatpush1.bf16.msra.mxu0 0
    %2006 = vmatprep.subr.bf16.mxu0 0
    %2007 = vmatpush1.bf16.msra.mxu0 0
    %2008 = vmatprep.subr.bf16.mxu0 0
    %2009 = vmatpush1.bf16.msra.mxu0 0
    %2010 = vmatprep.subr.bf16.mxu0 0
    %2011 = vmatpush1.bf16.msra.mxu0 0
    %2012 = vmatprep.subr.bf16.mxu0 0
    %2013 = vmatpush1.bf16.msra.mxu0 0
    %2014 = vmatprep.mubr.bf16.mxu0 0
    %2015 = vmatmul.mubr.bf16.gmra.mrb[0].mxu0 %v1937
    %v2016 = vpop.f32.mrb[0].mxu0
    %v2017 = vadd.f32 0.0, %v2016
    %v2018 = vpop.f32.mrb[0].mxu0
    %v2019 = vadd.f32 0.0, %v2018
    %v2020 = vpop.f32.mrb[0].mxu0
    %v2021 = vadd.f32 0.0, %v2020
    %v2022 = vpop.f32.mrb[0].mxu0
    %v2023 = vadd.f32 0.0, %v2022
    %2024 = vdwg.mxu0
    %v2025 = vmax.f32 %v1974, 0.0
    %v2026 = vmax.f32 %v1976, 0.0
    %v2027 = vmax.f32 %v2017, 0.0
    %v2028 = vmax.f32 %v2019, 0.0
    %v2029 = vmax.f32 %v1978, 0.0
    %v2030 = vmax.f32 %v1980, 0.0
    %v2031 = vmax.f32 %v2021, 0.0
    %v2032 = vmax.f32 %v2023, 0.0
    %v2033 = vpack.c.bf16 %v2029, %v2025
    %v2034 = vpack.c.bf16 %v2030, %v2026
    %v2035 = vpack.c.bf16 %v2031, %v2027
    %v2036 = vpack.c.bf16 %v2032, %v2028
    %v2039 = vunpack.c.l.b16 %v1733
    %v2040 = vunpack.c.l.b16 %v1734
    %v2041 = vpack.c.b16 %v2040, %v2039
    %v2043 = vsel %vm542, %v2041, 0
    %2045 = vmatprep.subr.bf16.mxu0 %v2034
    %2046 = vmatpush1.bf16.msra.mxu0 %v2033
    %2047 = vmatprep.subr.bf16.mxu0 %v437
    %2048 = vmatpush1.bf16.msra.mxu0 %v437
    %2049 = vmatprep.subr.bf16.mxu0 0
    %2050 = vmatpush1.bf16.msra.mxu0 0
    %2051 = vmatprep.subr.bf16.mxu0 0
    %2052 = vmatpush1.bf16.msra.mxu0 0
    %2053 = vmatprep.subr.bf16.mxu0 0
    %2054 = vmatpush1.bf16.msra.mxu0 0
    %2055 = vmatprep.subr.bf16.mxu0 0
    %2056 = vmatpush1.bf16.msra.mxu0 0
    %2057 = vmatprep.subr.bf16.mxu0 0
    %2058 = vmatpush1.bf16.msra.mxu0 0
    %2059 = vmatprep.subr.bf16.mxu0 0
    %2060 = vmatpush1.bf16.msra.mxu0 0
    %2061 = vmatprep.subr.bf16.mxu0 0
    %2062 = vmatpush1.bf16.msra.mxu0 0
    %2063 = vmatprep.subr.bf16.mxu0 0
    %2064 = vmatpush1.bf16.msra.mxu0 0
    %2065 = vmatprep.subr.bf16.mxu0 0
    %2066 = vmatpush1.bf16.msra.mxu0 0
    %2067 = vmatprep.subr.bf16.mxu0 0
    %2068 = vmatpush1.bf16.msra.mxu0 0
    %2069 = vmatprep.subr.bf16.mxu0 0
    %2070 = vmatpush1.bf16.msra.mxu0 0
    %2071 = vmatprep.subr.bf16.mxu0 0
    %2072 = vmatpush1.bf16.msra.mxu0 0
    %2073 = vmatprep.subr.bf16.mxu0 0
    %2074 = vmatpush1.bf16.msra.mxu0 0
    %2075 = vmatprep.subr.bf16.mxu0 0
    %2076 = vmatpush1.bf16.msra.mxu0 0
    %2077 = vmatprep.mubr.bf16.mxu0 0
    %2078 = vmatmul.mubr.bf16.gmra.mrb[0].mxu0 %v2043
    %v2079 = vpop.f32.mrb[0].mxu0
    %v2080 = vadd.f32 0.0, %v2079
    %v2081 = vpop.f32.mrb[0].mxu0
    %v2082 = vadd.f32 0.0, %v2081
    %v2083 = vpop.f32.mrb[0].mxu0
    %v2084 = vadd.f32 0.0, %v2083
    %v2085 = vpop.f32.mrb[0].mxu0
    %v2086 = vadd.f32 0.0, %v2085
    %2087 = vdwg.mxu0
    %2088 = vmatprep.subr.bf16.mxu0 %v2036
    %2089 = vmatpush1.bf16.msra.mxu0 %v2035
    %2090 = vmatprep.subr.bf16.mxu0 %v437
    %2091 = vmatpush1.bf16.msra.mxu0 %v437
    %2092 = vmatprep.subr.bf16.mxu0 0
    %2093 = vmatpush1.bf16.msra.mxu0 0
    %2094 = vmatprep.subr.bf16.mxu0 0
    %2095 = vmatpush1.bf16.msra.mxu0 0
    %2096 = vmatprep.subr.bf16.mxu0 0
    %2097 = vmatpush1.bf16.msra.mxu0 0
    %2098 = vmatprep.subr.bf16.mxu0 0
    %2099 = vmatpush1.bf16.msra.mxu0 0
    %2100 = vmatprep.subr.bf16.mxu0 0
    %2101 = vmatpush1.bf16.msra.mxu0 0
    %2102 = vmatprep.subr.bf16.mxu0 0
    %2103 = vmatpush1.bf16.msra.mxu0 0
    %2104 = vmatprep.subr.bf16.mxu0 0
    %2105 = vmatpush1.bf16.msra.mxu0 0
    %2106 = vmatprep.subr.bf16.mxu0 0
    %2107 = vmatpush1.bf16.msra.mxu0 0
    %2108 = vmatprep.subr.bf16.mxu0 0
    %2109 = vmatpush1.bf16.msra.mxu0 0
    %2110 = vmatprep.subr.bf16.mxu0 0
    %2111 = vmatpush1.bf16.msra.mxu0 0
    %2112 = vmatprep.subr.bf16.mxu0 0
    %2113 = vmatpush1.bf16.msra.mxu0 0
    %2114 = vmatprep.subr.bf16.mxu0 0
    %2115 = vmatpush1.bf16.msra.mxu0 0
    %2116 = vmatprep.subr.bf16.mxu0 0
    %2117 = vmatpush1.bf16.msra.mxu0 0
    %2118 = vmatprep.subr.bf16.mxu0 0
    %2119 = vmatpush1.bf16.msra.mxu0 0
    %2120 = vmatprep.mubr.bf16.mxu0 0
    %2121 = vmatmul.mubr.bf16.gmra.mrb[0].mxu0 %v2043
    %v2122 = vpop.f32.mrb[0].mxu0
    %v2123 = vadd.f32 0.0, %v2122
    %v2124 = vpop.f32.mrb[0].mxu0
    %v2125 = vadd.f32 0.0, %v2124
    %v2126 = vpop.f32.mrb[0].mxu0
    %v2127 = vadd.f32 0.0, %v2126
    %v2128 = vpop.f32.mrb[0].mxu0
    %v2129 = vadd.f32 0.0, %v2128
    %2130 = vdwg.mxu0
    %v2131 = vadd.f32 %v1804, %v2080
    %v2132 = vadd.f32 %v1806, %v2082
    %v2133 = vadd.f32 %v1847, %v2123
    %v2134 = vadd.f32 %v1849, %v2125
    %v2135 = vadd.f32 %v1808, %v2084
    %v2136 = vadd.f32 %v1810, %v2086
    %v2137 = vadd.f32 %v1851, %v2127
    %v2138 = vadd.f32 %v1853, %v2129
    %v2139 = vmul.f32 %v2131, %v644
    %v2140 = vmul.f32 %v2132, %v648
    %v2141 = vmul.f32 %v2133, %v652
    %v2142 = vmul.f32 %v2134, %v656
    %v2143 = vmul.f32 %v2135, %v644
    %v2144 = vmul.f32 %v2136, %v648
    %v2145 = vmul.f32 %v2137, %v652
    %v2146 = vmul.f32 %v2138, %v656
    %2147 = vrot.lane.b32.xlu0 %v2139, 2
    %v2148 = vpop.permute.xlu0 %2147
    %2149 = vrot.lane.b32.xlu0 %v2143, 2
    %v2150 = vpop.permute.xlu0 %2149
    %2151 = vrot.lane.b32.xlu0 %v2140, 2
    %v2152 = vpop.permute.xlu0 %2151
    %2153 = vrot.lane.b32.xlu0 %v2144, 2
    %v2154 = vpop.permute.xlu0 %2153
    %2155 = vrot.lane.b32.xlu0 %v2141, 2
    %v2156 = vpop.permute.xlu0 %2155
    %2157 = vrot.lane.b32.xlu0 %v2145, 2
    %v2158 = vpop.permute.xlu0 %2157
    %2159 = vrot.lane.b32.xlu0 %v2142, 2
    %v2160 = vpop.permute.xlu0 %2159
    %2161 = vrot.lane.b32.xlu0 %v2146, 2
    %v2162 = vpop.permute.xlu0 %2161
    %v2163 = vsel %vm685, %v2156, %v2160
    %v2164 = vsel %vm685, %v2158, %v2162
    %v2165 = vsel %vm685, %v2152, %v2156
    %v2166 = vsel %vm685, %v2154, %v2158
    %v2167 = vsel %vm685, %v2148, %v2152
    %v2168 = vsel %vm685, %v2150, %v2154
    %v2169 = vsel %vm685, %v2160, %v2148
    %v2170 = vsel %vm685, %v2162, %v2150
    %v2171 = vsel %vm177, %v2169, 0.0
    %v2172 = vsel %vm178, %v2167, 0.0
    %v2173 = vsel %vm179, %v2165, 0.0
    %v2174 = vsel %vm180, %v2163, 0.0
    %v2175 = vsel %vm177, %v2170, 0.0
    %v2176 = vsel %vm178, %v2168, 0.0
    %v2177 = vsel %vm179, %v2166, 0.0
    %v2178 = vsel %vm180, %v2164, 0.0
    %2179 = vrot.lane.b32.xlu0 %v2139, 126
    %v2180 = vpop.permute.xlu0 %2179
    %2181 = vrot.lane.b32.xlu0 %v2143, 126
    %v2182 = vpop.permute.xlu0 %2181
    %2183 = vrot.lane.b32.xlu0 %v2140, 126
    %v2184 = vpop.permute.xlu0 %2183
    %2185 = vrot.lane.b32.xlu0 %v2144, 126
    %v2186 = vpop.permute.xlu0 %2185
    %2187 = vrot.lane.b32.xlu0 %v2141, 126
    %v2188 = vpop.permute.xlu0 %2187
    %2189 = vrot.lane.b32.xlu0 %v2145, 126
    %v2190 = vpop.permute.xlu0 %2189
    %2191 = vrot.lane.b32.xlu0 %v2142, 126
    %v2192 = vpop.permute.xlu0 %2191
    %2193 = vrot.lane.b32.xlu0 %v2146, 126
    %v2194 = vpop.permute.xlu0 %2193
    %v2195 = vsel %vm718, %v2188, %v2192
    %v2196 = vsel %vm718, %v2190, %v2194
    %v2197 = vsel %vm718, %v2184, %v2188
    %v2198 = vsel %vm718, %v2186, %v2190
    %v2199 = vsel %vm718, %v2180, %v2184
    %v2200 = vsel %vm718, %v2182, %v2186
    %v2201 = vsel %vm718, %v2192, %v2180
    %v2202 = vsel %vm718, %v2194, %v2182
    %v2203 = vsel %vm193, %v2199, 0.0
    %v2204 = vsel %vm194, %v2197, 0.0
    %v2205 = vsel %vm195, %v2195, 0.0
    %v2206 = vsel %vm196, %v2201, 0.0
    %v2207 = vsel %vm193, %v2200, 0.0
    %v2208 = vsel %vm194, %v2198, 0.0
    %v2209 = vsel %vm195, %v2196, 0.0
    %v2210 = vsel %vm196, %v2202, 0.0
    %v2211 = vpack.c.bf16 %v2175, %v2171
    %v2212 = vpack.c.bf16 %v2176, %v2172
    %v2213 = vpack.c.bf16 %v2177, %v2173
    %v2214 = vpack.c.bf16 %v2178, %v2174
    %v2215 = vpack.c.bf16 %v2143, %v2139
    %v2216 = vpack.c.bf16 %v2144, %v2140
    %v2217 = vpack.c.bf16 %v2145, %v2141
    %v2218 = vpack.c.bf16 %v2146, %v2142
    %v2219 = vpack.c.bf16 %v2207, %v2203
    %v2220 = vpack.c.bf16 %v2208, %v2204
    %v2221 = vpack.c.bf16 %v2209, %v2205
    %v2222 = vpack.c.bf16 %v2210, %v2206
    %v2225 = vunpack.c.l.b16 %v1725
    %v2226 = vunpack.c.l.b16 %v1726
    %v2227 = vpack.c.b16 %v2226, %v2225
    %v2229 = vsel %vm429, %v2227, 0
    %2231 = vmatprep.subr.bf16.mxu0 %v2212
    %2232 = vmatpush1.bf16.msra.mxu0 %v2211
    %2233 = vmatprep.subr.bf16.mxu0 %v2216
    %2234 = vmatpush1.bf16.msra.mxu0 %v2215
    %2235 = vmatprep.subr.bf16.mxu0 %v2220
    %2236 = vmatpush1.bf16.msra.mxu0 %v2219
    %2237 = vmatprep.subr.bf16.mxu0 %v437
    %2238 = vmatpush1.bf16.msra.mxu0 %v437
    %2239 = vmatprep.subr.bf16.mxu0 0
    %2240 = vmatpush1.bf16.msra.mxu0 0
    %2241 = vmatprep.subr.bf16.mxu0 0
    %2242 = vmatpush1.bf16.msra.mxu0 0
    %2243 = vmatprep.subr.bf16.mxu0 0
    %2244 = vmatpush1.bf16.msra.mxu0 0
    %2245 = vmatprep.subr.bf16.mxu0 0
    %2246 = vmatpush1.bf16.msra.mxu0 0
    %2247 = vmatprep.subr.bf16.mxu0 0
    %2248 = vmatpush1.bf16.msra.mxu0 0
    %2249 = vmatprep.subr.bf16.mxu0 0
    %2250 = vmatpush1.bf16.msra.mxu0 0
    %2251 = vmatprep.subr.bf16.mxu0 0
    %2252 = vmatpush1.bf16.msra.mxu0 0
    %2253 = vmatprep.subr.bf16.mxu0 0
    %2254 = vmatpush1.bf16.msra.mxu0 0
    %2255 = vmatprep.subr.bf16.mxu0 0
    %2256 = vmatpush1.bf16.msra.mxu0 0
    %2257 = vmatprep.subr.bf16.mxu0 0
    %2258 = vmatpush1.bf16.msra.mxu0 0
    %2259 = vmatprep.subr.bf16.mxu0 0
    %2260 = vmatpush1.bf16.msra.mxu0 0
    %2261 = vmatprep.subr.bf16.mxu0 0
    %2262 = vmatpush1.bf16.msra.mxu0 0
    %2263 = vmatprep.mubr.bf16.mxu0 0
    %2264 = vmatmul.mubr.bf16.gmra.mrb[0].mxu0 %v2229
    %v2265 = vpop.f32.mrb[0].mxu0
    %v2266 = vadd.f32 0.0, %v2265
    %v2267 = vpop.f32.mrb[0].mxu0
    %v2268 = vadd.f32 0.0, %v2267
    %v2269 = vpop.f32.mrb[0].mxu0
    %v2270 = vadd.f32 0.0, %v2269
    %v2271 = vpop.f32.mrb[0].mxu0
    %v2272 = vadd.f32 0.0, %v2271
    %2273 = vdwg.mxu0
    %2274 = vmatprep.subr.bf16.mxu0 %v2214
    %2275 = vmatpush1.bf16.msra.mxu0 %v2213
    %2276 = vmatprep.subr.bf16.mxu0 %v2218
    %2277 = vmatpush1.bf16.msra.mxu0 %v2217
    %2278 = vmatprep.subr.bf16.mxu0 %v2222
    %2279 = vmatpush1.bf16.msra.mxu0 %v2221
    %2280 = vmatprep.subr.bf16.mxu0 %v437
    %2281 = vmatpush1.bf16.msra.mxu0 %v437
    %2282 = vmatprep.subr.bf16.mxu0 0
    %2283 = vmatpush1.bf16.msra.mxu0 0
    %2284 = vmatprep.subr.bf16.mxu0 0
    %2285 = vmatpush1.bf16.msra.mxu0 0
    %2286 = vmatprep.subr.bf16.mxu0 0
    %2287 = vmatpush1.bf16.msra.mxu0 0
    %2288 = vmatprep.subr.bf16.mxu0 0
    %2289 = vmatpush1.bf16.msra.mxu0 0
    %2290 = vmatprep.subr.bf16.mxu0 0
    %2291 = vmatpush1.bf16.msra.mxu0 0
    %2292 = vmatprep.subr.bf16.mxu0 0
    %2293 = vmatpush1.bf16.msra.mxu0 0
    %2294 = vmatprep.subr.bf16.mxu0 0
    %2295 = vmatpush1.bf16.msra.mxu0 0
    %2296 = vmatprep.subr.bf16.mxu0 0
    %2297 = vmatpush1.bf16.msra.mxu0 0
    %2298 = vmatprep.subr.bf16.mxu0 0
    %2299 = vmatpush1.bf16.msra.mxu0 0
    %2300 = vmatprep.subr.bf16.mxu0 0
    %2301 = vmatpush1.bf16.msra.mxu0 0
    %2302 = vmatprep.subr.bf16.mxu0 0
    %2303 = vmatpush1.bf16.msra.mxu0 0
    %2304 = vmatprep.subr.bf16.mxu0 0
    %2305 = vmatpush1.bf16.msra.mxu0 0
    %2306 = vmatprep.mubr.bf16.mxu0 0
    %2307 = vmatmul.mubr.bf16.gmra.mrb[0].mxu0 %v2229
    %v2308 = vpop.f32.mrb[0].mxu0
    %v2309 = vadd.f32 0.0, %v2308
    %v2310 = vpop.f32.mrb[0].mxu0
    %v2311 = vadd.f32 0.0, %v2310
    %v2312 = vpop.f32.mrb[0].mxu0
    %v2313 = vadd.f32 0.0, %v2312
    %v2314 = vpop.f32.mrb[0].mxu0
    %v2315 = vadd.f32 0.0, %v2314
    %2316 = vdwg.mxu0
    %v2317 = vmax.f32 %v2266, 0.0
    %v2318 = vmax.f32 %v2268, 0.0
    %v2319 = vmax.f32 %v2309, 0.0
    %v2320 = vmax.f32 %v2311, 0.0
    %v2321 = vmax.f32 %v2270, 0.0
    %v2322 = vmax.f32 %v2272, 0.0
    %v2323 = vmax.f32 %v2313, 0.0
    %v2324 = vmax.f32 %v2315, 0.0
    %v2325 = vpack.c.bf16 %v2321, %v2317
    %v2326 = vpack.c.bf16 %v2322, %v2318
    %v2327 = vpack.c.bf16 %v2323, %v2319
    %v2328 = vpack.c.bf16 %v2324, %v2320
    %v2331 = vunpack.c.l.b16 %v1736
    %v2332 = vunpack.c.l.b16 %v1737
    %v2333 = vpack.c.b16 %v2332, %v2331
    %v2335 = vsel %vm542, %v2333, 0
    %2337 = vmatprep.subr.bf16.mxu0 %v2326
    %2338 = vmatpush1.bf16.msra.mxu0 %v2325
    %2339 = vmatprep.subr.bf16.mxu0 %v437
    %2340 = vmatpush1.bf16.msra.mxu0 %v437
    %2341 = vmatprep.subr.bf16.mxu0 0
    %2342 = vmatpush1.bf16.msra.mxu0 0
    %2343 = vmatprep.subr.bf16.mxu0 0
    %2344 = vmatpush1.bf16.msra.mxu0 0
    %2345 = vmatprep.subr.bf16.mxu0 0
    %2346 = vmatpush1.bf16.msra.mxu0 0
    %2347 = vmatprep.subr.bf16.mxu0 0
    %2348 = vmatpush1.bf16.msra.mxu0 0
    %2349 = vmatprep.subr.bf16.mxu0 0
    %2350 = vmatpush1.bf16.msra.mxu0 0
    %2351 = vmatprep.subr.bf16.mxu0 0
    %2352 = vmatpush1.bf16.msra.mxu0 0
    %2353 = vmatprep.subr.bf16.mxu0 0
    %2354 = vmatpush1.bf16.msra.mxu0 0
    %2355 = vmatprep.subr.bf16.mxu0 0
    %2356 = vmatpush1.bf16.msra.mxu0 0
    %2357 = vmatprep.subr.bf16.mxu0 0
    %2358 = vmatpush1.bf16.msra.mxu0 0
    %2359 = vmatprep.subr.bf16.mxu0 0
    %2360 = vmatpush1.bf16.msra.mxu0 0
    %2361 = vmatprep.subr.bf16.mxu0 0
    %2362 = vmatpush1.bf16.msra.mxu0 0
    %2363 = vmatprep.subr.bf16.mxu0 0
    %2364 = vmatpush1.bf16.msra.mxu0 0
    %2365 = vmatprep.subr.bf16.mxu0 0
    %2366 = vmatpush1.bf16.msra.mxu0 0
    %2367 = vmatprep.subr.bf16.mxu0 0
    %2368 = vmatpush1.bf16.msra.mxu0 0
    %2369 = vmatprep.mubr.bf16.mxu0 0
    %2370 = vmatmul.mubr.bf16.gmra.mrb[0].mxu0 %v2335
    %v2371 = vpop.f32.mrb[0].mxu0
    %v2372 = vadd.f32 0.0, %v2371
    %v2373 = vpop.f32.mrb[0].mxu0
    %v2374 = vadd.f32 0.0, %v2373
    %v2375 = vpop.f32.mrb[0].mxu0
    %v2376 = vadd.f32 0.0, %v2375
    %v2377 = vpop.f32.mrb[0].mxu0
    %v2378 = vadd.f32 0.0, %v2377
    %2379 = vdwg.mxu0
    %2380 = vmatprep.subr.bf16.mxu0 %v2328
    %2381 = vmatpush1.bf16.msra.mxu0 %v2327
    %2382 = vmatprep.subr.bf16.mxu0 %v437
    %2383 = vmatpush1.bf16.msra.mxu0 %v437
    %2384 = vmatprep.subr.bf16.mxu0 0
    %2385 = vmatpush1.bf16.msra.mxu0 0
    %2386 = vmatprep.subr.bf16.mxu0 0
    %2387 = vmatpush1.bf16.msra.mxu0 0
    %2388 = vmatprep.subr.bf16.mxu0 0
    %2389 = vmatpush1.bf16.msra.mxu0 0
    %2390 = vmatprep.subr.bf16.mxu0 0
    %2391 = vmatpush1.bf16.msra.mxu0 0
    %2392 = vmatprep.subr.bf16.mxu0 0
    %2393 = vmatpush1.bf16.msra.mxu0 0
    %2394 = vmatprep.subr.bf16.mxu0 0
    %2395 = vmatpush1.bf16.msra.mxu0 0
    %2396 = vmatprep.subr.bf16.mxu0 0
    %2397 = vmatpush1.bf16.msra.mxu0 0
    %2398 = vmatprep.subr.bf16.mxu0 0
    %2399 = vmatpush1.bf16.msra.mxu0 0
    %2400 = vmatprep.subr.bf16.mxu0 0
    %2401 = vmatpush1.bf16.msra.mxu0 0
    %2402 = vmatprep.subr.bf16.mxu0 0
    %2403 = vmatpush1.bf16.msra.mxu0 0
    %2404 = vmatprep.subr.bf16.mxu0 0
    %2405 = vmatpush1.bf16.msra.mxu0 0
    %2406 = vmatprep.subr.bf16.mxu0 0
    %2407 = vmatpush1.bf16.msra.mxu0 0
    %2408 = vmatprep.subr.bf16.mxu0 0
    %2409 = vmatpush1.bf16.msra.mxu0 0
    %2410 = vmatprep.subr.bf16.mxu0 0
    %2411 = vmatpush1.bf16.msra.mxu0 0
    %2412 = vmatprep.mubr.bf16.mxu0 0
    %2413 = vmatmul.mubr.bf16.gmra.mrb[0].mxu0 %v2335
    %v2414 = vpop.f32.mrb[0].mxu0
    %v2415 = vadd.f32 0.0, %v2414
    %v2416 = vpop.f32.mrb[0].mxu0
    %v2417 = vadd.f32 0.0, %v2416
    %v2418 = vpop.f32.mrb[0].mxu0
    %v2419 = vadd.f32 0.0, %v2418
    %v2420 = vpop.f32.mrb[0].mxu0
    %v2421 = vadd.f32 0.0, %v2420
    %2422 = vdwg.mxu0
    %v2423 = vadd.f32 %v2139, %v2372
    %v2424 = vadd.f32 %v2140, %v2374
    %v2425 = vadd.f32 %v2141, %v2415
    %v2426 = vadd.f32 %v2142, %v2417
    %v2427 = vadd.f32 %v2143, %v2376
    %v2428 = vadd.f32 %v2144, %v2378
    %v2429 = vadd.f32 %v2145, %v2419
    %v2430 = vadd.f32 %v2146, %v2421
    %v2431 = vmul.f32 %v2423, %v644
    %v2432 = vmul.f32 %v2424, %v648
    %v2433 = vmul.f32 %v2425, %v652
    %v2434 = vmul.f32 %v2426, %v656
    %v2435 = vmul.f32 %v2427, %v644
    %v2436 = vmul.f32 %v2428, %v648
    %v2437 = vmul.f32 %v2429, %v652
    %v2438 = vmul.f32 %v2430, %v656
    %2439 = vrot.lane.b32.xlu0 %v2431, 4
    %v2440 = vpop.permute.xlu0 %2439
    %2441 = vrot.lane.b32.xlu0 %v2435, 4
    %v2442 = vpop.permute.xlu0 %2441
    %2443 = vrot.lane.b32.xlu0 %v2432, 4
    %v2444 = vpop.permute.xlu0 %2443
    %2445 = vrot.lane.b32.xlu0 %v2436, 4
    %v2446 = vpop.permute.xlu0 %2445
    %2447 = vrot.lane.b32.xlu0 %v2433, 4
    %v2448 = vpop.permute.xlu0 %2447
    %2449 = vrot.lane.b32.xlu0 %v2437, 4
    %v2450 = vpop.permute.xlu0 %2449
    %2451 = vrot.lane.b32.xlu0 %v2434, 4
    %v2452 = vpop.permute.xlu0 %2451
    %2453 = vrot.lane.b32.xlu0 %v2438, 4
    %v2454 = vpop.permute.xlu0 %2453
    %v2455 = vsel %vm979, %v2448, %v2452
    %v2456 = vsel %vm979, %v2450, %v2454
    %v2457 = vsel %vm979, %v2444, %v2448
    %v2458 = vsel %vm979, %v2446, %v2450
    %v2459 = vsel %vm979, %v2440, %v2444
    %v2460 = vsel %vm979, %v2442, %v2446
    %v2461 = vsel %vm979, %v2452, %v2440
    %v2462 = vsel %vm979, %v2454, %v2442
    %v2463 = vsel %vm181, %v2461, 0.0
    %v2464 = vsel %vm182, %v2459, 0.0
    %v2465 = vsel %vm183, %v2457, 0.0
    %v2466 = vsel %vm184, %v2455, 0.0
    %v2467 = vsel %vm181, %v2462, 0.0
    %v2468 = vsel %vm182, %v2460, 0.0
    %v2469 = vsel %vm183, %v2458, 0.0
    %v2470 = vsel %vm184, %v2456, 0.0
    %2471 = vrot.lane.b32.xlu0 %v2431, 124
    %v2472 = vpop.permute.xlu0 %2471
    %2473 = vrot.lane.b32.xlu0 %v2435, 124
    %v2474 = vpop.permute.xlu0 %2473
    %2475 = vrot.lane.b32.xlu0 %v2432, 124
    %v2476 = vpop.permute.xlu0 %2475
    %2477 = vrot.lane.b32.xlu0 %v2436, 124
    %v2478 = vpop.permute.xlu0 %2477
    %2479 = vrot.lane.b32.xlu0 %v2433, 124
    %v2480 = vpop.permute.xlu0 %2479
    %2481 = vrot.lane.b32.xlu0 %v2437, 124
    %v2482 = vpop.permute.xlu0 %2481
    %2483 = vrot.lane.b32.xlu0 %v2434, 124
    %v2484 = vpop.permute.xlu0 %2483
    %2485 = vrot.lane.b32.xlu0 %v2438, 124
    %v2486 = vpop.permute.xlu0 %2485
    %v2487 = vsel %vm1012, %v2480, %v2484
    %v2488 = vsel %vm1012, %v2482, %v2486
    %v2489 = vsel %vm1012, %v2476, %v2480
    %v2490 = vsel %vm1012, %v2478, %v2482
    %v2491 = vsel %vm1012, %v2472, %v2476
    %v2492 = vsel %vm1012, %v2474, %v2478
    %v2493 = vsel %vm1012, %v2484, %v2472
    %v2494 = vsel %vm1012, %v2486, %v2474
    %v2495 = vsel %vm197, %v2491, 0.0
    %v2496 = vsel %vm198, %v2489, 0.0
    %v2497 = vsel %vm199, %v2487, 0.0
    %v2498 = vsel %vm200, %v2493, 0.0
    %v2499 = vsel %vm197, %v2492, 0.0
    %v2500 = vsel %vm198, %v2490, 0.0
    %v2501 = vsel %vm199, %v2488, 0.0
    %v2502 = vsel %vm200, %v2494, 0.0
    %v2503 = vpack.c.bf16 %v2467, %v2463
    %v2504 = vpack.c.bf16 %v2468, %v2464
    %v2505 = vpack.c.bf16 %v2469, %v2465
    %v2506 = vpack.c.bf16 %v2470, %v2466
    %v2507 = vpack.c.bf16 %v2435, %v2431
    %v2508 = vpack.c.bf16 %v2436, %v2432
    %v2509 = vpack.c.bf16 %v2437, %v2433
    %v2510 = vpack.c.bf16 %v2438, %v2434
    %v2511 = vpack.c.bf16 %v2499, %v2495
    %v2512 = vpack.c.bf16 %v2500, %v2496
    %v2513 = vpack.c.bf16 %v2501, %v2497
    %v2514 = vpack.c.bf16 %v2502, %v2498
    %v2517 = vunpack.c.l.b16 %v1728
    %v2518 = vunpack.c.l.b16 %v1729
    %v2519 = vpack.c.b16 %v2518, %v2517
    %v2521 = vsel %vm429, %v2519, 0
    %2523 = vmatprep.subr.bf16.mxu0 %v2504
    %2524 = vmatpush1.bf16.msra.mxu0 %v2503
    %2525 = vmatprep.subr.bf16.mxu0 %v2508
    %2526 = vmatpush1.bf16.msra.mxu0 %v2507
    %2527 = vmatprep.subr.bf16.mxu0 %v2512
    %2528 = vmatpush1.bf16.msra.mxu0 %v2511
    %2529 = vmatprep.subr.bf16.mxu0 %v437
    %2530 = vmatpush1.bf16.msra.mxu0 %v437
    %2531 = vmatprep.subr.bf16.mxu0 0
    %2532 = vmatpush1.bf16.msra.mxu0 0
    %2533 = vmatprep.subr.bf16.mxu0 0
    %2534 = vmatpush1.bf16.msra.mxu0 0
    %2535 = vmatprep.subr.bf16.mxu0 0
    %2536 = vmatpush1.bf16.msra.mxu0 0
    %2537 = vmatprep.subr.bf16.mxu0 0
    %2538 = vmatpush1.bf16.msra.mxu0 0
    %2539 = vmatprep.subr.bf16.mxu0 0
    %2540 = vmatpush1.bf16.msra.mxu0 0
    %2541 = vmatprep.subr.bf16.mxu0 0
    %2542 = vmatpush1.bf16.msra.mxu0 0
    %2543 = vmatprep.subr.bf16.mxu0 0
    %2544 = vmatpush1.bf16.msra.mxu0 0
    %2545 = vmatprep.subr.bf16.mxu0 0
    %2546 = vmatpush1.bf16.msra.mxu0 0
    %2547 = vmatprep.subr.bf16.mxu0 0
    %2548 = vmatpush1.bf16.msra.mxu0 0
    %2549 = vmatprep.subr.bf16.mxu0 0
    %2550 = vmatpush1.bf16.msra.mxu0 0
    %2551 = vmatprep.subr.bf16.mxu0 0
    %2552 = vmatpush1.bf16.msra.mxu0 0
    %2553 = vmatprep.subr.bf16.mxu0 0
    %2554 = vmatpush1.bf16.msra.mxu0 0
    %2555 = vmatprep.mubr.bf16.mxu0 0
    %2556 = vmatmul.mubr.bf16.gmra.mrb[0].mxu0 %v2521
    %v2557 = vpop.f32.mrb[0].mxu0
    %v2558 = vadd.f32 0.0, %v2557
    %v2559 = vpop.f32.mrb[0].mxu0
    %v2560 = vadd.f32 0.0, %v2559
    %v2561 = vpop.f32.mrb[0].mxu0
    %v2562 = vadd.f32 0.0, %v2561
    %v2563 = vpop.f32.mrb[0].mxu0
    %v2564 = vadd.f32 0.0, %v2563
    %2565 = vdwg.mxu0
    %2566 = vmatprep.subr.bf16.mxu0 %v2506
    %2567 = vmatpush1.bf16.msra.mxu0 %v2505
    %2568 = vmatprep.subr.bf16.mxu0 %v2510
    %2569 = vmatpush1.bf16.msra.mxu0 %v2509
    %2570 = vmatprep.subr.bf16.mxu0 %v2514
    %2571 = vmatpush1.bf16.msra.mxu0 %v2513
    %2572 = vmatprep.subr.bf16.mxu0 %v437
    %2573 = vmatpush1.bf16.msra.mxu0 %v437
    %2574 = vmatprep.subr.bf16.mxu0 0
    %2575 = vmatpush1.bf16.msra.mxu0 0
    %2576 = vmatprep.subr.bf16.mxu0 0
    %2577 = vmatpush1.bf16.msra.mxu0 0
    %2578 = vmatprep.subr.bf16.mxu0 0
    %2579 = vmatpush1.bf16.msra.mxu0 0
    %2580 = vmatprep.subr.bf16.mxu0 0
    %2581 = vmatpush1.bf16.msra.mxu0 0
    %2582 = vmatprep.subr.bf16.mxu0 0
    %2583 = vmatpush1.bf16.msra.mxu0 0
    %2584 = vmatprep.subr.bf16.mxu0 0
    %2585 = vmatpush1.bf16.msra.mxu0 0
    %2586 = vmatprep.subr.bf16.mxu0 0
    %2587 = vmatpush1.bf16.msra.mxu0 0
    %2588 = vmatprep.subr.bf16.mxu0 0
    %2589 = vmatpush1.bf16.msra.mxu0 0
    %2590 = vmatprep.subr.bf16.mxu0 0
    %2591 = vmatpush1.bf16.msra.mxu0 0
    %2592 = vmatprep.subr.bf16.mxu0 0
    %2593 = vmatpush1.bf16.msra.mxu0 0
    %2594 = vmatprep.subr.bf16.mxu0 0
    %2595 = vmatpush1.bf16.msra.mxu0 0
    %2596 = vmatprep.subr.bf16.mxu0 0
    %2597 = vmatpush1.bf16.msra.mxu0 0
    %2598 = vmatprep.mubr.bf16.mxu0 0
    %2599 = vmatmul.mubr.bf16.gmra.mrb[0].mxu0 %v2521
    %v2600 = vpop.f32.mrb[0].mxu0
    %v2601 = vadd.f32 0.0, %v2600
    %v2602 = vpop.f32.mrb[0].mxu0
    %v2603 = vadd.f32 0.0, %v2602
    %v2604 = vpop.f32.mrb[0].mxu0
    %v2605 = vadd.f32 0.0, %v2604
    %v2606 = vpop.f32.mrb[0].mxu0
    %v2607 = vadd.f32 0.0, %v2606
    %2608 = vdwg.mxu0
    %v2609 = vmax.f32 %v2558, 0.0
    %v2610 = vmax.f32 %v2560, 0.0
    %v2611 = vmax.f32 %v2601, 0.0
    %v2612 = vmax.f32 %v2603, 0.0
    %v2613 = vmax.f32 %v2562, 0.0
    %v2614 = vmax.f32 %v2564, 0.0
    %v2615 = vmax.f32 %v2605, 0.0
    %v2616 = vmax.f32 %v2607, 0.0
    %v2617 = vpack.c.bf16 %v2613, %v2609
    %v2618 = vpack.c.bf16 %v2614, %v2610
    %v2619 = vpack.c.bf16 %v2615, %v2611
    %v2620 = vpack.c.bf16 %v2616, %v2612
    %v2623 = vunpack.c.l.b16 %v1739
    %v2624 = vunpack.c.l.b16 %v1740
    %v2625 = vpack.c.b16 %v2624, %v2623
    %v2627 = vsel %vm542, %v2625, 0
    %2629 = vmatprep.subr.bf16.mxu0 %v2618
    %2630 = vmatpush1.bf16.msra.mxu0 %v2617
    %2631 = vmatprep.subr.bf16.mxu0 %v437
    %2632 = vmatpush1.bf16.msra.mxu0 %v437
    %2633 = vmatprep.subr.bf16.mxu0 0
    %2634 = vmatpush1.bf16.msra.mxu0 0
    %2635 = vmatprep.subr.bf16.mxu0 0
    %2636 = vmatpush1.bf16.msra.mxu0 0
    %2637 = vmatprep.subr.bf16.mxu0 0
    %2638 = vmatpush1.bf16.msra.mxu0 0
    %2639 = vmatprep.subr.bf16.mxu0 0
    %2640 = vmatpush1.bf16.msra.mxu0 0
    %2641 = vmatprep.subr.bf16.mxu0 0
    %2642 = vmatpush1.bf16.msra.mxu0 0
    %2643 = vmatprep.subr.bf16.mxu0 0
    %2644 = vmatpush1.bf16.msra.mxu0 0
    %2645 = vmatprep.subr.bf16.mxu0 0
    %2646 = vmatpush1.bf16.msra.mxu0 0
    %2647 = vmatprep.subr.bf16.mxu0 0
    %2648 = vmatpush1.bf16.msra.mxu0 0
    %2649 = vmatprep.subr.bf16.mxu0 0
    %2650 = vmatpush1.bf16.msra.mxu0 0
    %2651 = vmatprep.subr.bf16.mxu0 0
    %2652 = vmatpush1.bf16.msra.mxu0 0
    %2653 = vmatprep.subr.bf16.mxu0 0
    %2654 = vmatpush1.bf16.msra.mxu0 0
    %2655 = vmatprep.subr.bf16.mxu0 0
    %2656 = vmatpush1.bf16.msra.mxu0 0
    %2657 = vmatprep.subr.bf16.mxu0 0
    %2658 = vmatpush1.bf16.msra.mxu0 0
    %2659 = vmatprep.subr.bf16.mxu0 0
    %2660 = vmatpush1.bf16.msra.mxu0 0
    %2661 = vmatprep.mubr.bf16.mxu0 0
    %2662 = vmatmul.mubr.bf16.gmra.mrb[0].mxu0 %v2627
    %v2663 = vpop.f32.mrb[0].mxu0
    %v2664 = vadd.f32 0.0, %v2663
    %v2665 = vpop.f32.mrb[0].mxu0
    %v2666 = vadd.f32 0.0, %v2665
    %v2667 = vpop.f32.mrb[0].mxu0
    %v2668 = vadd.f32 0.0, %v2667
    %v2669 = vpop.f32.mrb[0].mxu0
    %v2670 = vadd.f32 0.0, %v2669
    %2671 = vdwg.mxu0
    %2672 = vmatprep.subr.bf16.mxu0 %v2620
    %2673 = vmatpush1.bf16.msra.mxu0 %v2619
    %2674 = vmatprep.subr.bf16.mxu0 %v437
    %2675 = vmatpush1.bf16.msra.mxu0 %v437
    %2676 = vmatprep.subr.bf16.mxu0 0
    %2677 = vmatpush1.bf16.msra.mxu0 0
    %2678 = vmatprep.subr.bf16.mxu0 0
    %2679 = vmatpush1.bf16.msra.mxu0 0
    %2680 = vmatprep.subr.bf16.mxu0 0
    %2681 = vmatpush1.bf16.msra.mxu0 0
    %2682 = vmatprep.subr.bf16.mxu0 0
    %2683 = vmatpush1.bf16.msra.mxu0 0
    %2684 = vmatprep.subr.bf16.mxu0 0
    %2685 = vmatpush1.bf16.msra.mxu0 0
    %2686 = vmatprep.subr.bf16.mxu0 0
    %2687 = vmatpush1.bf16.msra.mxu0 0
    %2688 = vmatprep.subr.bf16.mxu0 0
    %2689 = vmatpush1.bf16.msra.mxu0 0
    %2690 = vmatprep.subr.bf16.mxu0 0
    %2691 = vmatpush1.bf16.msra.mxu0 0
    %2692 = vmatprep.subr.bf16.mxu0 0
    %2693 = vmatpush1.bf16.msra.mxu0 0
    %2694 = vmatprep.subr.bf16.mxu0 0
    %2695 = vmatpush1.bf16.msra.mxu0 0
    %2696 = vmatprep.subr.bf16.mxu0 0
    %2697 = vmatpush1.bf16.msra.mxu0 0
    %2698 = vmatprep.subr.bf16.mxu0 0
    %2699 = vmatpush1.bf16.msra.mxu0 0
    %2700 = vmatprep.subr.bf16.mxu0 0
    %2701 = vmatpush1.bf16.msra.mxu0 0
    %2702 = vmatprep.subr.bf16.mxu0 0
    %2703 = vmatpush1.bf16.msra.mxu0 0
    %2704 = vmatprep.mubr.bf16.mxu0 0
    %2705 = vmatmul.mubr.bf16.gmra.mrb[0].mxu0 %v2627
    %v2706 = vpop.f32.mrb[0].mxu0
    %v2707 = vadd.f32 0.0, %v2706
    %v2708 = vpop.f32.mrb[0].mxu0
    %v2709 = vadd.f32 0.0, %v2708
    %v2710 = vpop.f32.mrb[0].mxu0
    %v2711 = vadd.f32 0.0, %v2710
    %v2712 = vpop.f32.mrb[0].mxu0
    %v2713 = vadd.f32 0.0, %v2712
    %2714 = vdwg.mxu0
    %v2715 = vadd.f32 %v2431, %v2664
    %v2716 = vadd.f32 %v2432, %v2666
    %v2717 = vadd.f32 %v2433, %v2707
    %v2718 = vadd.f32 %v2434, %v2709
    %v2719 = vadd.f32 %v2435, %v2668
    %v2720 = vadd.f32 %v2436, %v2670
    %v2721 = vadd.f32 %v2437, %v2711
    %v2722 = vadd.f32 %v2438, %v2713
    %v2723 = vmul.f32 %v2715, %v644
    %v2724 = vmul.f32 %v2716, %v648
    %v2725 = vmul.f32 %v2717, %v652
    %v2726 = vmul.f32 %v2718, %v656
    %v2727 = vmul.f32 %v2719, %v644
    %v2728 = vmul.f32 %v2720, %v648
    %v2729 = vmul.f32 %v2721, %v652
    %v2730 = vmul.f32 %v2722, %v656
    %2731 = vrot.lane.b32.xlu0 %v2723, 8
    %v2732 = vpop.permute.xlu0 %2731
    %2733 = vrot.lane.b32.xlu0 %v2727, 8
    %v2734 = vpop.permute.xlu0 %2733
    %2735 = vrot.lane.b32.xlu0 %v2724, 8
    %v2736 = vpop.permute.xlu0 %2735
    %2737 = vrot.lane.b32.xlu0 %v2728, 8
    %v2738 = vpop.permute.xlu0 %2737
    %2739 = vrot.lane.b32.xlu0 %v2725, 8
    %v2740 = vpop.permute.xlu0 %2739
    %2741 = vrot.lane.b32.xlu0 %v2729, 8
    %v2742 = vpop.permute.xlu0 %2741
    %2743 = vrot.lane.b32.xlu0 %v2726, 8
    %v2744 = vpop.permute.xlu0 %2743
    %2745 = vrot.lane.b32.xlu0 %v2730, 8
    %v2746 = vpop.permute.xlu0 %2745
    %v2747 = vsel %vm1273, %v2740, %v2744
    %v2748 = vsel %vm1273, %v2742, %v2746
    %v2749 = vsel %vm1273, %v2736, %v2740
    %v2750 = vsel %vm1273, %v2738, %v2742
    %v2751 = vsel %vm1273, %v2732, %v2736
    %v2752 = vsel %vm1273, %v2734, %v2738
    %v2753 = vsel %vm1273, %v2744, %v2732
    %v2754 = vsel %vm1273, %v2746, %v2734
    %v2755 = vsel %vm185, %v2753, 0.0
    %v2756 = vsel %vm186, %v2751, 0.0
    %v2757 = vsel %vm187, %v2749, 0.0
    %v2758 = vsel %vm188, %v2747, 0.0
    %v2759 = vsel %vm185, %v2754, 0.0
    %v2760 = vsel %vm186, %v2752, 0.0
    %v2761 = vsel %vm187, %v2750, 0.0
    %v2762 = vsel %vm188, %v2748, 0.0
    %2763 = vrot.lane.b32.xlu0 %v2723, 120
    %v2764 = vpop.permute.xlu0 %2763
    %2765 = vrot.lane.b32.xlu0 %v2727, 120
    %v2766 = vpop.permute.xlu0 %2765
    %2767 = vrot.lane.b32.xlu0 %v2724, 120
    %v2768 = vpop.permute.xlu0 %2767
    %2769 = vrot.lane.b32.xlu0 %v2728, 120
    %v2770 = vpop.permute.xlu0 %2769
    %2771 = vrot.lane.b32.xlu0 %v2725, 120
    %v2772 = vpop.permute.xlu0 %2771
    %2773 = vrot.lane.b32.xlu0 %v2729, 120
    %v2774 = vpop.permute.xlu0 %2773
    %2775 = vrot.lane.b32.xlu0 %v2726, 120
    %v2776 = vpop.permute.xlu0 %2775
    %2777 = vrot.lane.b32.xlu0 %v2730, 120
    %v2778 = vpop.permute.xlu0 %2777
    %v2779 = vsel %vm1306, %v2772, %v2776
    %v2780 = vsel %vm1306, %v2774, %v2778
    %v2781 = vsel %vm1306, %v2768, %v2772
    %v2782 = vsel %vm1306, %v2770, %v2774
    %v2783 = vsel %vm1306, %v2764, %v2768
    %v2784 = vsel %vm1306, %v2766, %v2770
    %v2785 = vsel %vm1306, %v2776, %v2764
    %v2786 = vsel %vm1306, %v2778, %v2766
    %v2787 = vsel %vm201, %v2783, 0.0
    %v2788 = vsel %vm202, %v2781, 0.0
    %v2789 = vsel %vm203, %v2779, 0.0
    %v2790 = vsel %vm204, %v2785, 0.0
    %v2791 = vsel %vm201, %v2784, 0.0
    %v2792 = vsel %vm202, %v2782, 0.0
    %v2793 = vsel %vm203, %v2780, 0.0
    %v2794 = vsel %vm204, %v2786, 0.0
    %v2795 = vpack.c.bf16 %v2759, %v2755
    %v2796 = vpack.c.bf16 %v2760, %v2756
    %v2797 = vpack.c.bf16 %v2761, %v2757
    %v2798 = vpack.c.bf16 %v2762, %v2758
    %v2799 = vpack.c.bf16 %v2727, %v2723
    %v2800 = vpack.c.bf16 %v2728, %v2724
    %v2801 = vpack.c.bf16 %v2729, %v2725
    %v2802 = vpack.c.bf16 %v2730, %v2726
    %v2803 = vpack.c.bf16 %v2791, %v2787
    %v2804 = vpack.c.bf16 %v2792, %v2788
    %v2805 = vpack.c.bf16 %v2793, %v2789
    %v2806 = vpack.c.bf16 %v2794, %v2790
    %v2809 = vunpack.c.l.b16 %v1731
    %v2810 = vunpack.c.l.b16 %v1732
    %v2811 = vpack.c.b16 %v2810, %v2809
    %v2813 = vsel %vm429, %v2811, 0
    %2815 = vmatprep.subr.bf16.mxu0 %v2796
    %2816 = vmatpush1.bf16.msra.mxu0 %v2795
    %2817 = vmatprep.subr.bf16.mxu0 %v2800
    %2818 = vmatpush1.bf16.msra.mxu0 %v2799
    %2819 = vmatprep.subr.bf16.mxu0 %v2804
    %2820 = vmatpush1.bf16.msra.mxu0 %v2803
    %2821 = vmatprep.subr.bf16.mxu0 %v437
    %2822 = vmatpush1.bf16.msra.mxu0 %v437
    %2823 = vmatprep.subr.bf16.mxu0 0
    %2824 = vmatpush1.bf16.msra.mxu0 0
    %2825 = vmatprep.subr.bf16.mxu0 0
    %2826 = vmatpush1.bf16.msra.mxu0 0
    %2827 = vmatprep.subr.bf16.mxu0 0
    %2828 = vmatpush1.bf16.msra.mxu0 0
    %2829 = vmatprep.subr.bf16.mxu0 0
    %2830 = vmatpush1.bf16.msra.mxu0 0
    %2831 = vmatprep.subr.bf16.mxu0 0
    %2832 = vmatpush1.bf16.msra.mxu0 0
    %2833 = vmatprep.subr.bf16.mxu0 0
    %2834 = vmatpush1.bf16.msra.mxu0 0
    %2835 = vmatprep.subr.bf16.mxu0 0
    %2836 = vmatpush1.bf16.msra.mxu0 0
    %2837 = vmatprep.subr.bf16.mxu0 0
    %2838 = vmatpush1.bf16.msra.mxu0 0
    %2839 = vmatprep.subr.bf16.mxu0 0
    %2840 = vmatpush1.bf16.msra.mxu0 0
    %2841 = vmatprep.subr.bf16.mxu0 0
    %2842 = vmatpush1.bf16.msra.mxu0 0
    %2843 = vmatprep.subr.bf16.mxu0 0
    %2844 = vmatpush1.bf16.msra.mxu0 0
    %2845 = vmatprep.subr.bf16.mxu0 0
    %2846 = vmatpush1.bf16.msra.mxu0 0
    %2847 = vmatprep.mubr.bf16.mxu0 0
    %2848 = vmatmul.mubr.bf16.gmra.mrb[0].mxu0 %v2813
    %v2849 = vpop.f32.mrb[0].mxu0
    %v2850 = vadd.f32 0.0, %v2849
    %v2851 = vpop.f32.mrb[0].mxu0
    %v2852 = vadd.f32 0.0, %v2851
    %v2853 = vpop.f32.mrb[0].mxu0
    %v2854 = vadd.f32 0.0, %v2853
    %v2855 = vpop.f32.mrb[0].mxu0
    %v2856 = vadd.f32 0.0, %v2855
    %2857 = vdwg.mxu0
    %2858 = vmatprep.subr.bf16.mxu0 %v2798
    %2859 = vmatpush1.bf16.msra.mxu0 %v2797
    %2860 = vmatprep.subr.bf16.mxu0 %v2802
    %2861 = vmatpush1.bf16.msra.mxu0 %v2801
    %2862 = vmatprep.subr.bf16.mxu0 %v2806
    %2863 = vmatpush1.bf16.msra.mxu0 %v2805
    %2864 = vmatprep.subr.bf16.mxu0 %v437
    %2865 = vmatpush1.bf16.msra.mxu0 %v437
    %2866 = vmatprep.subr.bf16.mxu0 0
    %2867 = vmatpush1.bf16.msra.mxu0 0
    %2868 = vmatprep.subr.bf16.mxu0 0
    %2869 = vmatpush1.bf16.msra.mxu0 0
    %2870 = vmatprep.subr.bf16.mxu0 0
    %2871 = vmatpush1.bf16.msra.mxu0 0
    %2872 = vmatprep.subr.bf16.mxu0 0
    %2873 = vmatpush1.bf16.msra.mxu0 0
    %2874 = vmatprep.subr.bf16.mxu0 0
    %2875 = vmatpush1.bf16.msra.mxu0 0
    %2876 = vmatprep.subr.bf16.mxu0 0
    %2877 = vmatpush1.bf16.msra.mxu0 0
    %2878 = vmatprep.subr.bf16.mxu0 0
    %2879 = vmatpush1.bf16.msra.mxu0 0
    %2880 = vmatprep.subr.bf16.mxu0 0
    %2881 = vmatpush1.bf16.msra.mxu0 0
    %2882 = vmatprep.subr.bf16.mxu0 0
    %2883 = vmatpush1.bf16.msra.mxu0 0
    %2884 = vmatprep.subr.bf16.mxu0 0
    %2885 = vmatpush1.bf16.msra.mxu0 0
    %2886 = vmatprep.subr.bf16.mxu0 0
    %2887 = vmatpush1.bf16.msra.mxu0 0
    %2888 = vmatprep.subr.bf16.mxu0 0
    %2889 = vmatpush1.bf16.msra.mxu0 0
    %2890 = vmatprep.mubr.bf16.mxu0 0
    %2891 = vmatmul.mubr.bf16.gmra.mrb[0].mxu0 %v2813
    %v2892 = vpop.f32.mrb[0].mxu0
    %v2893 = vadd.f32 0.0, %v2892
    %v2894 = vpop.f32.mrb[0].mxu0
    %v2895 = vadd.f32 0.0, %v2894
    %v2896 = vpop.f32.mrb[0].mxu0
    %v2897 = vadd.f32 0.0, %v2896
    %v2898 = vpop.f32.mrb[0].mxu0
    %v2899 = vadd.f32 0.0, %v2898
    %2900 = vdwg.mxu0
    %v2901 = vmax.f32 %v2850, 0.0
    %v2902 = vmax.f32 %v2852, 0.0
    %v2903 = vmax.f32 %v2893, 0.0
    %v2904 = vmax.f32 %v2895, 0.0
    %v2905 = vmax.f32 %v2854, 0.0
    %v2906 = vmax.f32 %v2856, 0.0
    %v2907 = vmax.f32 %v2897, 0.0
    %v2908 = vmax.f32 %v2899, 0.0
    %v2909 = vpack.c.bf16 %v2905, %v2901
    %v2910 = vpack.c.bf16 %v2906, %v2902
    %v2911 = vpack.c.bf16 %v2907, %v2903
    %v2912 = vpack.c.bf16 %v2908, %v2904
    %v2915 = vunpack.c.l.b16 %v1742
    %v2916 = vunpack.c.l.b16 %v1743
    %v2917 = vpack.c.b16 %v2916, %v2915
    %v2919 = vsel %vm542, %v2917, 0
    %2921 = vmatprep.subr.bf16.mxu0 %v2910
    %2922 = vmatpush1.bf16.msra.mxu0 %v2909
    %2923 = vmatprep.subr.bf16.mxu0 %v437
    %2924 = vmatpush1.bf16.msra.mxu0 %v437
    %2925 = vmatprep.subr.bf16.mxu0 0
    %2926 = vmatpush1.bf16.msra.mxu0 0
    %2927 = vmatprep.subr.bf16.mxu0 0
    %2928 = vmatpush1.bf16.msra.mxu0 0
    %2929 = vmatprep.subr.bf16.mxu0 0
    %2930 = vmatpush1.bf16.msra.mxu0 0
    %2931 = vmatprep.subr.bf16.mxu0 0
    %2932 = vmatpush1.bf16.msra.mxu0 0
    %2933 = vmatprep.subr.bf16.mxu0 0
    %2934 = vmatpush1.bf16.msra.mxu0 0
    %2935 = vmatprep.subr.bf16.mxu0 0
    %2936 = vmatpush1.bf16.msra.mxu0 0
    %2937 = vmatprep.subr.bf16.mxu0 0
    %2938 = vmatpush1.bf16.msra.mxu0 0
    %2939 = vmatprep.subr.bf16.mxu0 0
    %2940 = vmatpush1.bf16.msra.mxu0 0
    %2941 = vmatprep.subr.bf16.mxu0 0
    %2942 = vmatpush1.bf16.msra.mxu0 0
    %2943 = vmatprep.subr.bf16.mxu0 0
    %2944 = vmatpush1.bf16.msra.mxu0 0
    %2945 = vmatprep.subr.bf16.mxu0 0
    %2946 = vmatpush1.bf16.msra.mxu0 0
    %2947 = vmatprep.subr.bf16.mxu0 0
    %2948 = vmatpush1.bf16.msra.mxu0 0
    %2949 = vmatprep.subr.bf16.mxu0 0
    %2950 = vmatpush1.bf16.msra.mxu0 0
    %2951 = vmatprep.subr.bf16.mxu0 0
    %2952 = vmatpush1.bf16.msra.mxu0 0
    %2953 = vmatprep.mubr.bf16.mxu0 0
    %2954 = vmatmul.mubr.bf16.gmra.mrb[0].mxu0 %v2919
    %v2955 = vpop.f32.mrb[0].mxu0
    %v2956 = vadd.f32 0.0, %v2955
    %v2957 = vpop.f32.mrb[0].mxu0
    %v2958 = vadd.f32 0.0, %v2957
    %v2959 = vpop.f32.mrb[0].mxu0
    %v2960 = vadd.f32 0.0, %v2959
    %v2961 = vpop.f32.mrb[0].mxu0
    %v2962 = vadd.f32 0.0, %v2961
    %2963 = vdwg.mxu0
    %2964 = vmatprep.subr.bf16.mxu0 %v2912
    %2965 = vmatpush1.bf16.msra.mxu0 %v2911
    %2966 = vmatprep.subr.bf16.mxu0 %v437
    %2967 = vmatpush1.bf16.msra.mxu0 %v437
    %2968 = vmatprep.subr.bf16.mxu0 0
    %2969 = vmatpush1.bf16.msra.mxu0 0
    %2970 = vmatprep.subr.bf16.mxu0 0
    %2971 = vmatpush1.bf16.msra.mxu0 0
    %2972 = vmatprep.subr.bf16.mxu0 0
    %2973 = vmatpush1.bf16.msra.mxu0 0
    %2974 = vmatprep.subr.bf16.mxu0 0
    %2975 = vmatpush1.bf16.msra.mxu0 0
    %2976 = vmatprep.subr.bf16.mxu0 0
    %2977 = vmatpush1.bf16.msra.mxu0 0
    %2978 = vmatprep.subr.bf16.mxu0 0
    %2979 = vmatpush1.bf16.msra.mxu0 0
    %2980 = vmatprep.subr.bf16.mxu0 0
    %2981 = vmatpush1.bf16.msra.mxu0 0
    %2982 = vmatprep.subr.bf16.mxu0 0
    %2983 = vmatpush1.bf16.msra.mxu0 0
    %2984 = vmatprep.subr.bf16.mxu0 0
    %2985 = vmatpush1.bf16.msra.mxu0 0
    %2986 = vmatprep.subr.bf16.mxu0 0
    %2987 = vmatpush1.bf16.msra.mxu0 0
    %2988 = vmatprep.subr.bf16.mxu0 0
    %2989 = vmatpush1.bf16.msra.mxu0 0
    %2990 = vmatprep.subr.bf16.mxu0 0
    %2991 = vmatpush1.bf16.msra.mxu0 0
    %2992 = vmatprep.subr.bf16.mxu0 0
    %2993 = vmatpush1.bf16.msra.mxu0 0
    %2994 = vmatprep.subr.bf16.mxu0 0
    %2995 = vmatpush1.bf16.msra.mxu0 0
    %2996 = vmatprep.mubr.bf16.mxu0 0
    %2997 = vmatmul.mubr.bf16.gmra.mrb[0].mxu0 %v2919
    %v2998 = vpop.f32.mrb[0].mxu0
    %v2999 = vadd.f32 0.0, %v2998
    %v3000 = vpop.f32.mrb[0].mxu0
    %v3001 = vadd.f32 0.0, %v3000
    %v3002 = vpop.f32.mrb[0].mxu0
    %v3003 = vadd.f32 0.0, %v3002
    %v3004 = vpop.f32.mrb[0].mxu0
    %v3005 = vadd.f32 0.0, %v3004
    %3006 = vdwg.mxu0
    %v3007 = vadd.f32 %v2723, %v2956
    %v3008 = vadd.f32 %v2724, %v2958
    %v3009 = vadd.f32 %v2725, %v2999
    %v3010 = vadd.f32 %v2726, %v3001
    %v3011 = vadd.f32 %v2727, %v2960
    %v3012 = vadd.f32 %v2728, %v2962
    %v3013 = vadd.f32 %v2729, %v3003
    %v3014 = vadd.f32 %v2730, %v3005
    %v3015 = vmul.f32 %v3007, %v644
    %v3016 = vmul.f32 %v3008, %v648
    %v3017 = vmul.f32 %v3009, %v652
    %v3018 = vmul.f32 %v3010, %v656
    %v3019 = vmul.f32 %v3011, %v644
    %v3020 = vmul.f32 %v3012, %v648
    %v3021 = vmul.f32 %v3013, %v652
    %v3022 = vmul.f32 %v3014, %v656
    %v3023 = vpack.c.bf16 %v3019, %v3015
    %v3024 = vpack.c.bf16 %v3020, %v3016
    %v3025 = vpack.c.bf16 %v3021, %v3017
    %v3026 = vpack.c.bf16 %v3022, %v3018
    %v3028 = vsel %vm542, %v1744, 0
    %3030 = vmatprep.subr.bf16.mxu0 %v3024
    %3031 = vmatpush1.bf16.msra.mxu0 %v3023
    %3032 = vmatprep.subr.bf16.mxu0 %v437
    %3033 = vmatpush1.bf16.msra.mxu0 %v437
    %3034 = vmatprep.subr.bf16.mxu0 0
    %3035 = vmatpush1.bf16.msra.mxu0 0
    %3036 = vmatprep.subr.bf16.mxu0 0
    %3037 = vmatpush1.bf16.msra.mxu0 0
    %3038 = vmatprep.subr.bf16.mxu0 0
    %3039 = vmatpush1.bf16.msra.mxu0 0
    %3040 = vmatprep.subr.bf16.mxu0 0
    %3041 = vmatpush1.bf16.msra.mxu0 0
    %3042 = vmatprep.subr.bf16.mxu0 0
    %3043 = vmatpush1.bf16.msra.mxu0 0
    %3044 = vmatprep.subr.bf16.mxu0 0
    %3045 = vmatpush1.bf16.msra.mxu0 0
    %3046 = vmatprep.subr.bf16.mxu0 0
    %3047 = vmatpush1.bf16.msra.mxu0 0
    %3048 = vmatprep.subr.bf16.mxu0 0
    %3049 = vmatpush1.bf16.msra.mxu0 0
    %3050 = vmatprep.subr.bf16.mxu0 0
    %3051 = vmatpush1.bf16.msra.mxu0 0
    %3052 = vmatprep.subr.bf16.mxu0 0
    %3053 = vmatpush1.bf16.msra.mxu0 0
    %3054 = vmatprep.subr.bf16.mxu0 0
    %3055 = vmatpush1.bf16.msra.mxu0 0
    %3056 = vmatprep.subr.bf16.mxu0 0
    %3057 = vmatpush1.bf16.msra.mxu0 0
    %3058 = vmatprep.subr.bf16.mxu0 0
    %3059 = vmatpush1.bf16.msra.mxu0 0
    %3060 = vmatprep.subr.bf16.mxu0 0
    %3061 = vmatpush1.bf16.msra.mxu0 0
    %3062 = vmatprep.mubr.bf16.mxu0 0
    %3063 = vmatmul.mubr.bf16.gmra.mrb[0].mxu0 %v3028
    %v3064 = vpop.f32.mrb[0].mxu0
    %v3065 = vadd.f32 0.0, %v3064
    %v3066 = vpop.f32.mrb[0].mxu0
    %v3067 = vadd.f32 0.0, %v3066
    %v3068 = vpop.f32.mrb[0].mxu0
    %v3069 = vpop.f32.mrb[0].mxu0
    %3070 = vdwg.mxu0
    %3071 = vmatprep.subr.bf16.mxu0 %v3026
    %3072 = vmatpush1.bf16.msra.mxu0 %v3025
    %3073 = vmatprep.subr.bf16.mxu0 %v437
    %3074 = vmatpush1.bf16.msra.mxu0 %v437
    %3075 = vmatprep.subr.bf16.mxu0 0
    %3076 = vmatpush1.bf16.msra.mxu0 0
    %3077 = vmatprep.subr.bf16.mxu0 0
    %3078 = vmatpush1.bf16.msra.mxu0 0
    %3079 = vmatprep.subr.bf16.mxu0 0
    %3080 = vmatpush1.bf16.msra.mxu0 0
    %3081 = vmatprep.subr.bf16.mxu0 0
    %3082 = vmatpush1.bf16.msra.mxu0 0
    %3083 = vmatprep.subr.bf16.mxu0 0
    %3084 = vmatpush1.bf16.msra.mxu0 0
    %3085 = vmatprep.subr.bf16.mxu0 0
    %3086 = vmatpush1.bf16.msra.mxu0 0
    %3087 = vmatprep.subr.bf16.mxu0 0
    %3088 = vmatpush1.bf16.msra.mxu0 0
    %3089 = vmatprep.subr.bf16.mxu0 0
    %3090 = vmatpush1.bf16.msra.mxu0 0
    %3091 = vmatprep.subr.bf16.mxu0 0
    %3092 = vmatpush1.bf16.msra.mxu0 0
    %3093 = vmatprep.subr.bf16.mxu0 0
    %3094 = vmatpush1.bf16.msra.mxu0 0
    %3095 = vmatprep.subr.bf16.mxu0 0
    %3096 = vmatpush1.bf16.msra.mxu0 0
    %3097 = vmatprep.subr.bf16.mxu0 0
    %3098 = vmatpush1.bf16.msra.mxu0 0
    %3099 = vmatprep.subr.bf16.mxu0 0
    %3100 = vmatpush1.bf16.msra.mxu0 0
    %3101 = vmatprep.subr.bf16.mxu0 0
    %3102 = vmatpush1.bf16.msra.mxu0 0
    %3103 = vmatprep.mubr.bf16.mxu0 0
    %3104 = vmatmul.mubr.bf16.gmra.mrb[0].mxu0 %v3028
    %v3105 = vpop.f32.mrb[0].mxu0
    %v3106 = vadd.f32 0.0, %v3105
    %v3107 = vpop.f32.mrb[0].mxu0
    %v3108 = vadd.f32 0.0, %v3107
    %v3109 = vpop.f32.mrb[0].mxu0
    %v3110 = vpop.f32.mrb[0].mxu0
    %3111 = vdwg.mxu0
    %v3112 = vmul.f32 %v3065, %v644
    %v3113 = vmul.f32 %v3067, %v648
    %v3114 = vmul.f32 %v3106, %v652
    %v3115 = vmul.f32 %v3108, %v656
    %s3116 = scalar_lea.vmem [#allocation13], 32
    %3117 = vst [vmem:[%s3116] sm:$0xff] %v3112
    %3118 = vst [vmem:[%s3116 + $0x8] sm:$0xff] %v3113
    %3119 = vst [vmem:[%s3116 + $0x10] sm:$0xff] %v3114
    %3120 = vst [vmem:[%s3116 + $0x18] sm:$0xff] %v3115
    %v3121 = vrot.slane %v3112, 4
    %v3122 = vmax.f32 %v3112, %v3121
    %v3123 = vrot.slane %v3122, 2
    %v3124 = vmax.f32 %v3122, %v3123
    %v3125 = vrot.slane %v3124, 1
    %v3126 = vmax.f32 %v3124, %v3125
    %v3127 = vrot.slane %v3113, 4
    %v3128 = vmax.f32 %v3113, %v3127
    %v3129 = vrot.slane %v3128, 2
    %v3130 = vmax.f32 %v3128, %v3129
    %v3131 = vrot.slane %v3130, 1
    %v3132 = vmax.f32 %v3130, %v3131
    %v3133 = vrot.slane %v3114, 4
    %v3134 = vmax.f32 %v3114, %v3133
    %v3135 = vrot.slane %v3134, 2
    %v3136 = vmax.f32 %v3134, %v3135
    %v3137 = vrot.slane %v3136, 1
    %v3138 = vmax.f32 %v3136, %v3137
    %v3139 = vrot.slane %v3115, 4
    %v3140 = vmax.f32 %v3115, %v3139
    %v3141 = vrot.slane %v3140, 2
    %v3142 = vmax.f32 %v3140, %v3141
    %v3143 = vrot.slane %v3142, 1
    %v3144 = vmax.f32 %v3142, %v3143
    %v3145 = vsub.f32 %v3112, %v3126
    %v3146 = vsub.f32 %v3113, %v3132
    %v3147 = vsub.f32 %v3114, %v3138
    %v3148 = vsub.f32 %v3115, %v3144
    %v3149 = vmul.f32 %v3145, 1.442695
    %v3150 = vpow.pop %v3149
    %v3151 = vmul.f32 %v3146, 1.442695
    %v3152 = vpow.pop %v3151
    %v3153 = vmul.f32 %v3147, 1.442695
    %v3154 = vpow.pop %v3153
    %v3155 = vmul.f32 %v3148, 1.442695
    %v3156 = vpow.pop %v3155
    %v3157 = vrot.slane %v3150, 4
    %v3158 = vadd.f32 %v3150, %v3157
    %v3159 = vrot.slane %v3158, 2
    %v3160 = vadd.f32 %v3158, %v3159
    %v3161 = vrot.slane %v3160, 1
    %v3162 = vadd.f32 %v3160, %v3161
    %v3163 = vrot.slane %v3152, 4
    %v3164 = vadd.f32 %v3152, %v3163
    %v3165 = vrot.slane %v3164, 2
    %v3166 = vadd.f32 %v3164, %v3165
    %v3167 = vrot.slane %v3166, 1
    %v3168 = vadd.f32 %v3166, %v3167
    %v3169 = vrot.slane %v3154, 4
    %v3170 = vadd.f32 %v3154, %v3169
    %v3171 = vrot.slane %v3170, 2
    %v3172 = vadd.f32 %v3170, %v3171
    %v3173 = vrot.slane %v3172, 1
    %v3174 = vadd.f32 %v3172, %v3173
    %v3175 = vrot.slane %v3156, 4
    %v3176 = vadd.f32 %v3156, %v3175
    %v3177 = vrot.slane %v3176, 2
    %v3178 = vadd.f32 %v3176, %v3177
    %v3179 = vrot.slane %v3178, 1
    %v3180 = vadd.f32 %v3178, %v3179
    %v3181 = vrcp.pop %v3162
    %v3182 = vrcp.pop %v3168
    %v3183 = vrcp.pop %v3174
    %v3184 = vrcp.pop %v3180
    %v3185 = vmul.f32 %v3150, %v3181
    %v3186 = vmul.f32 %v3152, %v3182
    %v3187 = vmul.f32 %v3154, %v3183
    %v3188 = vmul.f32 %v3156, %v3184
    %v3189 = vmul.f32 %v3185, %v644
    %v3190 = vmul.f32 %v3186, %v648
    %v3191 = vmul.f32 %v3187, %v652
    %v3192 = vmul.f32 %v3188, %v656
    %s3193 = scalar_lea.vmem %s6, 8
    %v3194 = vld [vmem:[%s3193] sm:$0xf]
    %v3195 = vld [vmem:[%s3193 + $0x4] sm:$0xf]
    %s3196 = scalar_lea.vmem %s7, 32
    %v3197 = vld [vmem:[%s3196] sm:$0xf]
    %v3198 = vld [vmem:[%s3196 + $0x4] sm:$0xf]
    %s3199 = scalar_lea.vmem %s7, 40
    %v3200 = vld [vmem:[%s3199] sm:$0xf]
    %v3201 = vld [vmem:[%s3199 + $0x4] sm:$0xf]
    %s3202 = scalar_lea.vmem %s7, 48
    %v3203 = vld [vmem:[%s3202] sm:$0xf]
    %v3204 = vld [vmem:[%s3202 + $0x4] sm:$0xf]
    %s3205 = scalar_lea.vmem %s7, 56
    %v3206 = vld [vmem:[%s3205] sm:$0xf]
    %v3207 = vld [vmem:[%s3205 + $0x4] sm:$0xf]
    %s3208 = scalar_lea.vmem [#allocation11], 32
    %v3209 = vld [vmem:[%s3208] sm:$0xf]
    %v3210 = vld [vmem:[%s3208 + $0x4] sm:$0xf]
    %s3211 = scalar_lea.vmem [#allocation11], 40
    %v3212 = vld [vmem:[%s3211] sm:$0xf]
    %v3213 = vld [vmem:[%s3211 + $0x4] sm:$0xf]
    %s3214 = scalar_lea.vmem [#allocation11], 48
    %v3215 = vld [vmem:[%s3214] sm:$0xf]
    %v3216 = vld [vmem:[%s3214 + $0x4] sm:$0xf]
    %s3217 = scalar_lea.vmem [#allocation11], 56
    %v3218 = vld [vmem:[%s3217] sm:$0xf]
    %v3219 = vld [vmem:[%s3217 + $0x4] sm:$0xf]
    %s3220 = scalar_lea.vmem %s9, 4
    %v3221 = vld [vmem:[%s3220] sm:$0xf]
    %v3222 = vpack.c.bf16 1.0, %v3189
    %v3223 = vpack.c.bf16 1.0, %v3190
    %v3224 = vpack.c.bf16 1.0, %v3191
    %v3225 = vpack.c.bf16 1.0, %v3192
    %v3228 = vunpack.c.l.b16 %v3194
    %v3229 = vunpack.c.l.b16 %v3195
    %v3230 = vpack.c.b16 %v3229, %v3228
    %v3232 = vsel %vm239, %v3230, 0
    %v3235 = vand.u32 %v3222, %v246
    %v3238 = vand.u32 %v3223, %v246
    %v3241 = vand.u32 %v3224, %v246
    %v3244 = vand.u32 %v3225, %v246
    %3246 = vmatprep.subr.bf16.mxu0 %v3238
    %3247 = vmatpush1.bf16.msra.mxu0 %v3235
    %3248 = vmatprep.subr.bf16.mxu0 0
    %3249 = vmatpush1.bf16.msra.mxu0 0
    %3250 = vmatprep.subr.bf16.mxu0 0
    %3251 = vmatpush1.bf16.msra.mxu0 0
    %3252 = vmatprep.subr.bf16.mxu0 0
    %3253 = vmatpush1.bf16.msra.mxu0 0
    %3254 = vmatprep.subr.bf16.mxu0 0
    %3255 = vmatpush1.bf16.msra.mxu0 0
    %3256 = vmatprep.subr.bf16.mxu0 0
    %3257 = vmatpush1.bf16.msra.mxu0 0
    %3258 = vmatprep.subr.bf16.mxu0 0
    %3259 = vmatpush1.bf16.msra.mxu0 0
    %3260 = vmatprep.subr.bf16.mxu0 0
    %3261 = vmatpush1.bf16.msra.mxu0 0
    %3262 = vmatprep.subr.bf16.mxu0 0
    %3263 = vmatpush1.bf16.msra.mxu0 0
    %3264 = vmatprep.subr.bf16.mxu0 0
    %3265 = vmatpush1.bf16.msra.mxu0 0
    %3266 = vmatprep.subr.bf16.mxu0 0
    %3267 = vmatpush1.bf16.msra.mxu0 0
    %3268 = vmatprep.subr.bf16.mxu0 0
    %3269 = vmatpush1.bf16.msra.mxu0 0
    %3270 = vmatprep.subr.bf16.mxu0 0
    %3271 = vmatpush1.bf16.msra.mxu0 0
    %3272 = vmatprep.subr.bf16.mxu0 0
    %3273 = vmatpush1.bf16.msra.mxu0 0
    %3274 = vmatprep.subr.bf16.mxu0 0
    %3275 = vmatpush1.bf16.msra.mxu0 0
    %3276 = vmatprep.subr.bf16.mxu0 0
    %3277 = vmatpush1.bf16.msra.mxu0 0
    %3278 = vmatprep.mubr.bf16.mxu0 0
    %3279 = vmatmul.mubr.bf16.gmra.mrb[0].mxu0 %v3232
    %v3280 = vpop.f32.mrb[0].mxu0
    %v3281 = vadd.f32 0.0, %v3280
    %v3282 = vpop.f32.mrb[0].mxu0
    %v3283 = vadd.f32 0.0, %v3282
    %v3284 = vpop.f32.mrb[0].mxu0
    %v3285 = vadd.f32 0.0, %v3284
    %v3286 = vpop.f32.mrb[0].mxu0
    %v3287 = vadd.f32 0.0, %v3286
    %3288 = vdwg.mxu0
    %3289 = vmatprep.subr.bf16.mxu0 %v3244
    %3290 = vmatpush1.bf16.msra.mxu0 %v3241
    %3291 = vmatprep.subr.bf16.mxu0 0
    %3292 = vmatpush1.bf16.msra.mxu0 0
    %3293 = vmatprep.subr.bf16.mxu0 0
    %3294 = vmatpush1.bf16.msra.mxu0 0
    %3295 = vmatprep.subr.bf16.mxu0 0
    %3296 = vmatpush1.bf16.msra.mxu0 0
    %3297 = vmatprep.subr.bf16.mxu0 0
    %3298 = vmatpush1.bf16.msra.mxu0 0
    %3299 = vmatprep.subr.bf16.mxu0 0
    %3300 = vmatpush1.bf16.msra.mxu0 0
    %3301 = vmatprep.subr.bf16.mxu0 0
    %3302 = vmatpush1.bf16.msra.mxu0 0
    %3303 = vmatprep.subr.bf16.mxu0 0
    %3304 = vmatpush1.bf16.msra.mxu0 0
    %3305 = vmatprep.subr.bf16.mxu0 0
    %3306 = vmatpush1.bf16.msra.mxu0 0
    %3307 = vmatprep.subr.bf16.mxu0 0
    %3308 = vmatpush1.bf16.msra.mxu0 0
    %3309 = vmatprep.subr.bf16.mxu0 0
    %3310 = vmatpush1.bf16.msra.mxu0 0
    %3311 = vmatprep.subr.bf16.mxu0 0
    %3312 = vmatpush1.bf16.msra.mxu0 0
    %3313 = vmatprep.subr.bf16.mxu0 0
    %3314 = vmatpush1.bf16.msra.mxu0 0
    %3315 = vmatprep.subr.bf16.mxu0 0
    %3316 = vmatpush1.bf16.msra.mxu0 0
    %3317 = vmatprep.subr.bf16.mxu0 0
    %3318 = vmatpush1.bf16.msra.mxu0 0
    %3319 = vmatprep.subr.bf16.mxu0 0
    %3320 = vmatpush1.bf16.msra.mxu0 0
    %3321 = vmatprep.mubr.bf16.mxu0 0
    %3322 = vmatmul.mubr.bf16.gmra.mrb[0].mxu0 %v3232
    %v3323 = vpop.f32.mrb[0].mxu0
    %v3324 = vadd.f32 0.0, %v3323
    %v3325 = vpop.f32.mrb[0].mxu0
    %v3326 = vadd.f32 0.0, %v3325
    %v3327 = vpop.f32.mrb[0].mxu0
    %v3328 = vadd.f32 0.0, %v3327
    %v3329 = vpop.f32.mrb[0].mxu0
    %v3330 = vadd.f32 0.0, %v3329
    %3331 = vdwg.mxu0
    %3332 = vrot.lane.b32.xlu0 %v3281, 1
    %v3333 = vpop.permute.xlu0 %3332
    %3334 = vrot.lane.b32.xlu0 %v3285, 1
    %v3335 = vpop.permute.xlu0 %3334
    %3336 = vrot.lane.b32.xlu0 %v3283, 1
    %v3337 = vpop.permute.xlu0 %3336
    %3338 = vrot.lane.b32.xlu0 %v3287, 1
    %v3339 = vpop.permute.xlu0 %3338
    %3340 = vrot.lane.b32.xlu0 %v3324, 1
    %v3341 = vpop.permute.xlu0 %3340
    %3342 = vrot.lane.b32.xlu0 %v3328, 1
    %v3343 = vpop.permute.xlu0 %3342
    %3344 = vrot.lane.b32.xlu0 %v3326, 1
    %v3345 = vpop.permute.xlu0 %3344
    %3346 = vrot.lane.b32.xlu0 %v3330, 1
    %v3347 = vpop.permute.xlu0 %3346
    %v3348 = vsel %vm361, %v3341, %v3345
    %v3349 = vsel %vm361, %v3343, %v3347
    %v3350 = vsel %vm361, %v3337, %v3341
    %v3351 = vsel %vm361, %v3339, %v3343
    %v3352 = vsel %vm361, %v3333, %v3337
    %v3353 = vsel %vm361, %v3335, %v3339
    %v3354 = vsel %vm361, %v3345, %v3333
    %v3355 = vsel %vm361, %v3347, %v3335
    %v3356 = vsel %vm173, %v3354, 0.0
    %v3357 = vsel %vm174, %v3352, 0.0
    %v3358 = vsel %vm175, %v3350, 0.0
    %v3359 = vsel %vm176, %v3348, 0.0
    %v3360 = vsel %vm173, %v3355, 0.0
    %v3361 = vsel %vm174, %v3353, 0.0
    %v3362 = vsel %vm175, %v3351, 0.0
    %v3363 = vsel %vm176, %v3349, 0.0
    %3364 = vrot.lane.b32.xlu0 %v3281, 127
    %v3365 = vpop.permute.xlu0 %3364
    %3366 = vrot.lane.b32.xlu0 %v3285, 127
    %v3367 = vpop.permute.xlu0 %3366
    %3368 = vrot.lane.b32.xlu0 %v3283, 127
    %v3369 = vpop.permute.xlu0 %3368
    %3370 = vrot.lane.b32.xlu0 %v3287, 127
    %v3371 = vpop.permute.xlu0 %3370
    %3372 = vrot.lane.b32.xlu0 %v3324, 127
    %v3373 = vpop.permute.xlu0 %3372
    %3374 = vrot.lane.b32.xlu0 %v3328, 127
    %v3375 = vpop.permute.xlu0 %3374
    %3376 = vrot.lane.b32.xlu0 %v3326, 127
    %v3377 = vpop.permute.xlu0 %3376
    %3378 = vrot.lane.b32.xlu0 %v3330, 127
    %v3379 = vpop.permute.xlu0 %3378
    %v3380 = vsel %vm394, %v3373, %v3377
    %v3381 = vsel %vm394, %v3375, %v3379
    %v3382 = vsel %vm394, %v3369, %v3373
    %v3383 = vsel %vm394, %v3371, %v3375
    %v3384 = vsel %vm394, %v3365, %v3369
    %v3385 = vsel %vm394, %v3367, %v3371
    %v3386 = vsel %vm394, %v3377, %v3365
    %v3387 = vsel %vm394, %v3379, %v3367
    %v3388 = vsel %vm189, %v3384, 0.0
    %v3389 = vsel %vm190, %v3382, 0.0
    %v3390 = vsel %vm191, %v3380, 0.0
    %v3391 = vsel %vm192, %v3386, 0.0
    %v3392 = vsel %vm189, %v3385, 0.0
    %v3393 = vsel %vm190, %v3383, 0.0
    %v3394 = vsel %vm191, %v3381, 0.0
    %v3395 = vsel %vm192, %v3387, 0.0
    %v3396 = vpack.c.bf16 %v3360, %v3356
    %v3397 = vpack.c.bf16 %v3361, %v3357
    %v3398 = vpack.c.bf16 %v3362, %v3358
    %v3399 = vpack.c.bf16 %v3363, %v3359
    %v3400 = vpack.c.bf16 %v3285, %v3281
    %v3401 = vpack.c.bf16 %v3287, %v3283
    %v3402 = vpack.c.bf16 %v3328, %v3324
    %v3403 = vpack.c.bf16 %v3330, %v3326
    %v3404 = vpack.c.bf16 %v3392, %v3388
    %v3405 = vpack.c.bf16 %v3393, %v3389
    %v3406 = vpack.c.bf16 %v3394, %v3390
    %v3407 = vpack.c.bf16 %v3395, %v3391
    %v3410 = vunpack.c.l.b16 %v3197
    %v3411 = vunpack.c.l.b16 %v3198
    %v3412 = vpack.c.b16 %v3411, %v3410
    %v3414 = vsel %vm429, %v3412, 0
    %3416 = vmatprep.subr.bf16.mxu0 %v3397
    %3417 = vmatpush1.bf16.msra.mxu0 %v3396
    %3418 = vmatprep.subr.bf16.mxu0 %v3401
    %3419 = vmatpush1.bf16.msra.mxu0 %v3400
    %3420 = vmatprep.subr.bf16.mxu0 %v3405
    %3421 = vmatpush1.bf16.msra.mxu0 %v3404
    %3422 = vmatprep.subr.bf16.mxu0 %v437
    %3423 = vmatpush1.bf16.msra.mxu0 %v437
    %3424 = vmatprep.subr.bf16.mxu0 0
    %3425 = vmatpush1.bf16.msra.mxu0 0
    %3426 = vmatprep.subr.bf16.mxu0 0
    %3427 = vmatpush1.bf16.msra.mxu0 0
    %3428 = vmatprep.subr.bf16.mxu0 0
    %3429 = vmatpush1.bf16.msra.mxu0 0
    %3430 = vmatprep.subr.bf16.mxu0 0
    %3431 = vmatpush1.bf16.msra.mxu0 0
    %3432 = vmatprep.subr.bf16.mxu0 0
    %3433 = vmatpush1.bf16.msra.mxu0 0
    %3434 = vmatprep.subr.bf16.mxu0 0
    %3435 = vmatpush1.bf16.msra.mxu0 0
    %3436 = vmatprep.subr.bf16.mxu0 0
    %3437 = vmatpush1.bf16.msra.mxu0 0
    %3438 = vmatprep.subr.bf16.mxu0 0
    %3439 = vmatpush1.bf16.msra.mxu0 0
    %3440 = vmatprep.subr.bf16.mxu0 0
    %3441 = vmatpush1.bf16.msra.mxu0 0
    %3442 = vmatprep.subr.bf16.mxu0 0
    %3443 = vmatpush1.bf16.msra.mxu0 0
    %3444 = vmatprep.subr.bf16.mxu0 0
    %3445 = vmatpush1.bf16.msra.mxu0 0
    %3446 = vmatprep.subr.bf16.mxu0 0
    %3447 = vmatpush1.bf16.msra.mxu0 0
    %3448 = vmatprep.mubr.bf16.mxu0 0
    %3449 = vmatmul.mubr.bf16.gmra.mrb[0].mxu0 %v3414
    %v3450 = vpop.f32.mrb[0].mxu0
    %v3451 = vadd.f32 0.0, %v3450
    %v3452 = vpop.f32.mrb[0].mxu0
    %v3453 = vadd.f32 0.0, %v3452
    %v3454 = vpop.f32.mrb[0].mxu0
    %v3455 = vadd.f32 0.0, %v3454
    %v3456 = vpop.f32.mrb[0].mxu0
    %v3457 = vadd.f32 0.0, %v3456
    %3458 = vdwg.mxu0
    %3459 = vmatprep.subr.bf16.mxu0 %v3399
    %3460 = vmatpush1.bf16.msra.mxu0 %v3398
    %3461 = vmatprep.subr.bf16.mxu0 %v3403
    %3462 = vmatpush1.bf16.msra.mxu0 %v3402
    %3463 = vmatprep.subr.bf16.mxu0 %v3407
    %3464 = vmatpush1.bf16.msra.mxu0 %v3406
    %3465 = vmatprep.subr.bf16.mxu0 %v437
    %3466 = vmatpush1.bf16.msra.mxu0 %v437
    %3467 = vmatprep.subr.bf16.mxu0 0
    %3468 = vmatpush1.bf16.msra.mxu0 0
    %3469 = vmatprep.subr.bf16.mxu0 0
    %3470 = vmatpush1.bf16.msra.mxu0 0
    %3471 = vmatprep.subr.bf16.mxu0 0
    %3472 = vmatpush1.bf16.msra.mxu0 0
    %3473 = vmatprep.subr.bf16.mxu0 0
    %3474 = vmatpush1.bf16.msra.mxu0 0
    %3475 = vmatprep.subr.bf16.mxu0 0
    %3476 = vmatpush1.bf16.msra.mxu0 0
    %3477 = vmatprep.subr.bf16.mxu0 0
    %3478 = vmatpush1.bf16.msra.mxu0 0
    %3479 = vmatprep.subr.bf16.mxu0 0
    %3480 = vmatpush1.bf16.msra.mxu0 0
    %3481 = vmatprep.subr.bf16.mxu0 0
    %3482 = vmatpush1.bf16.msra.mxu0 0
    %3483 = vmatprep.subr.bf16.mxu0 0
    %3484 = vmatpush1.bf16.msra.mxu0 0
    %3485 = vmatprep.subr.bf16.mxu0 0
    %3486 = vmatpush1.bf16.msra.mxu0 0
    %3487 = vmatprep.subr.bf16.mxu0 0
    %3488 = vmatpush1.bf16.msra.mxu0 0
    %3489 = vmatprep.subr.bf16.mxu0 0
    %3490 = vmatpush1.bf16.msra.mxu0 0
    %3491 = vmatprep.mubr.bf16.mxu0 0
    %3492 = vmatmul.mubr.bf16.gmra.mrb[0].mxu0 %v3414
    %v3493 = vpop.f32.mrb[0].mxu0
    %v3494 = vadd.f32 0.0, %v3493
    %v3495 = vpop.f32.mrb[0].mxu0
    %v3496 = vadd.f32 0.0, %v3495
    %v3497 = vpop.f32.mrb[0].mxu0
    %v3498 = vadd.f32 0.0, %v3497
    %v3499 = vpop.f32.mrb[0].mxu0
    %v3500 = vadd.f32 0.0, %v3499
    %3501 = vdwg.mxu0
    %v3502 = vmax.f32 %v3451, 0.0
    %v3503 = vmax.f32 %v3453, 0.0
    %v3504 = vmax.f32 %v3494, 0.0
    %v3505 = vmax.f32 %v3496, 0.0
    %v3506 = vmax.f32 %v3455, 0.0
    %v3507 = vmax.f32 %v3457, 0.0
    %v3508 = vmax.f32 %v3498, 0.0
    %v3509 = vmax.f32 %v3500, 0.0
    %v3510 = vpack.c.bf16 %v3506, %v3502
    %v3511 = vpack.c.bf16 %v3507, %v3503
    %v3512 = vpack.c.bf16 %v3508, %v3504
    %v3513 = vpack.c.bf16 %v3509, %v3505
    %v3516 = vunpack.c.l.b16 %v3209
    %v3517 = vunpack.c.l.b16 %v3210
    %v3518 = vpack.c.b16 %v3517, %v3516
    %v3520 = vsel %vm542, %v3518, 0
    %3522 = vmatprep.subr.bf16.mxu0 %v3511
    %3523 = vmatpush1.bf16.msra.mxu0 %v3510
    %3524 = vmatprep.subr.bf16.mxu0 %v437
    %3525 = vmatpush1.bf16.msra.mxu0 %v437
    %3526 = vmatprep.subr.bf16.mxu0 0
    %3527 = vmatpush1.bf16.msra.mxu0 0
    %3528 = vmatprep.subr.bf16.mxu0 0
    %3529 = vmatpush1.bf16.msra.mxu0 0
    %3530 = vmatprep.subr.bf16.mxu0 0
    %3531 = vmatpush1.bf16.msra.mxu0 0
    %3532 = vmatprep.subr.bf16.mxu0 0
    %3533 = vmatpush1.bf16.msra.mxu0 0
    %3534 = vmatprep.subr.bf16.mxu0 0
    %3535 = vmatpush1.bf16.msra.mxu0 0
    %3536 = vmatprep.subr.bf16.mxu0 0
    %3537 = vmatpush1.bf16.msra.mxu0 0
    %3538 = vmatprep.subr.bf16.mxu0 0
    %3539 = vmatpush1.bf16.msra.mxu0 0
    %3540 = vmatprep.subr.bf16.mxu0 0
    %3541 = vmatpush1.bf16.msra.mxu0 0
    %3542 = vmatprep.subr.bf16.mxu0 0
    %3543 = vmatpush1.bf16.msra.mxu0 0
    %3544 = vmatprep.subr.bf16.mxu0 0
    %3545 = vmatpush1.bf16.msra.mxu0 0
    %3546 = vmatprep.subr.bf16.mxu0 0
    %3547 = vmatpush1.bf16.msra.mxu0 0
    %3548 = vmatprep.subr.bf16.mxu0 0
    %3549 = vmatpush1.bf16.msra.mxu0 0
    %3550 = vmatprep.subr.bf16.mxu0 0
    %3551 = vmatpush1.bf16.msra.mxu0 0
    %3552 = vmatprep.subr.bf16.mxu0 0
    %3553 = vmatpush1.bf16.msra.mxu0 0
    %3554 = vmatprep.mubr.bf16.mxu0 0
    %3555 = vmatmul.mubr.bf16.gmra.mrb[0].mxu0 %v3520
    %v3556 = vpop.f32.mrb[0].mxu0
    %v3557 = vadd.f32 0.0, %v3556
    %v3558 = vpop.f32.mrb[0].mxu0
    %v3559 = vadd.f32 0.0, %v3558
    %v3560 = vpop.f32.mrb[0].mxu0
    %v3561 = vadd.f32 0.0, %v3560
    %v3562 = vpop.f32.mrb[0].mxu0
    %v3563 = vadd.f32 0.0, %v3562
    %3564 = vdwg.mxu0
    %3565 = vmatprep.subr.bf16.mxu0 %v3513
    %3566 = vmatpush1.bf16.msra.mxu0 %v3512
    %3567 = vmatprep.subr.bf16.mxu0 %v437
    %3568 = vmatpush1.bf16.msra.mxu0 %v437
    %3569 = vmatprep.subr.bf16.mxu0 0
    %3570 = vmatpush1.bf16.msra.mxu0 0
    %3571 = vmatprep.subr.bf16.mxu0 0
    %3572 = vmatpush1.bf16.msra.mxu0 0
    %3573 = vmatprep.subr.bf16.mxu0 0
    %3574 = vmatpush1.bf16.msra.mxu0 0
    %3575 = vmatprep.subr.bf16.mxu0 0
    %3576 = vmatpush1.bf16.msra.mxu0 0
    %3577 = vmatprep.subr.bf16.mxu0 0
    %3578 = vmatpush1.bf16.msra.mxu0 0
    %3579 = vmatprep.subr.bf16.mxu0 0
    %3580 = vmatpush1.bf16.msra.mxu0 0
    %3581 = vmatprep.subr.bf16.mxu0 0
    %3582 = vmatpush1.bf16.msra.mxu0 0
    %3583 = vmatprep.subr.bf16.mxu0 0
    %3584 = vmatpush1.bf16.msra.mxu0 0
    %3585 = vmatprep.subr.bf16.mxu0 0
    %3586 = vmatpush1.bf16.msra.mxu0 0
    %3587 = vmatprep.subr.bf16.mxu0 0
    %3588 = vmatpush1.bf16.msra.mxu0 0
    %3589 = vmatprep.subr.bf16.mxu0 0
    %3590 = vmatpush1.bf16.msra.mxu0 0
    %3591 = vmatprep.subr.bf16.mxu0 0
    %3592 = vmatpush1.bf16.msra.mxu0 0
    %3593 = vmatprep.subr.bf16.mxu0 0
    %3594 = vmatpush1.bf16.msra.mxu0 0
    %3595 = vmatprep.subr.bf16.mxu0 0
    %3596 = vmatpush1.bf16.msra.mxu0 0
    %3597 = vmatprep.mubr.bf16.mxu0 0
    %3598 = vmatmul.mubr.bf16.gmra.mrb[0].mxu0 %v3520
    %v3599 = vpop.f32.mrb[0].mxu0
    %v3600 = vadd.f32 0.0, %v3599
    %v3601 = vpop.f32.mrb[0].mxu0
    %v3602 = vadd.f32 0.0, %v3601
    %v3603 = vpop.f32.mrb[0].mxu0
    %v3604 = vadd.f32 0.0, %v3603
    %v3605 = vpop.f32.mrb[0].mxu0
    %v3606 = vadd.f32 0.0, %v3605
    %3607 = vdwg.mxu0
    %v3608 = vadd.f32 %v3281, %v3557
    %v3609 = vadd.f32 %v3283, %v3559
    %v3610 = vadd.f32 %v3324, %v3600
    %v3611 = vadd.f32 %v3326, %v3602
    %v3612 = vadd.f32 %v3285, %v3561
    %v3613 = vadd.f32 %v3287, %v3563
    %v3614 = vadd.f32 %v3328, %v3604
    %v3615 = vadd.f32 %v3330, %v3606
    %v3616 = vmul.f32 %v3608, %v644
    %v3617 = vmul.f32 %v3609, %v648
    %v3618 = vmul.f32 %v3610, %v652
    %v3619 = vmul.f32 %v3611, %v656
    %v3620 = vmul.f32 %v3612, %v644
    %v3621 = vmul.f32 %v3613, %v648
    %v3622 = vmul.f32 %v3614, %v652
    %v3623 = vmul.f32 %v3615, %v656
    %3624 = vrot.lane.b32.xlu0 %v3616, 2
    %v3625 = vpop.permute.xlu0 %3624
    %3626 = vrot.lane.b32.xlu0 %v3620, 2
    %v3627 = vpop.permute.xlu0 %3626
    %3628 = vrot.lane.b32.xlu0 %v3617, 2
    %v3629 = vpop.permute.xlu0 %3628
    %3630 = vrot.lane.b32.xlu0 %v3621, 2
    %v3631 = vpop.permute.xlu0 %3630
    %3632 = vrot.lane.b32.xlu0 %v3618, 2
    %v3633 = vpop.permute.xlu0 %3632
    %3634 = vrot.lane.b32.xlu0 %v3622, 2
    %v3635 = vpop.permute.xlu0 %3634
    %3636 = vrot.lane.b32.xlu0 %v3619, 2
    %v3637 = vpop.permute.xlu0 %3636
    %3638 = vrot.lane.b32.xlu0 %v3623, 2
    %v3639 = vpop.permute.xlu0 %3638
    %v3640 = vsel %vm685, %v3633, %v3637
    %v3641 = vsel %vm685, %v3635, %v3639
    %v3642 = vsel %vm685, %v3629, %v3633
    %v3643 = vsel %vm685, %v3631, %v3635
    %v3644 = vsel %vm685, %v3625, %v3629
    %v3645 = vsel %vm685, %v3627, %v3631
    %v3646 = vsel %vm685, %v3637, %v3625
    %v3647 = vsel %vm685, %v3639, %v3627
    %v3648 = vsel %vm177, %v3646, 0.0
    %v3649 = vsel %vm178, %v3644, 0.0
    %v3650 = vsel %vm179, %v3642, 0.0
    %v3651 = vsel %vm180, %v3640, 0.0
    %v3652 = vsel %vm177, %v3647, 0.0
    %v3653 = vsel %vm178, %v3645, 0.0
    %v3654 = vsel %vm179, %v3643, 0.0
    %v3655 = vsel %vm180, %v3641, 0.0
    %3656 = vrot.lane.b32.xlu0 %v3616, 126
    %v3657 = vpop.permute.xlu0 %3656
    %3658 = vrot.lane.b32.xlu0 %v3620, 126
    %v3659 = vpop.permute.xlu0 %3658
    %3660 = vrot.lane.b32.xlu0 %v3617, 126
    %v3661 = vpop.permute.xlu0 %3660
    %3662 = vrot.lane.b32.xlu0 %v3621, 126
    %v3663 = vpop.permute.xlu0 %3662
    %3664 = vrot.lane.b32.xlu0 %v3618, 126
    %v3665 = vpop.permute.xlu0 %3664
    %3666 = vrot.lane.b32.xlu0 %v3622, 126
    %v3667 = vpop.permute.xlu0 %3666
    %3668 = vrot.lane.b32.xlu0 %v3619, 126
    %v3669 = vpop.permute.xlu0 %3668
    %3670 = vrot.lane.b32.xlu0 %v3623, 126
    %v3671 = vpop.permute.xlu0 %3670
    %v3672 = vsel %vm718, %v3665, %v3669
    %v3673 = vsel %vm718, %v3667, %v3671
    %v3674 = vsel %vm718, %v3661, %v3665
    %v3675 = vsel %vm718, %v3663, %v3667
    %v3676 = vsel %vm718, %v3657, %v3661
    %v3677 = vsel %vm718, %v3659, %v3663
    %v3678 = vsel %vm718, %v3669, %v3657
    %v3679 = vsel %vm718, %v3671, %v3659
    %v3680 = vsel %vm193, %v3676, 0.0
    %v3681 = vsel %vm194, %v3674, 0.0
    %v3682 = vsel %vm195, %v3672, 0.0
    %v3683 = vsel %vm196, %v3678, 0.0
    %v3684 = vsel %vm193, %v3677, 0.0
    %v3685 = vsel %vm194, %v3675, 0.0
    %v3686 = vsel %vm195, %v3673, 0.0
    %v3687 = vsel %vm196, %v3679, 0.0
    %v3688 = vpack.c.bf16 %v3652, %v3648
    %v3689 = vpack.c.bf16 %v3653, %v3649
    %v3690 = vpack.c.bf16 %v3654, %v3650
    %v3691 = vpack.c.bf16 %v3655, %v3651
    %v3692 = vpack.c.bf16 %v3620, %v3616
    %v3693 = vpack.c.bf16 %v3621, %v3617
    %v3694 = vpack.c.bf16 %v3622, %v3618
    %v3695 = vpack.c.bf16 %v3623, %v3619
    %v3696 = vpack.c.bf16 %v3684, %v3680
    %v3697 = vpack.c.bf16 %v3685, %v3681
    %v3698 = vpack.c.bf16 %v3686, %v3682
    %v3699 = vpack.c.bf16 %v3687, %v3683
    %v3702 = vunpack.c.l.b16 %v3200
    %v3703 = vunpack.c.l.b16 %v3201
    %v3704 = vpack.c.b16 %v3703, %v3702
    %v3706 = vsel %vm429, %v3704, 0
    %3708 = vmatprep.subr.bf16.mxu0 %v3689
    %3709 = vmatpush1.bf16.msra.mxu0 %v3688
    %3710 = vmatprep.subr.bf16.mxu0 %v3693
    %3711 = vmatpush1.bf16.msra.mxu0 %v3692
    %3712 = vmatprep.subr.bf16.mxu0 %v3697
    %3713 = vmatpush1.bf16.msra.mxu0 %v3696
    %3714 = vmatprep.subr.bf16.mxu0 %v437
    %3715 = vmatpush1.bf16.msra.mxu0 %v437
    %3716 = vmatprep.subr.bf16.mxu0 0
    %3717 = vmatpush1.bf16.msra.mxu0 0
    %3718 = vmatprep.subr.bf16.mxu0 0
    %3719 = vmatpush1.bf16.msra.mxu0 0
    %3720 = vmatprep.subr.bf16.mxu0 0
    %3721 = vmatpush1.bf16.msra.mxu0 0
    %3722 = vmatprep.subr.bf16.mxu0 0
    %3723 = vmatpush1.bf16.msra.mxu0 0
    %3724 = vmatprep.subr.bf16.mxu0 0
    %3725 = vmatpush1.bf16.msra.mxu0 0
    %3726 = vmatprep.subr.bf16.mxu0 0
    %3727 = vmatpush1.bf16.msra.mxu0 0
    %3728 = vmatprep.subr.bf16.mxu0 0
    %3729 = vmatpush1.bf16.msra.mxu0 0
    %3730 = vmatprep.subr.bf16.mxu0 0
    %3731 = vmatpush1.bf16.msra.mxu0 0
    %3732 = vmatprep.subr.bf16.mxu0 0
    %3733 = vmatpush1.bf16.msra.mxu0 0
    %3734 = vmatprep.subr.bf16.mxu0 0
    %3735 = vmatpush1.bf16.msra.mxu0 0
    %3736 = vmatprep.subr.bf16.mxu0 0
    %3737 = vmatpush1.bf16.msra.mxu0 0
    %3738 = vmatprep.subr.bf16.mxu0 0
    %3739 = vmatpush1.bf16.msra.mxu0 0
    %3740 = vmatprep.mubr.bf16.mxu0 0
    %3741 = vmatmul.mubr.bf16.gmra.mrb[0].mxu0 %v3706
    %v3742 = vpop.f32.mrb[0].mxu0
    %v3743 = vadd.f32 0.0, %v3742
    %v3744 = vpop.f32.mrb[0].mxu0
    %v3745 = vadd.f32 0.0, %v3744
    %v3746 = vpop.f32.mrb[0].mxu0
    %v3747 = vadd.f32 0.0, %v3746
    %v3748 = vpop.f32.mrb[0].mxu0
    %v3749 = vadd.f32 0.0, %v3748
    %3750 = vdwg.mxu0
    %3751 = vmatprep.subr.bf16.mxu0 %v3691
    %3752 = vmatpush1.bf16.msra.mxu0 %v3690
    %3753 = vmatprep.subr.bf16.mxu0 %v3695
    %3754 = vmatpush1.bf16.msra.mxu0 %v3694
    %3755 = vmatprep.subr.bf16.mxu0 %v3699
    %3756 = vmatpush1.bf16.msra.mxu0 %v3698
    %3757 = vmatprep.subr.bf16.mxu0 %v437
    %3758 = vmatpush1.bf16.msra.mxu0 %v437
    %3759 = vmatprep.subr.bf16.mxu0 0
    %3760 = vmatpush1.bf16.msra.mxu0 0
    %3761 = vmatprep.subr.bf16.mxu0 0
    %3762 = vmatpush1.bf16.msra.mxu0 0
    %3763 = vmatprep.subr.bf16.mxu0 0
    %3764 = vmatpush1.bf16.msra.mxu0 0
    %3765 = vmatprep.subr.bf16.mxu0 0
    %3766 = vmatpush1.bf16.msra.mxu0 0
    %3767 = vmatprep.subr.bf16.mxu0 0
    %3768 = vmatpush1.bf16.msra.mxu0 0
    %3769 = vmatprep.subr.bf16.mxu0 0
    %3770 = vmatpush1.bf16.msra.mxu0 0
    %3771 = vmatprep.subr.bf16.mxu0 0
    %3772 = vmatpush1.bf16.msra.mxu0 0
    %3773 = vmatprep.subr.bf16.mxu0 0
    %3774 = vmatpush1.bf16.msra.mxu0 0
    %3775 = vmatprep.subr.bf16.mxu0 0
    %3776 = vmatpush1.bf16.msra.mxu0 0
    %3777 = vmatprep.subr.bf16.mxu0 0
    %3778 = vmatpush1.bf16.msra.mxu0 0
    %3779 = vmatprep.subr.bf16.mxu0 0
    %3780 = vmatpush1.bf16.msra.mxu0 0
    %3781 = vmatprep.subr.bf16.mxu0 0
    %3782 = vmatpush1.bf16.msra.mxu0 0
    %3783 = vmatprep.mubr.bf16.mxu0 0
    %3784 = vmatmul.mubr.bf16.gmra.mrb[0].mxu0 %v3706
    %v3785 = vpop.f32.mrb[0].mxu0
    %v3786 = vadd.f32 0.0, %v3785
    %v3787 = vpop.f32.mrb[0].mxu0
    %v3788 = vadd.f32 0.0, %v3787
    %v3789 = vpop.f32.mrb[0].mxu0
    %v3790 = vadd.f32 0.0, %v3789
    %v3791 = vpop.f32.mrb[0].mxu0
    %v3792 = vadd.f32 0.0, %v3791
    %3793 = vdwg.mxu0
    %v3794 = vmax.f32 %v3743, 0.0
    %v3795 = vmax.f32 %v3745, 0.0
    %v3796 = vmax.f32 %v3786, 0.0
    %v3797 = vmax.f32 %v3788, 0.0
    %v3798 = vmax.f32 %v3747, 0.0
    %v3799 = vmax.f32 %v3749, 0.0
    %v3800 = vmax.f32 %v3790, 0.0
    %v3801 = vmax.f32 %v3792, 0.0
    %v3802 = vpack.c.bf16 %v3798, %v3794
    %v3803 = vpack.c.bf16 %v3799, %v3795
    %v3804 = vpack.c.bf16 %v3800, %v3796
    %v3805 = vpack.c.bf16 %v3801, %v3797
    %v3808 = vunpack.c.l.b16 %v3212
    %v3809 = vunpack.c.l.b16 %v3213
    %v3810 = vpack.c.b16 %v3809, %v3808
    %v3812 = vsel %vm542, %v3810, 0
    %3814 = vmatprep.subr.bf16.mxu0 %v3803
    %3815 = vmatpush1.bf16.msra.mxu0 %v3802
    %3816 = vmatprep.subr.bf16.mxu0 %v437
    %3817 = vmatpush1.bf16.msra.mxu0 %v437
    %3818 = vmatprep.subr.bf16.mxu0 0
    %3819 = vmatpush1.bf16.msra.mxu0 0
    %3820 = vmatprep.subr.bf16.mxu0 0
    %3821 = vmatpush1.bf16.msra.mxu0 0
    %3822 = vmatprep.subr.bf16.mxu0 0
    %3823 = vmatpush1.bf16.msra.mxu0 0
    %3824 = vmatprep.subr.bf16.mxu0 0
    %3825 = vmatpush1.bf16.msra.mxu0 0
    %3826 = vmatprep.subr.bf16.mxu0 0
    %3827 = vmatpush1.bf16.msra.mxu0 0
    %3828 = vmatprep.subr.bf16.mxu0 0
    %3829 = vmatpush1.bf16.msra.mxu0 0
    %3830 = vmatprep.subr.bf16.mxu0 0
    %3831 = vmatpush1.bf16.msra.mxu0 0
    %3832 = vmatprep.subr.bf16.mxu0 0
    %3833 = vmatpush1.bf16.msra.mxu0 0
    %3834 = vmatprep.subr.bf16.mxu0 0
    %3835 = vmatpush1.bf16.msra.mxu0 0
    %3836 = vmatprep.subr.bf16.mxu0 0
    %3837 = vmatpush1.bf16.msra.mxu0 0
    %3838 = vmatprep.subr.bf16.mxu0 0
    %3839 = vmatpush1.bf16.msra.mxu0 0
    %3840 = vmatprep.subr.bf16.mxu0 0
    %3841 = vmatpush1.bf16.msra.mxu0 0
    %3842 = vmatprep.subr.bf16.mxu0 0
    %3843 = vmatpush1.bf16.msra.mxu0 0
    %3844 = vmatprep.subr.bf16.mxu0 0
    %3845 = vmatpush1.bf16.msra.mxu0 0
    %3846 = vmatprep.mubr.bf16.mxu0 0
    %3847 = vmatmul.mubr.bf16.gmra.mrb[0].mxu0 %v3812
    %v3848 = vpop.f32.mrb[0].mxu0
    %v3849 = vadd.f32 0.0, %v3848
    %v3850 = vpop.f32.mrb[0].mxu0
    %v3851 = vadd.f32 0.0, %v3850
    %v3852 = vpop.f32.mrb[0].mxu0
    %v3853 = vadd.f32 0.0, %v3852
    %v3854 = vpop.f32.mrb[0].mxu0
    %v3855 = vadd.f32 0.0, %v3854
    %3856 = vdwg.mxu0
    %3857 = vmatprep.subr.bf16.mxu0 %v3805
    %3858 = vmatpush1.bf16.msra.mxu0 %v3804
    %3859 = vmatprep.subr.bf16.mxu0 %v437
    %3860 = vmatpush1.bf16.msra.mxu0 %v437
    %3861 = vmatprep.subr.bf16.mxu0 0
    %3862 = vmatpush1.bf16.msra.mxu0 0
    %3863 = vmatprep.subr.bf16.mxu0 0
    %3864 = vmatpush1.bf16.msra.mxu0 0
    %3865 = vmatprep.subr.bf16.mxu0 0
    %3866 = vmatpush1.bf16.msra.mxu0 0
    %3867 = vmatprep.subr.bf16.mxu0 0
    %3868 = vmatpush1.bf16.msra.mxu0 0
    %3869 = vmatprep.subr.bf16.mxu0 0
    %3870 = vmatpush1.bf16.msra.mxu0 0
    %3871 = vmatprep.subr.bf16.mxu0 0
    %3872 = vmatpush1.bf16.msra.mxu0 0
    %3873 = vmatprep.subr.bf16.mxu0 0
    %3874 = vmatpush1.bf16.msra.mxu0 0
    %3875 = vmatprep.subr.bf16.mxu0 0
    %3876 = vmatpush1.bf16.msra.mxu0 0
    %3877 = vmatprep.subr.bf16.mxu0 0
    %3878 = vmatpush1.bf16.msra.mxu0 0
    %3879 = vmatprep.subr.bf16.mxu0 0
    %3880 = vmatpush1.bf16.msra.mxu0 0
    %3881 = vmatprep.subr.bf16.mxu0 0
    %3882 = vmatpush1.bf16.msra.mxu0 0
    %3883 = vmatprep.subr.bf16.mxu0 0
    %3884 = vmatpush1.bf16.msra.mxu0 0
    %3885 = vmatprep.subr.bf16.mxu0 0
    %3886 = vmatpush1.bf16.msra.mxu0 0
    %3887 = vmatprep.subr.bf16.mxu0 0
    %3888 = vmatpush1.bf16.msra.mxu0 0
    %3889 = vmatprep.mubr.bf16.mxu0 0
    %3890 = vmatmul.mubr.bf16.gmra.mrb[0].mxu0 %v3812
    %v3891 = vpop.f32.mrb[0].mxu0
    %v3892 = vadd.f32 0.0, %v3891
    %v3893 = vpop.f32.mrb[0].mxu0
    %v3894 = vadd.f32 0.0, %v3893
    %v3895 = vpop.f32.mrb[0].mxu0
    %v3896 = vadd.f32 0.0, %v3895
    %v3897 = vpop.f32.mrb[0].mxu0
    %v3898 = vadd.f32 0.0, %v3897
    %3899 = vdwg.mxu0
    %v3900 = vadd.f32 %v3616, %v3849
    %v3901 = vadd.f32 %v3617, %v3851
    %v3902 = vadd.f32 %v3618, %v3892
    %v3903 = vadd.f32 %v3619, %v3894
    %v3904 = vadd.f32 %v3620, %v3853
    %v3905 = vadd.f32 %v3621, %v3855
    %v3906 = vadd.f32 %v3622, %v3896
    %v3907 = vadd.f32 %v3623, %v3898
    %v3908 = vmul.f32 %v3900, %v644
    %v3909 = vmul.f32 %v3901, %v648
    %v3910 = vmul.f32 %v3902, %v652
    %v3911 = vmul.f32 %v3903, %v656
    %v3912 = vmul.f32 %v3904, %v644
    %v3913 = vmul.f32 %v3905, %v648
    %v3914 = vmul.f32 %v3906, %v652
    %v3915 = vmul.f32 %v3907, %v656
    %3916 = vrot.lane.b32.xlu0 %v3908, 4
    %v3917 = vpop.permute.xlu0 %3916
    %3918 = vrot.lane.b32.xlu0 %v3912, 4
    %v3919 = vpop.permute.xlu0 %3918
    %3920 = vrot.lane.b32.xlu0 %v3909, 4
    %v3921 = vpop.permute.xlu0 %3920
    %3922 = vrot.lane.b32.xlu0 %v3913, 4
    %v3923 = vpop.permute.xlu0 %3922
    %3924 = vrot.lane.b32.xlu0 %v3910, 4
    %v3925 = vpop.permute.xlu0 %3924
    %3926 = vrot.lane.b32.xlu0 %v3914, 4
    %v3927 = vpop.permute.xlu0 %3926
    %3928 = vrot.lane.b32.xlu0 %v3911, 4
    %v3929 = vpop.permute.xlu0 %3928
    %3930 = vrot.lane.b32.xlu0 %v3915, 4
    %v3931 = vpop.permute.xlu0 %3930
    %v3932 = vsel %vm979, %v3925, %v3929
    %v3933 = vsel %vm979, %v3927, %v3931
    %v3934 = vsel %vm979, %v3921, %v3925
    %v3935 = vsel %vm979, %v3923, %v3927
    %v3936 = vsel %vm979, %v3917, %v3921
    %v3937 = vsel %vm979, %v3919, %v3923
    %v3938 = vsel %vm979, %v3929, %v3917
    %v3939 = vsel %vm979, %v3931, %v3919
    %v3940 = vsel %vm181, %v3938, 0.0
    %v3941 = vsel %vm182, %v3936, 0.0
    %v3942 = vsel %vm183, %v3934, 0.0
    %v3943 = vsel %vm184, %v3932, 0.0
    %v3944 = vsel %vm181, %v3939, 0.0
    %v3945 = vsel %vm182, %v3937, 0.0
    %v3946 = vsel %vm183, %v3935, 0.0
    %v3947 = vsel %vm184, %v3933, 0.0
    %3948 = vrot.lane.b32.xlu0 %v3908, 124
    %v3949 = vpop.permute.xlu0 %3948
    %3950 = vrot.lane.b32.xlu0 %v3912, 124
    %v3951 = vpop.permute.xlu0 %3950
    %3952 = vrot.lane.b32.xlu0 %v3909, 124
    %v3953 = vpop.permute.xlu0 %3952
    %3954 = vrot.lane.b32.xlu0 %v3913, 124
    %v3955 = vpop.permute.xlu0 %3954
    %3956 = vrot.lane.b32.xlu0 %v3910, 124
    %v3957 = vpop.permute.xlu0 %3956
    %3958 = vrot.lane.b32.xlu0 %v3914, 124
    %v3959 = vpop.permute.xlu0 %3958
    %3960 = vrot.lane.b32.xlu0 %v3911, 124
    %v3961 = vpop.permute.xlu0 %3960
    %3962 = vrot.lane.b32.xlu0 %v3915, 124
    %v3963 = vpop.permute.xlu0 %3962
    %v3964 = vsel %vm1012, %v3957, %v3961
    %v3965 = vsel %vm1012, %v3959, %v3963
    %v3966 = vsel %vm1012, %v3953, %v3957
    %v3967 = vsel %vm1012, %v3955, %v3959
    %v3968 = vsel %vm1012, %v3949, %v3953
    %v3969 = vsel %vm1012, %v3951, %v3955
    %v3970 = vsel %vm1012, %v3961, %v3949
    %v3971 = vsel %vm1012, %v3963, %v3951
    %v3972 = vsel %vm197, %v3968, 0.0
    %v3973 = vsel %vm198, %v3966, 0.0
    %v3974 = vsel %vm199, %v3964, 0.0
    %v3975 = vsel %vm200, %v3970, 0.0
    %v3976 = vsel %vm197, %v3969, 0.0
    %v3977 = vsel %vm198, %v3967, 0.0
    %v3978 = vsel %vm199, %v3965, 0.0
    %v3979 = vsel %vm200, %v3971, 0.0
    %v3980 = vpack.c.bf16 %v3944, %v3940
    %v3981 = vpack.c.bf16 %v3945, %v3941
    %v3982 = vpack.c.bf16 %v3946, %v3942
    %v3983 = vpack.c.bf16 %v3947, %v3943
    %v3984 = vpack.c.bf16 %v3912, %v3908
    %v3985 = vpack.c.bf16 %v3913, %v3909
    %v3986 = vpack.c.bf16 %v3914, %v3910
    %v3987 = vpack.c.bf16 %v3915, %v3911
    %v3988 = vpack.c.bf16 %v3976, %v3972
    %v3989 = vpack.c.bf16 %v3977, %v3973
    %v3990 = vpack.c.bf16 %v3978, %v3974
    %v3991 = vpack.c.bf16 %v3979, %v3975
    %v3994 = vunpack.c.l.b16 %v3203
    %v3995 = vunpack.c.l.b16 %v3204
    %v3996 = vpack.c.b16 %v3995, %v3994
    %v3998 = vsel %vm429, %v3996, 0
    %4000 = vmatprep.subr.bf16.mxu0 %v3981
    %4001 = vmatpush1.bf16.msra.mxu0 %v3980
    %4002 = vmatprep.subr.bf16.mxu0 %v3985
    %4003 = vmatpush1.bf16.msra.mxu0 %v3984
    %4004 = vmatprep.subr.bf16.mxu0 %v3989
    %4005 = vmatpush1.bf16.msra.mxu0 %v3988
    %4006 = vmatprep.subr.bf16.mxu0 %v437
    %4007 = vmatpush1.bf16.msra.mxu0 %v437
    %4008 = vmatprep.subr.bf16.mxu0 0
    %4009 = vmatpush1.bf16.msra.mxu0 0
    %4010 = vmatprep.subr.bf16.mxu0 0
    %4011 = vmatpush1.bf16.msra.mxu0 0
    %4012 = vmatprep.subr.bf16.mxu0 0
    %4013 = vmatpush1.bf16.msra.mxu0 0
    %4014 = vmatprep.subr.bf16.mxu0 0
    %4015 = vmatpush1.bf16.msra.mxu0 0
    %4016 = vmatprep.subr.bf16.mxu0 0
    %4017 = vmatpush1.bf16.msra.mxu0 0
    %4018 = vmatprep.subr.bf16.mxu0 0
    %4019 = vmatpush1.bf16.msra.mxu0 0
    %4020 = vmatprep.subr.bf16.mxu0 0
    %4021 = vmatpush1.bf16.msra.mxu0 0
    %4022 = vmatprep.subr.bf16.mxu0 0
    %4023 = vmatpush1.bf16.msra.mxu0 0
    %4024 = vmatprep.subr.bf16.mxu0 0
    %4025 = vmatpush1.bf16.msra.mxu0 0
    %4026 = vmatprep.subr.bf16.mxu0 0
    %4027 = vmatpush1.bf16.msra.mxu0 0
    %4028 = vmatprep.subr.bf16.mxu0 0
    %4029 = vmatpush1.bf16.msra.mxu0 0
    %4030 = vmatprep.subr.bf16.mxu0 0
    %4031 = vmatpush1.bf16.msra.mxu0 0
    %4032 = vmatprep.mubr.bf16.mxu0 0
    %4033 = vmatmul.mubr.bf16.gmra.mrb[0].mxu0 %v3998
    %v4034 = vpop.f32.mrb[0].mxu0
    %v4035 = vadd.f32 0.0, %v4034
    %v4036 = vpop.f32.mrb[0].mxu0
    %v4037 = vadd.f32 0.0, %v4036
    %v4038 = vpop.f32.mrb[0].mxu0
    %v4039 = vadd.f32 0.0, %v4038
    %v4040 = vpop.f32.mrb[0].mxu0
    %v4041 = vadd.f32 0.0, %v4040
    %4042 = vdwg.mxu0
    %4043 = vmatprep.subr.bf16.mxu0 %v3983
    %4044 = vmatpush1.bf16.msra.mxu0 %v3982
    %4045 = vmatprep.subr.bf16.mxu0 %v3987
    %4046 = vmatpush1.bf16.msra.mxu0 %v3986
    %4047 = vmatprep.subr.bf16.mxu0 %v3991
    %4048 = vmatpush1.bf16.msra.mxu0 %v3990
    %4049 = vmatprep.subr.bf16.mxu0 %v437
    %4050 = vmatpush1.bf16.msra.mxu0 %v437
    %4051 = vmatprep.subr.bf16.mxu0 0
    %4052 = vmatpush1.bf16.msra.mxu0 0
    %4053 = vmatprep.subr.bf16.mxu0 0
    %4054 = vmatpush1.bf16.msra.mxu0 0
    %4055 = vmatprep.subr.bf16.mxu0 0
    %4056 = vmatpush1.bf16.msra.mxu0 0
    %4057 = vmatprep.subr.bf16.mxu0 0
    %4058 = vmatpush1.bf16.msra.mxu0 0
    %4059 = vmatprep.subr.bf16.mxu0 0
    %4060 = vmatpush1.bf16.msra.mxu0 0
    %4061 = vmatprep.subr.bf16.mxu0 0
    %4062 = vmatpush1.bf16.msra.mxu0 0
    %4063 = vmatprep.subr.bf16.mxu0 0
    %4064 = vmatpush1.bf16.msra.mxu0 0
    %4065 = vmatprep.subr.bf16.mxu0 0
    %4066 = vmatpush1.bf16.msra.mxu0 0
    %4067 = vmatprep.subr.bf16.mxu0 0
    %4068 = vmatpush1.bf16.msra.mxu0 0
    %4069 = vmatprep.subr.bf16.mxu0 0
    %4070 = vmatpush1.bf16.msra.mxu0 0
    %4071 = vmatprep.subr.bf16.mxu0 0
    %4072 = vmatpush1.bf16.msra.mxu0 0
    %4073 = vmatprep.subr.bf16.mxu0 0
    %4074 = vmatpush1.bf16.msra.mxu0 0
    %4075 = vmatprep.mubr.bf16.mxu0 0
    %4076 = vmatmul.mubr.bf16.gmra.mrb[0].mxu0 %v3998
    %v4077 = vpop.f32.mrb[0].mxu0
    %v4078 = vadd.f32 0.0, %v4077
    %v4079 = vpop.f32.mrb[0].mxu0
    %v4080 = vadd.f32 0.0, %v4079
    %v4081 = vpop.f32.mrb[0].mxu0
    %v4082 = vadd.f32 0.0, %v4081
    %v4083 = vpop.f32.mrb[0].mxu0
    %v4084 = vadd.f32 0.0, %v4083
    %4085 = vdwg.mxu0
    %v4086 = vmax.f32 %v4035, 0.0
    %v4087 = vmax.f32 %v4037, 0.0
    %v4088 = vmax.f32 %v4078, 0.0
    %v4089 = vmax.f32 %v4080, 0.0
    %v4090 = vmax.f32 %v4039, 0.0
    %v4091 = vmax.f32 %v4041, 0.0
    %v4092 = vmax.f32 %v4082, 0.0
    %v4093 = vmax.f32 %v4084, 0.0
    %v4094 = vpack.c.bf16 %v4090, %v4086
    %v4095 = vpack.c.bf16 %v4091, %v4087
    %v4096 = vpack.c.bf16 %v4092, %v4088
    %v4097 = vpack.c.bf16 %v4093, %v4089
    %v4100 = vunpack.c.l.b16 %v3215
    %v4101 = vunpack.c.l.b16 %v3216
    %v4102 = vpack.c.b16 %v4101, %v4100
    %v4104 = vsel %vm542, %v4102, 0
    %4106 = vmatprep.subr.bf16.mxu0 %v4095
    %4107 = vmatpush1.bf16.msra.mxu0 %v4094
    %4108 = vmatprep.subr.bf16.mxu0 %v437
    %4109 = vmatpush1.bf16.msra.mxu0 %v437
    %4110 = vmatprep.subr.bf16.mxu0 0
    %4111 = vmatpush1.bf16.msra.mxu0 0
    %4112 = vmatprep.subr.bf16.mxu0 0
    %4113 = vmatpush1.bf16.msra.mxu0 0
    %4114 = vmatprep.subr.bf16.mxu0 0
    %4115 = vmatpush1.bf16.msra.mxu0 0
    %4116 = vmatprep.subr.bf16.mxu0 0
    %4117 = vmatpush1.bf16.msra.mxu0 0
    %4118 = vmatprep.subr.bf16.mxu0 0
    %4119 = vmatpush1.bf16.msra.mxu0 0
    %4120 = vmatprep.subr.bf16.mxu0 0
    %4121 = vmatpush1.bf16.msra.mxu0 0
    %4122 = vmatprep.subr.bf16.mxu0 0
    %4123 = vmatpush1.bf16.msra.mxu0 0
    %4124 = vmatprep.subr.bf16.mxu0 0
    %4125 = vmatpush1.bf16.msra.mxu0 0
    %4126 = vmatprep.subr.bf16.mxu0 0
    %4127 = vmatpush1.bf16.msra.mxu0 0
    %4128 = vmatprep.subr.bf16.mxu0 0
    %4129 = vmatpush1.bf16.msra.mxu0 0
    %4130 = vmatprep.subr.bf16.mxu0 0
    %4131 = vmatpush1.bf16.msra.mxu0 0
    %4132 = vmatprep.subr.bf16.mxu0 0
    %4133 = vmatpush1.bf16.msra.mxu0 0
    %4134 = vmatprep.subr.bf16.mxu0 0
    %4135 = vmatpush1.bf16.msra.mxu0 0
    %4136 = vmatprep.subr.bf16.mxu0 0
    %4137 = vmatpush1.bf16.msra.mxu0 0
    %4138 = vmatprep.mubr.bf16.mxu0 0
    %4139 = vmatmul.mubr.bf16.gmra.mrb[0].mxu0 %v4104
    %v4140 = vpop.f32.mrb[0].mxu0
    %v4141 = vadd.f32 0.0, %v4140
    %v4142 = vpop.f32.mrb[0].mxu0
    %v4143 = vadd.f32 0.0, %v4142
    %v4144 = vpop.f32.mrb[0].mxu0
    %v4145 = vadd.f32 0.0, %v4144
    %v4146 = vpop.f32.mrb[0].mxu0
    %v4147 = vadd.f32 0.0, %v4146
    %4148 = vdwg.mxu0
    %4149 = vmatprep.subr.bf16.mxu0 %v4097
    %4150 = vmatpush1.bf16.msra.mxu0 %v4096
    %4151 = vmatprep.subr.bf16.mxu0 %v437
    %4152 = vmatpush1.bf16.msra.mxu0 %v437
    %4153 = vmatprep.subr.bf16.mxu0 0
    %4154 = vmatpush1.bf16.msra.mxu0 0
    %4155 = vmatprep.subr.bf16.mxu0 0
    %4156 = vmatpush1.bf16.msra.mxu0 0
    %4157 = vmatprep.subr.bf16.mxu0 0
    %4158 = vmatpush1.bf16.msra.mxu0 0
    %4159 = vmatprep.subr.bf16.mxu0 0
    %4160 = vmatpush1.bf16.msra.mxu0 0
    %4161 = vmatprep.subr.bf16.mxu0 0
    %4162 = vmatpush1.bf16.msra.mxu0 0
    %4163 = vmatprep.subr.bf16.mxu0 0
    %4164 = vmatpush1.bf16.msra.mxu0 0
    %4165 = vmatprep.subr.bf16.mxu0 0
    %4166 = vmatpush1.bf16.msra.mxu0 0
    %4167 = vmatprep.subr.bf16.mxu0 0
    %4168 = vmatpush1.bf16.msra.mxu0 0
    %4169 = vmatprep.subr.bf16.mxu0 0
    %4170 = vmatpush1.bf16.msra.mxu0 0
    %4171 = vmatprep.subr.bf16.mxu0 0
    %4172 = vmatpush1.bf16.msra.mxu0 0
    %4173 = vmatprep.subr.bf16.mxu0 0
    %4174 = vmatpush1.bf16.msra.mxu0 0
    %4175 = vmatprep.subr.bf16.mxu0 0
    %4176 = vmatpush1.bf16.msra.mxu0 0
    %4177 = vmatprep.subr.bf16.mxu0 0
    %4178 = vmatpush1.bf16.msra.mxu0 0
    %4179 = vmatprep.subr.bf16.mxu0 0
    %4180 = vmatpush1.bf16.msra.mxu0 0
    %4181 = vmatprep.mubr.bf16.mxu0 0
    %4182 = vmatmul.mubr.bf16.gmra.mrb[0].mxu0 %v4104
    %v4183 = vpop.f32.mrb[0].mxu0
    %v4184 = vadd.f32 0.0, %v4183
    %v4185 = vpop.f32.mrb[0].mxu0
    %v4186 = vadd.f32 0.0, %v4185
    %v4187 = vpop.f32.mrb[0].mxu0
    %v4188 = vadd.f32 0.0, %v4187
    %v4189 = vpop.f32.mrb[0].mxu0
    %v4190 = vadd.f32 0.0, %v4189
    %4191 = vdwg.mxu0
    %v4192 = vadd.f32 %v3908, %v4141
    %v4193 = vadd.f32 %v3909, %v4143
    %v4194 = vadd.f32 %v3910, %v4184
    %v4195 = vadd.f32 %v3911, %v4186
    %v4196 = vadd.f32 %v3912, %v4145
    %v4197 = vadd.f32 %v3913, %v4147
    %v4198 = vadd.f32 %v3914, %v4188
    %v4199 = vadd.f32 %v3915, %v4190
    %v4200 = vmul.f32 %v4192, %v644
    %v4201 = vmul.f32 %v4193, %v648
    %v4202 = vmul.f32 %v4194, %v652
    %v4203 = vmul.f32 %v4195, %v656
    %v4204 = vmul.f32 %v4196, %v644
    %v4205 = vmul.f32 %v4197, %v648
    %v4206 = vmul.f32 %v4198, %v652
    %v4207 = vmul.f32 %v4199, %v656
    %4208 = vrot.lane.b32.xlu0 %v4200, 8
    %v4209 = vpop.permute.xlu0 %4208
    %4210 = vrot.lane.b32.xlu0 %v4204, 8
    %v4211 = vpop.permute.xlu0 %4210
    %4212 = vrot.lane.b32.xlu0 %v4201, 8
    %v4213 = vpop.permute.xlu0 %4212
    %4214 = vrot.lane.b32.xlu0 %v4205, 8
    %v4215 = vpop.permute.xlu0 %4214
    %4216 = vrot.lane.b32.xlu0 %v4202, 8
    %v4217 = vpop.permute.xlu0 %4216
    %4218 = vrot.lane.b32.xlu0 %v4206, 8
    %v4219 = vpop.permute.xlu0 %4218
    %4220 = vrot.lane.b32.xlu0 %v4203, 8
    %v4221 = vpop.permute.xlu0 %4220
    %4222 = vrot.lane.b32.xlu0 %v4207, 8
    %v4223 = vpop.permute.xlu0 %4222
    %v4224 = vsel %vm1273, %v4217, %v4221
    %v4225 = vsel %vm1273, %v4219, %v4223
    %v4226 = vsel %vm1273, %v4213, %v4217
    %v4227 = vsel %vm1273, %v4215, %v4219
    %v4228 = vsel %vm1273, %v4209, %v4213
    %v4229 = vsel %vm1273, %v4211, %v4215
    %v4230 = vsel %vm1273, %v4221, %v4209
    %v4231 = vsel %vm1273, %v4223, %v4211
    %v4232 = vsel %vm185, %v4230, 0.0
    %v4233 = vsel %vm186, %v4228, 0.0
    %v4234 = vsel %vm187, %v4226, 0.0
    %v4235 = vsel %vm188, %v4224, 0.0
    %v4236 = vsel %vm185, %v4231, 0.0
    %v4237 = vsel %vm186, %v4229, 0.0
    %v4238 = vsel %vm187, %v4227, 0.0
    %v4239 = vsel %vm188, %v4225, 0.0
    %4240 = vrot.lane.b32.xlu0 %v4200, 120
    %v4241 = vpop.permute.xlu0 %4240
    %4242 = vrot.lane.b32.xlu0 %v4204, 120
    %v4243 = vpop.permute.xlu0 %4242
    %4244 = vrot.lane.b32.xlu0 %v4201, 120
    %v4245 = vpop.permute.xlu0 %4244
    %4246 = vrot.lane.b32.xlu0 %v4205, 120
    %v4247 = vpop.permute.xlu0 %4246
    %4248 = vrot.lane.b32.xlu0 %v4202, 120
    %v4249 = vpop.permute.xlu0 %4248
    %4250 = vrot.lane.b32.xlu0 %v4206, 120
    %v4251 = vpop.permute.xlu0 %4250
    %4252 = vrot.lane.b32.xlu0 %v4203, 120
    %v4253 = vpop.permute.xlu0 %4252
    %4254 = vrot.lane.b32.xlu0 %v4207, 120
    %v4255 = vpop.permute.xlu0 %4254
    %v4256 = vsel %vm1306, %v4249, %v4253
    %v4257 = vsel %vm1306, %v4251, %v4255
    %v4258 = vsel %vm1306, %v4245, %v4249
    %v4259 = vsel %vm1306, %v4247, %v4251
    %v4260 = vsel %vm1306, %v4241, %v4245
    %v4261 = vsel %vm1306, %v4243, %v4247
    %v4262 = vsel %vm1306, %v4253, %v4241
    %v4263 = vsel %vm1306, %v4255, %v4243
    %v4264 = vsel %vm201, %v4260, 0.0
    %v4265 = vsel %vm202, %v4258, 0.0
    %v4266 = vsel %vm203, %v4256, 0.0
    %v4267 = vsel %vm204, %v4262, 0.0
    %v4268 = vsel %vm201, %v4261, 0.0
    %v4269 = vsel %vm202, %v4259, 0.0
    %v4270 = vsel %vm203, %v4257, 0.0
    %v4271 = vsel %vm204, %v4263, 0.0
    %v4272 = vpack.c.bf16 %v4236, %v4232
    %v4273 = vpack.c.bf16 %v4237, %v4233
    %v4274 = vpack.c.bf16 %v4238, %v4234
    %v4275 = vpack.c.bf16 %v4239, %v4235
    %v4276 = vpack.c.bf16 %v4204, %v4200
    %v4277 = vpack.c.bf16 %v4205, %v4201
    %v4278 = vpack.c.bf16 %v4206, %v4202
    %v4279 = vpack.c.bf16 %v4207, %v4203
    %v4280 = vpack.c.bf16 %v4268, %v4264
    %v4281 = vpack.c.bf16 %v4269, %v4265
    %v4282 = vpack.c.bf16 %v4270, %v4266
    %v4283 = vpack.c.bf16 %v4271, %v4267
    %v4286 = vunpack.c.l.b16 %v3206
    %v4287 = vunpack.c.l.b16 %v3207
    %v4288 = vpack.c.b16 %v4287, %v4286
    %v4290 = vsel %vm429, %v4288, 0
    %4292 = vmatprep.subr.bf16.mxu0 %v4273
    %4293 = vmatpush1.bf16.msra.mxu0 %v4272
    %4294 = vmatprep.subr.bf16.mxu0 %v4277
    %4295 = vmatpush1.bf16.msra.mxu0 %v4276
    %4296 = vmatprep.subr.bf16.mxu0 %v4281
    %4297 = vmatpush1.bf16.msra.mxu0 %v4280
    %4298 = vmatprep.subr.bf16.mxu0 %v437
    %4299 = vmatpush1.bf16.msra.mxu0 %v437
    %4300 = vmatprep.subr.bf16.mxu0 0
    %4301 = vmatpush1.bf16.msra.mxu0 0
    %4302 = vmatprep.subr.bf16.mxu0 0
    %4303 = vmatpush1.bf16.msra.mxu0 0
    %4304 = vmatprep.subr.bf16.mxu0 0
    %4305 = vmatpush1.bf16.msra.mxu0 0
    %4306 = vmatprep.subr.bf16.mxu0 0
    %4307 = vmatpush1.bf16.msra.mxu0 0
    %4308 = vmatprep.subr.bf16.mxu0 0
    %4309 = vmatpush1.bf16.msra.mxu0 0
    %4310 = vmatprep.subr.bf16.mxu0 0
    %4311 = vmatpush1.bf16.msra.mxu0 0
    %4312 = vmatprep.subr.bf16.mxu0 0
    %4313 = vmatpush1.bf16.msra.mxu0 0
    %4314 = vmatprep.subr.bf16.mxu0 0
    %4315 = vmatpush1.bf16.msra.mxu0 0
    %4316 = vmatprep.subr.bf16.mxu0 0
    %4317 = vmatpush1.bf16.msra.mxu0 0
    %4318 = vmatprep.subr.bf16.mxu0 0
    %4319 = vmatpush1.bf16.msra.mxu0 0
    %4320 = vmatprep.subr.bf16.mxu0 0
    %4321 = vmatpush1.bf16.msra.mxu0 0
    %4322 = vmatprep.subr.bf16.mxu0 0
    %4323 = vmatpush1.bf16.msra.mxu0 0
    %4324 = vmatprep.mubr.bf16.mxu0 0
    %4325 = vmatmul.mubr.bf16.gmra.mrb[0].mxu0 %v4290
    %v4326 = vpop.f32.mrb[0].mxu0
    %v4327 = vadd.f32 0.0, %v4326
    %v4328 = vpop.f32.mrb[0].mxu0
    %v4329 = vadd.f32 0.0, %v4328
    %v4330 = vpop.f32.mrb[0].mxu0
    %v4331 = vadd.f32 0.0, %v4330
    %v4332 = vpop.f32.mrb[0].mxu0
    %v4333 = vadd.f32 0.0, %v4332
    %4334 = vdwg.mxu0
    %4335 = vmatprep.subr.bf16.mxu0 %v4275
    %4336 = vmatpush1.bf16.msra.mxu0 %v4274
    %4337 = vmatprep.subr.bf16.mxu0 %v4279
    %4338 = vmatpush1.bf16.msra.mxu0 %v4278
    %4339 = vmatprep.subr.bf16.mxu0 %v4283
    %4340 = vmatpush1.bf16.msra.mxu0 %v4282
    %4341 = vmatprep.subr.bf16.mxu0 %v437
    %4342 = vmatpush1.bf16.msra.mxu0 %v437
    %4343 = vmatprep.subr.bf16.mxu0 0
    %4344 = vmatpush1.bf16.msra.mxu0 0
    %4345 = vmatprep.subr.bf16.mxu0 0
    %4346 = vmatpush1.bf16.msra.mxu0 0
    %4347 = vmatprep.subr.bf16.mxu0 0
    %4348 = vmatpush1.bf16.msra.mxu0 0
    %4349 = vmatprep.subr.bf16.mxu0 0
    %4350 = vmatpush1.bf16.msra.mxu0 0
    %4351 = vmatprep.subr.bf16.mxu0 0
    %4352 = vmatpush1.bf16.msra.mxu0 0
    %4353 = vmatprep.subr.bf16.mxu0 0
    %4354 = vmatpush1.bf16.msra.mxu0 0
    %4355 = vmatprep.subr.bf16.mxu0 0
    %4356 = vmatpush1.bf16.msra.mxu0 0
    %4357 = vmatprep.subr.bf16.mxu0 0
    %4358 = vmatpush1.bf16.msra.mxu0 0
    %4359 = vmatprep.subr.bf16.mxu0 0
    %4360 = vmatpush1.bf16.msra.mxu0 0
    %4361 = vmatprep.subr.bf16.mxu0 0
    %4362 = vmatpush1.bf16.msra.mxu0 0
    %4363 = vmatprep.subr.bf16.mxu0 0
    %4364 = vmatpush1.bf16.msra.mxu0 0
    %4365 = vmatprep.subr.bf16.mxu0 0
    %4366 = vmatpush1.bf16.msra.mxu0 0
    %4367 = vmatprep.mubr.bf16.mxu0 0
    %4368 = vmatmul.mubr.bf16.gmra.mrb[0].mxu0 %v4290
    %v4369 = vpop.f32.mrb[0].mxu0
    %v4370 = vadd.f32 0.0, %v4369
    %v4371 = vpop.f32.mrb[0].mxu0
    %v4372 = vadd.f32 0.0, %v4371
    %v4373 = vpop.f32.mrb[0].mxu0
    %v4374 = vadd.f32 0.0, %v4373
    %v4375 = vpop.f32.mrb[0].mxu0
    %v4376 = vadd.f32 0.0, %v4375
    %4377 = vdwg.mxu0
    %v4378 = vmax.f32 %v4327, 0.0
    %v4379 = vmax.f32 %v4329, 0.0
    %v4380 = vmax.f32 %v4370, 0.0
    %v4381 = vmax.f32 %v4372, 0.0
    %v4382 = vmax.f32 %v4331, 0.0
    %v4383 = vmax.f32 %v4333, 0.0
    %v4384 = vmax.f32 %v4374, 0.0
    %v4385 = vmax.f32 %v4376, 0.0
    %v4386 = vpack.c.bf16 %v4382, %v4378
    %v4387 = vpack.c.bf16 %v4383, %v4379
    %v4388 = vpack.c.bf16 %v4384, %v4380
    %v4389 = vpack.c.bf16 %v4385, %v4381
    %v4392 = vunpack.c.l.b16 %v3218
    %v4393 = vunpack.c.l.b16 %v3219
    %v4394 = vpack.c.b16 %v4393, %v4392
    %v4396 = vsel %vm542, %v4394, 0
    %4398 = vmatprep.subr.bf16.mxu0 %v4387
    %4399 = vmatpush1.bf16.msra.mxu0 %v4386
    %4400 = vmatprep.subr.bf16.mxu0 %v437
    %4401 = vmatpush1.bf16.msra.mxu0 %v437
    %4402 = vmatprep.subr.bf16.mxu0 0
    %4403 = vmatpush1.bf16.msra.mxu0 0
    %4404 = vmatprep.subr.bf16.mxu0 0
    %4405 = vmatpush1.bf16.msra.mxu0 0
    %4406 = vmatprep.subr.bf16.mxu0 0
    %4407 = vmatpush1.bf16.msra.mxu0 0
    %4408 = vmatprep.subr.bf16.mxu0 0
    %4409 = vmatpush1.bf16.msra.mxu0 0
    %4410 = vmatprep.subr.bf16.mxu0 0
    %4411 = vmatpush1.bf16.msra.mxu0 0
    %4412 = vmatprep.subr.bf16.mxu0 0
    %4413 = vmatpush1.bf16.msra.mxu0 0
    %4414 = vmatprep.subr.bf16.mxu0 0
    %4415 = vmatpush1.bf16.msra.mxu0 0
    %4416 = vmatprep.subr.bf16.mxu0 0
    %4417 = vmatpush1.bf16.msra.mxu0 0
    %4418 = vmatprep.subr.bf16.mxu0 0
    %4419 = vmatpush1.bf16.msra.mxu0 0
    %4420 = vmatprep.subr.bf16.mxu0 0
    %4421 = vmatpush1.bf16.msra.mxu0 0
    %4422 = vmatprep.subr.bf16.mxu0 0
    %4423 = vmatpush1.bf16.msra.mxu0 0
    %4424 = vmatprep.subr.bf16.mxu0 0
    %4425 = vmatpush1.bf16.msra.mxu0 0
    %4426 = vmatprep.subr.bf16.mxu0 0
    %4427 = vmatpush1.bf16.msra.mxu0 0
    %4428 = vmatprep.subr.bf16.mxu0 0
    %4429 = vmatpush1.bf16.msra.mxu0 0
    %4430 = vmatprep.mubr.bf16.mxu0 0
    %4431 = vmatmul.mubr.bf16.gmra.mrb[0].mxu0 %v4396
    %v4432 = vpop.f32.mrb[0].mxu0
    %v4433 = vadd.f32 0.0, %v4432
    %v4434 = vpop.f32.mrb[0].mxu0
    %v4435 = vadd.f32 0.0, %v4434
    %v4436 = vpop.f32.mrb[0].mxu0
    %v4437 = vadd.f32 0.0, %v4436
    %v4438 = vpop.f32.mrb[0].mxu0
    %v4439 = vadd.f32 0.0, %v4438
    %4440 = vdwg.mxu0
    %4441 = vmatprep.subr.bf16.mxu0 %v4389
    %4442 = vmatpush1.bf16.msra.mxu0 %v4388
    %4443 = vmatprep.subr.bf16.mxu0 %v437
    %4444 = vmatpush1.bf16.msra.mxu0 %v437
    %4445 = vmatprep.subr.bf16.mxu0 0
    %4446 = vmatpush1.bf16.msra.mxu0 0
    %4447 = vmatprep.subr.bf16.mxu0 0
    %4448 = vmatpush1.bf16.msra.mxu0 0
    %4449 = vmatprep.subr.bf16.mxu0 0
    %4450 = vmatpush1.bf16.msra.mxu0 0
    %4451 = vmatprep.subr.bf16.mxu0 0
    %4452 = vmatpush1.bf16.msra.mxu0 0
    %4453 = vmatprep.subr.bf16.mxu0 0
    %4454 = vmatpush1.bf16.msra.mxu0 0
    %4455 = vmatprep.subr.bf16.mxu0 0
    %4456 = vmatpush1.bf16.msra.mxu0 0
    %4457 = vmatprep.subr.bf16.mxu0 0
    %4458 = vmatpush1.bf16.msra.mxu0 0
    %4459 = vmatprep.subr.bf16.mxu0 0
    %4460 = vmatpush1.bf16.msra.mxu0 0
    %4461 = vmatprep.subr.bf16.mxu0 0
    %4462 = vmatpush1.bf16.msra.mxu0 0
    %4463 = vmatprep.subr.bf16.mxu0 0
    %4464 = vmatpush1.bf16.msra.mxu0 0
    %4465 = vmatprep.subr.bf16.mxu0 0
    %4466 = vmatpush1.bf16.msra.mxu0 0
    %4467 = vmatprep.subr.bf16.mxu0 0
    %4468 = vmatpush1.bf16.msra.mxu0 0
    %4469 = vmatprep.subr.bf16.mxu0 0
    %4470 = vmatpush1.bf16.msra.mxu0 0
    %4471 = vmatprep.subr.bf16.mxu0 0
    %4472 = vmatpush1.bf16.msra.mxu0 0
    %4473 = vmatprep.mubr.bf16.mxu0 0
    %4474 = vmatmul.mubr.bf16.gmra.mrb[0].mxu0 %v4396
    %v4475 = vpop.f32.mrb[0].mxu0
    %v4476 = vadd.f32 0.0, %v4475
    %v4477 = vpop.f32.mrb[0].mxu0
    %v4478 = vadd.f32 0.0, %v4477
    %v4479 = vpop.f32.mrb[0].mxu0
    %v4480 = vadd.f32 0.0, %v4479
    %v4481 = vpop.f32.mrb[0].mxu0
    %v4482 = vadd.f32 0.0, %v4481
    %4483 = vdwg.mxu0
    %v4484 = vadd.f32 %v4200, %v4433
    %v4485 = vadd.f32 %v4201, %v4435
    %v4486 = vadd.f32 %v4202, %v4476
    %v4487 = vadd.f32 %v4203, %v4478
    %v4488 = vadd.f32 %v4204, %v4437
    %v4489 = vadd.f32 %v4205, %v4439
    %v4490 = vadd.f32 %v4206, %v4480
    %v4491 = vadd.f32 %v4207, %v4482
    %v4492 = vmul.f32 %v4484, %v644
    %v4493 = vmul.f32 %v4485, %v648
    %v4494 = vmul.f32 %v4486, %v652
    %v4495 = vmul.f32 %v4487, %v656
    %v4496 = vmul.f32 %v4488, %v644
    %v4497 = vmul.f32 %v4489, %v648
    %v4498 = vmul.f32 %v4490, %v652
    %v4499 = vmul.f32 %v4491, %v656
    %v4500 = vpack.c.bf16 %v4496, %v4492
    %v4501 = vpack.c.bf16 %v4497, %v4493
    %v4502 = vpack.c.bf16 %v4498, %v4494
    %v4503 = vpack.c.bf16 %v4499, %v4495
    %v4505 = vsel %vm542, %v3221, 0
    %4507 = vmatprep.subr.bf16.mxu0 %v4501
    %4508 = vmatpush1.bf16.msra.mxu0 %v4500
    %4509 = vmatprep.subr.bf16.mxu0 %v437
    %4510 = vmatpush1.bf16.msra.mxu0 %v437
    %4511 = vmatprep.subr.bf16.mxu0 0
    %4512 = vmatpush1.bf16.msra.mxu0 0
    %4513 = vmatprep.subr.bf16.mxu0 0
    %4514 = vmatpush1.bf16.msra.mxu0 0
    %4515 = vmatprep.subr.bf16.mxu0 0
    %4516 = vmatpush1.bf16.msra.mxu0 0
    %4517 = vmatprep.subr.bf16.mxu0 0
    %4518 = vmatpush1.bf16.msra.mxu0 0
    %4519 = vmatprep.subr.bf16.mxu0 0
    %4520 = vmatpush1.bf16.msra.mxu0 0
    %4521 = vmatprep.subr.bf16.mxu0 0
    %4522 = vmatpush1.bf16.msra.mxu0 0
    %4523 = vmatprep.subr.bf16.mxu0 0
    %4524 = vmatpush1.bf16.msra.mxu0 0
    %4525 = vmatprep.subr.bf16.mxu0 0
    %4526 = vmatpush1.bf16.msra.mxu0 0
    %4527 = vmatprep.subr.bf16.mxu0 0
    %4528 = vmatpush1.bf16.msra.mxu0 0
    %4529 = vmatprep.subr.bf16.mxu0 0
    %4530 = vmatpush1.bf16.msra.mxu0 0
    %4531 = vmatprep.subr.bf16.mxu0 0
    %4532 = vmatpush1.bf16.msra.mxu0 0
    %4533 = vmatprep.subr.bf16.mxu0 0
    %4534 = vmatpush1.bf16.msra.mxu0 0
    %4535 = vmatprep.subr.bf16.mxu0 0
    %4536 = vmatpush1.bf16.msra.mxu0 0
    %4537 = vmatprep.subr.bf16.mxu0 0
    %4538 = vmatpush1.bf16.msra.mxu0 0
    %4539 = vmatprep.mubr.bf16.mxu0 0
    %4540 = vmatmul.mubr.bf16.gmra.mrb[0].mxu0 %v4505
    %v4541 = vpop.f32.mrb[0].mxu0
    %v4542 = vadd.f32 0.0, %v4541
    %v4543 = vpop.f32.mrb[0].mxu0
    %v4544 = vadd.f32 0.0, %v4543
    %v4545 = vpop.f32.mrb[0].mxu0
    %v4546 = vpop.f32.mrb[0].mxu0
    %4547 = vdwg.mxu0
    %4548 = vmatprep.subr.bf16.mxu0 %v4503
    %4549 = vmatpush1.bf16.msra.mxu0 %v4502
    %4550 = vmatprep.subr.bf16.mxu0 %v437
    %4551 = vmatpush1.bf16.msra.mxu0 %v437
    %4552 = vmatprep.subr.bf16.mxu0 0
    %4553 = vmatpush1.bf16.msra.mxu0 0
    %4554 = vmatprep.subr.bf16.mxu0 0
    %4555 = vmatpush1.bf16.msra.mxu0 0
    %4556 = vmatprep.subr.bf16.mxu0 0
    %4557 = vmatpush1.bf16.msra.mxu0 0
    %4558 = vmatprep.subr.bf16.mxu0 0
    %4559 = vmatpush1.bf16.msra.mxu0 0
    %4560 = vmatprep.subr.bf16.mxu0 0
    %4561 = vmatpush1.bf16.msra.mxu0 0
    %4562 = vmatprep.subr.bf16.mxu0 0
    %4563 = vmatpush1.bf16.msra.mxu0 0
    %4564 = vmatprep.subr.bf16.mxu0 0
    %4565 = vmatpush1.bf16.msra.mxu0 0
    %4566 = vmatprep.subr.bf16.mxu0 0
    %4567 = vmatpush1.bf16.msra.mxu0 0
    %4568 = vmatprep.subr.bf16.mxu0 0
    %4569 = vmatpush1.bf16.msra.mxu0 0
    %4570 = vmatprep.subr.bf16.mxu0 0
    %4571 = vmatpush1.bf16.msra.mxu0 0
    %4572 = vmatprep.subr.bf16.mxu0 0
    %4573 = vmatpush1.bf16.msra.mxu0 0
    %4574 = vmatprep.subr.bf16.mxu0 0
    %4575 = vmatpush1.bf16.msra.mxu0 0
    %4576 = vmatprep.subr.bf16.mxu0 0
    %4577 = vmatpush1.bf16.msra.mxu0 0
    %4578 = vmatprep.subr.bf16.mxu0 0
    %4579 = vmatpush1.bf16.msra.mxu0 0
    %4580 = vmatprep.mubr.bf16.mxu0 0
    %4581 = vmatmul.mubr.bf16.gmra.mrb[0].mxu0 %v4505
    %v4582 = vpop.f32.mrb[0].mxu0
    %v4583 = vadd.f32 0.0, %v4582
    %v4584 = vpop.f32.mrb[0].mxu0
    %v4585 = vadd.f32 0.0, %v4584
    %v4586 = vpop.f32.mrb[0].mxu0
    %v4587 = vpop.f32.mrb[0].mxu0
    %4588 = vdwg.mxu0
    %v4589 = vmul.f32 %v4542, %v644
    %v4590 = vmul.f32 %v4544, %v648
    %v4591 = vmul.f32 %v4583, %v652
    %v4592 = vmul.f32 %v4585, %v656
    %s4593 = scalar_lea.vmem [#allocation13], 64
    %4594 = vst [vmem:[%s4593] sm:$0xff] %v4589
    %4595 = vst [vmem:[%s4593 + $0x8] sm:$0xff] %v4590
    %4596 = vst [vmem:[%s4593 + $0x10] sm:$0xff] %v4591
    %4597 = vst [vmem:[%s4593 + $0x18] sm:$0xff] %v4592
    // Predicated region
    $region66: #{ms_tcn_forward.1} parent=1 // pred_check
      _
    $region67: #{ms_tcn_forward.1} parent=1 // pred_check_branch
      %4599 = sbr.rel (0) target = $region69
    $region68: #{ms_tcn_forward.1} parent=1 // pred_region
      %s4601 = ssub.s32 1536, 1536
      %4602 = vsyncadd [#allocation4], %s4601
      %s4603 = sshll.u32 [#allocation13], 4
      %s4604 = int_to_ptr.vmem [resolvable:$true] %s4603
      %4609 = dma.vmem_to_hbm [thread:$0]  %s4604, 1536, %s10, [#allocation4], 512, 512, 32
    $region69: #{ms_tcn_forward.1} parent=1 // pred_fallthru
      _
    // Predicated region
    $region70: #{ms_tcn_forward.1} parent=1 // pred_check
      _
    $region71: #{ms_tcn_forward.1} parent=1 // pred_check_branch
      %4611 = sbr.rel (0) target = $region73
    $region72: #{ms_tcn_forward.1} parent=1 // pred_region
      %4612 = dma.done [#allocation4], 1536
    $region73: #{ms_tcn_forward.1} parent=1 // pred_fallthru
      _
    %4613 = vsyncpa [#allocation3], 1
    %4614 = vsyncpa [#allocation6], 1
    %4615 = vsyncpa [#allocation9], 1
    %4616 = vsyncpa [#allocation12], 1
    %4617 = vsyncpa [#allocation4], 1

</llo_original>
